<compile_context>
chip_gen: v6e
topology: v6e:2x2x1
jax: 0.10.0
libtpu: 0.0.40
codegen_flags: <defaults>
</compile_context>

<pallas_src>
import math

import jax
import jax.numpy as jnp
from jax.experimental import pallas as pl
from jax.experimental.pallas import tpu as pltpu

# ---- problem sizes (small, consistent with the module's forward) -------------
BATCH = 2
SEQ = 8          # text and visual must share seq length (outputs are blended)
D_MODEL = 32
NHEAD = 4
DIM_FF = 64
HEAD_DIM = D_MODEL // NHEAD

# ---- packed-parameter layout (per stream) -------------------------------------
# Matrix slab: (ROWS=224, 64) bf16, matrices stored at lane offset 0.
_R_WQ = 0
_R_WK = 1 * D_MODEL
_R_WV = 2 * D_MODEL
_R_WO = 3 * D_MODEL
_R_W1 = 4 * D_MODEL            # (D_MODEL, DIM_FF)
_R_W2 = 5 * D_MODEL            # (DIM_FF, D_MODEL)
_MAT_ROWS = 5 * D_MODEL + DIM_FF   # 224

# Vector slab: (16, 64) f32, one parameter vector per row (lane offset 0).
_V_BQ, _V_BK, _V_BV, _V_BO = 0, 1, 2, 3
_V_G1, _V_BE1 = 4, 5
_V_B1 = 6
_V_B2 = 7
_V_G2, _V_BE2 = 8, 9
_VEC_ROWS = 16


def _layernorm(x, gamma, beta, eps=1e-5):
    mu = jnp.mean(x, axis=-1, keepdims=True)
    var = jnp.mean(jnp.square(x - mu), axis=-1, keepdims=True)
    return (x - mu) * jax.lax.rsqrt(var + eps) * gamma + beta


# ---- single fused Pallas kernel ------------------------------------------------
def fused_mca_kernel(alpha_ref, text_ref, visual_ref, mats_ref, vecs_ref, out_ref):
    B, L, D = text_ref.shape
    scale = 1.0 / math.sqrt(HEAD_DIM)
    bf16 = jnp.bfloat16
    f32 = jnp.float32

    def contextual_transformer(s, x3, kv3):
        # -- carve packed parameters (static slices; weights already bf16) ------
        wq = mats_ref[s, _R_WQ:_R_WQ + D, 0:D]
        wk = mats_ref[s, _R_WK:_R_WK + D, 0:D]
        wv = mats_ref[s, _R_WV:_R_WV + D, 0:D]
        wo = mats_ref[s, _R_WO:_R_WO + D, 0:D]
        w1 = mats_ref[s, _R_W1:_R_W1 + D, 0:DIM_FF]
        w2 = mats_ref[s, _R_W2:_R_W2 + DIM_FF, 0:D]

        bq = vecs_ref[s, _V_BQ:_V_BQ + 1, 0:D]
        bk = vecs_ref[s, _V_BK:_V_BK + 1, 0:D]
        bv = vecs_ref[s, _V_BV:_V_BV + 1, 0:D]
        bo = vecs_ref[s, _V_BO:_V_BO + 1, 0:D]
        g1 = vecs_ref[s, _V_G1:_V_G1 + 1, 0:D]
        be1 = vecs_ref[s, _V_BE1:_V_BE1 + 1, 0:D]
        b1 = vecs_ref[s, _V_B1:_V_B1 + 1, 0:DIM_FF]
        b2 = vecs_ref[s, _V_B2:_V_B2 + 1, 0:D]
        g2 = vecs_ref[s, _V_G2:_V_G2 + 1, 0:D]
        be2 = vecs_ref[s, _V_BE2:_V_BE2 + 1, 0:D]

        # -- projections on the flattened (B*L, D) slab (bf16 in, f32 acc) ------
        x2 = x3.reshape(B * L, D)
        kv2 = kv3.reshape(B * L, D)
        xb = x2.astype(bf16)
        kvb = kv2.astype(bf16)

        q = jnp.dot(xb, wq, preferred_element_type=f32) + bq
        k = jnp.dot(kvb, wk, preferred_element_type=f32) + bk
        v = jnp.dot(kvb, wv, preferred_element_type=f32) + bv

        q3 = q.reshape(B, L, D).astype(bf16)
        k3 = k.reshape(B, L, D).astype(bf16)
        v3 = v.reshape(B, L, D).astype(bf16)

        # -- multi-head cross attention (batch dim batched into each einsum) ----
        head_outs = []
        for h in range(NHEAD):            # static unrolled loop over 4 heads
            lo = h * HEAD_DIM
            hi = lo + HEAD_DIM
            qh = q3[:, :, lo:hi]
            kh = k3[:, :, lo:hi]
            vh = v3[:, :, lo:hi]
            s_bh = jnp.einsum('bld,bmd->blm', qh, kh,
                              preferred_element_type=f32) * scale
            s_bh = s_bh - jnp.max(s_bh, axis=-1, keepdims=True)
            p = jnp.exp(s_bh)
            p = p * pl.reciprocal(jnp.sum(p, axis=-1, keepdims=True), approx=True)
            head_outs.append(
                jnp.einsum('blm,bmd->bld', p.astype(bf16), vh,
                           preferred_element_type=f32))
        attn = jnp.concatenate(head_outs, axis=-1).reshape(B * L, D)
        attn = jnp.dot(attn.astype(bf16), wo, preferred_element_type=f32) + bo

        # TODO(synk): dropout layers are identity (inference mode).
        x1 = _layernorm(x2 + attn, g1, be1)

        ff = jnp.maximum(
            jnp.dot(x1.astype(bf16), w1, preferred_element_type=f32) + b1, 0.0)
        ff = jnp.dot(ff.astype(bf16), w2, preferred_element_type=f32) + b2

        y = _layernorm(x1 + ff, g2, be2)
        return y.reshape(B, L, D)

    text = text_ref[...]
    visual = visual_ref[...]

    c_ti = contextual_transformer(0, text, visual)    # text_transformer(text, visual)
    c_it = contextual_transformer(1, visual, text)    # visual_transformer(visual, text)

    alpha = 1.0 / (1.0 + jnp.exp(-alpha_ref[...]))    # (1,1) sigmoid, broadcasts
    out_ref[...] = (alpha * c_ti + (1.0 - alpha) * c_it).astype(out_ref.dtype)


# ---- wrapper -------------------------------------------------------------------
def _pack_params(params):
    """Pack 16 per-stream parameter arrays into (mats bf16, vecs f32) slabs."""
    (wq, bq, wk, bk, wv, bv, wo, bo,
     g1, be1, w1, b1, w2, b2, g2, be2) = params
    D, DFF = D_MODEL, DIM_FF
    mats = jnp.zeros((_MAT_ROWS, DFF), jnp.float32)
    mats = mats.at[_R_WQ:_R_WQ + D, 0:D].set(wq)
    mats = mats.at[_R_WK:_R_WK + D, 0:D].set(wk)
    mats = mats.at[_R_WV:_R_WV + D, 0:D].set(wv)
    mats = mats.at[_R_WO:_R_WO + D, 0:D].set(wo)
    mats = mats.at[_R_W1:_R_W1 + D, 0:DFF].set(w1)
    mats = mats.at[_R_W2:_R_W2 + DFF, 0:D].set(w2)

    vecs = jnp.zeros((_VEC_ROWS, DFF), jnp.float32)
    for row, vec, width in ((_V_BQ, bq, D), (_V_BK, bk, D), (_V_BV, bv, D),
                            (_V_BO, bo, D), (_V_G1, g1, D), (_V_BE1, be1, D),
                            (_V_B1, b1, DFF), (_V_B2, b2, D),
                            (_V_G2, g2, D), (_V_BE2, be2, D)):
        vecs = vecs.at[row, 0:width].set(jnp.reshape(vec, (width,)))
    return mats.astype(jnp.bfloat16), vecs


def multimodal_contextual_attention(text, visual, text_params, visual_params,
                                    alpha_param):
    # Parameter packing is weight preparation (done once at load time in practice).
    mats_t, vecs_t = _pack_params(text_params)
    mats_v, vecs_v = _pack_params(visual_params)
    mats = jnp.stack([mats_t, mats_v], axis=0)        # (2, 224, 64) bf16
    vecs = jnp.stack([vecs_t, vecs_v], axis=0)        # (2, 16, 64) f32
    alpha2d = jnp.reshape(alpha_param, (1, 1)).astype(jnp.float32)

    vmem_spec = pl.BlockSpec(memory_space=pltpu.MemorySpace.VMEM)
    return pl.pallas_call(
        fused_mca_kernel,
        out_shape=jax.ShapeDtypeStruct(text.shape, jnp.float32),
        in_specs=[vmem_spec] * 5,
        out_specs=vmem_spec,
    )(alpha2d, text, visual, mats, vecs)


# ---- deterministic parameter init (shapes from the module __init__) ------------
def init_ct_params(key, d_model, dff):
    ks = jax.random.split(key, 6)
    s = 0.02

    def dense(k, shp):
        return jax.random.normal(k, shp, jnp.float32) * s

    wq = dense(ks[0], (d_model, d_model)); bq = jnp.zeros((1, d_model), jnp.float32)
    wk = dense(ks[1], (d_model, d_model)); bk = jnp.zeros((1, d_model), jnp.float32)
    wv = dense(ks[2], (d_model, d_model)); bv = jnp.zeros((1, d_model), jnp.float32)
    wo = dense(ks[3], (d_model, d_model)); bo = jnp.zeros((1, d_model), jnp.float32)
    g1 = jnp.ones((1, d_model), jnp.float32); be1 = jnp.zeros((1, d_model), jnp.float32)
    w1 = dense(ks[4], (d_model, dff));       b1 = jnp.zeros((1, dff), jnp.float32)
    w2 = dense(ks[5], (dff, d_model));       b2 = jnp.zeros((1, d_model), jnp.float32)
    g2 = jnp.ones((1, d_model), jnp.float32); be2 = jnp.zeros((1, d_model), jnp.float32)
    return (wq, bq, wk, bk, wv, bv, wo, bo,
            g1, be1, w1, b1, w2, b2, g2, be2)


if __name__ == "__main__":
    key = jax.random.PRNGKey(0)
    k_text, k_vis, k_pt, k_pv = jax.random.split(key, 4)

    text = jax.random.normal(k_text, (BATCH, SEQ, D_MODEL), jnp.float32)
    visual = jax.random.normal(k_vis, (BATCH, SEQ, D_MODEL), jnp.float32)

    text_params = init_ct_params(k_pt, D_MODEL, DIM_FF)
    visual_params = init_ct_params(k_pv, D_MODEL, DIM_FF)
    alpha_param = jnp.float32(0.5)            # nn.Parameter(torch.tensor(0.5))

    out = jax.jit(multimodal_contextual_attention)(
        text, visual, text_params, visual_params, alpha_param)
    jax.block_until_ready(out)
    assert out.shape == (BATCH, SEQ, D_MODEL)
    print("KERNEL_OK")
</pallas_src>

<mosaic_0001>
module attributes {stable_mosaic.version = 11 : i64} {
  func.func @fused_mca_kernel(%arg0: memref<1x1xf32, #tpu.memory_space<vmem>>, %arg1: memref<2x8x32xf32, #tpu.memory_space<vmem>>, %arg2: memref<2x8x32xf32, #tpu.memory_space<vmem>>, %arg3: memref<2x224x64xbf16, #tpu.memory_space<vmem>>, %arg4: memref<2x16x64xf32, #tpu.memory_space<vmem>>, %arg5: memref<2x8x32xf32, #tpu.memory_space<vmem>>) attributes {dimension_semantics = [], scalar_prefetch = 0 : i64, scratch_operands = 0 : i64, tpu.core_type = #tpu.core_type<tc>} {
    %c0 = arith.constant 0 : index
    %c0_0 = arith.constant 0 : index
    %c0_1 = arith.constant 0 : index
    %0 = vector.load %arg1[%c0, %c0_0, %c0_1] : memref<2x8x32xf32, #tpu.memory_space<vmem>>, vector<2x8x32xf32>
    %c0_2 = arith.constant 0 : index
    %c0_3 = arith.constant 0 : index
    %c0_4 = arith.constant 0 : index
    %1 = vector.load %arg2[%c0_2, %c0_3, %c0_4] : memref<2x8x32xf32, #tpu.memory_space<vmem>>, vector<2x8x32xf32>
    %c0_5 = arith.constant 0 : index
    %c0_6 = arith.constant 0 : index
    %c0_7 = arith.constant 0 : index
    %2 = vector.load %arg3[%c0_5, %c0_6, %c0_7] : memref<2x224x64xbf16, #tpu.memory_space<vmem>>, vector<1x32x32xbf16>
    %3 = vector.shape_cast %2 : vector<1x32x32xbf16> to vector<32x32xbf16>
    %c0_8 = arith.constant 0 : index
    %c32 = arith.constant 32 : index
    %c0_9 = arith.constant 0 : index
    %4 = vector.load %arg3[%c0_8, %c32, %c0_9] : memref<2x224x64xbf16, #tpu.memory_space<vmem>>, vector<1x32x32xbf16>
    %5 = vector.shape_cast %4 : vector<1x32x32xbf16> to vector<32x32xbf16>
    %c0_10 = arith.constant 0 : index
    %c64 = arith.constant 64 : index
    %c0_11 = arith.constant 0 : index
    %6 = vector.load %arg3[%c0_10, %c64, %c0_11] : memref<2x224x64xbf16, #tpu.memory_space<vmem>>, vector<1x32x32xbf16>
    %7 = vector.shape_cast %6 : vector<1x32x32xbf16> to vector<32x32xbf16>
    %c0_12 = arith.constant 0 : index
    %c96 = arith.constant 96 : index
    %c0_13 = arith.constant 0 : index
    %8 = vector.load %arg3[%c0_12, %c96, %c0_13] : memref<2x224x64xbf16, #tpu.memory_space<vmem>>, vector<1x32x32xbf16>
    %9 = vector.shape_cast %8 : vector<1x32x32xbf16> to vector<32x32xbf16>
    %c0_14 = arith.constant 0 : index
    %c128 = arith.constant 128 : index
    %c0_15 = arith.constant 0 : index
    %10 = vector.load %arg3[%c0_14, %c128, %c0_15] : memref<2x224x64xbf16, #tpu.memory_space<vmem>>, vector<1x32x64xbf16>
    %11 = vector.shape_cast %10 : vector<1x32x64xbf16> to vector<32x64xbf16>
    %c0_16 = arith.constant 0 : index
    %c160 = arith.constant 160 : index
    %c0_17 = arith.constant 0 : index
    %12 = vector.load %arg3[%c0_16, %c160, %c0_17] : memref<2x224x64xbf16, #tpu.memory_space<vmem>>, vector<1x64x32xbf16>
    %13 = vector.shape_cast %12 : vector<1x64x32xbf16> to vector<64x32xbf16>
    %c0_18 = arith.constant 0 : index
    %c0_19 = arith.constant 0 : index
    %c0_20 = arith.constant 0 : index
    %14 = vector.load %arg4[%c0_18, %c0_19, %c0_20] : memref<2x16x64xf32, #tpu.memory_space<vmem>>, vector<1x1x32xf32>
    %15 = vector.shape_cast %14 : vector<1x1x32xf32> to vector<1x32xf32>
    %c0_21 = arith.constant 0 : index
    %c1 = arith.constant 1 : index
    %c0_22 = arith.constant 0 : index
    %16 = vector.load %arg4[%c0_21, %c1, %c0_22] : memref<2x16x64xf32, #tpu.memory_space<vmem>>, vector<1x1x32xf32>
    %17 = vector.shape_cast %16 : vector<1x1x32xf32> to vector<1x32xf32>
    %c0_23 = arith.constant 0 : index
    %c2 = arith.constant 2 : index
    %c0_24 = arith.constant 0 : index
    %18 = vector.load %arg4[%c0_23, %c2, %c0_24] : memref<2x16x64xf32, #tpu.memory_space<vmem>>, vector<1x1x32xf32>
    %19 = vector.shape_cast %18 : vector<1x1x32xf32> to vector<1x32xf32>
    %c0_25 = arith.constant 0 : index
    %c3 = arith.constant 3 : index
    %c0_26 = arith.constant 0 : index
    %20 = vector.load %arg4[%c0_25, %c3, %c0_26] : memref<2x16x64xf32, #tpu.memory_space<vmem>>, vector<1x1x32xf32>
    %21 = vector.shape_cast %20 : vector<1x1x32xf32> to vector<1x32xf32>
    %c0_27 = arith.constant 0 : index
    %c4 = arith.constant 4 : index
    %c0_28 = arith.constant 0 : index
    %22 = vector.load %arg4[%c0_27, %c4, %c0_28] : memref<2x16x64xf32, #tpu.memory_space<vmem>>, vector<1x1x32xf32>
    %23 = vector.shape_cast %22 : vector<1x1x32xf32> to vector<1x32xf32>
    %c0_29 = arith.constant 0 : index
    %c5 = arith.constant 5 : index
    %c0_30 = arith.constant 0 : index
    %24 = vector.load %arg4[%c0_29, %c5, %c0_30] : memref<2x16x64xf32, #tpu.memory_space<vmem>>, vector<1x1x32xf32>
    %25 = vector.shape_cast %24 : vector<1x1x32xf32> to vector<1x32xf32>
    %c0_31 = arith.constant 0 : index
    %c6 = arith.constant 6 : index
    %c0_32 = arith.constant 0 : index
    %26 = vector.load %arg4[%c0_31, %c6, %c0_32] : memref<2x16x64xf32, #tpu.memory_space<vmem>>, vector<1x1x64xf32>
    %27 = vector.shape_cast %26 : vector<1x1x64xf32> to vector<1x64xf32>
    %c0_33 = arith.constant 0 : index
    %c7 = arith.constant 7 : index
    %c0_34 = arith.constant 0 : index
    %28 = vector.load %arg4[%c0_33, %c7, %c0_34] : memref<2x16x64xf32, #tpu.memory_space<vmem>>, vector<1x1x32xf32>
    %29 = vector.shape_cast %28 : vector<1x1x32xf32> to vector<1x32xf32>
    %c0_35 = arith.constant 0 : index
    %c8 = arith.constant 8 : index
    %c0_36 = arith.constant 0 : index
    %30 = vector.load %arg4[%c0_35, %c8, %c0_36] : memref<2x16x64xf32, #tpu.memory_space<vmem>>, vector<1x1x32xf32>
    %31 = vector.shape_cast %30 : vector<1x1x32xf32> to vector<1x32xf32>
    %c0_37 = arith.constant 0 : index
    %c9 = arith.constant 9 : index
    %c0_38 = arith.constant 0 : index
    %32 = vector.load %arg4[%c0_37, %c9, %c0_38] : memref<2x16x64xf32, #tpu.memory_space<vmem>>, vector<1x1x32xf32>
    %33 = vector.shape_cast %32 : vector<1x1x32xf32> to vector<1x32xf32>
    %34 = vector.shape_cast %0 : vector<2x8x32xf32> to vector<16x32xf32>
    %35 = vector.shape_cast %1 : vector<2x8x32xf32> to vector<16x32xf32>
    %36 = arith.truncf %34 : vector<16x32xf32> to vector<16x32xbf16>
    %37 = arith.truncf %35 : vector<16x32xf32> to vector<16x32xbf16>
    %cst = arith.constant dense<0.000000e+00> : vector<16x32xf32>
    %38 = tpu.matmul %36, %3, %cst {dimension_numbers = #tpu.dot_dimension_numbers<[1], [0], [0], [1], [0, 0, 1, 1], [], []>} : vector<16x32xbf16>, vector<32x32xbf16>, vector<16x32xf32> -> vector<16x32xf32>
    %39 = vector.broadcast %15 : vector<1x32xf32> to vector<16x32xf32>
    %40 = arith.addf %38, %39 : vector<16x32xf32>
    %cst_39 = arith.constant dense<0.000000e+00> : vector<16x32xf32>
    %41 = tpu.matmul %37, %5, %cst_39 {dimension_numbers = #tpu.dot_dimension_numbers<[1], [0], [0], [1], [0, 0, 1, 1], [], []>} : vector<16x32xbf16>, vector<32x32xbf16>, vector<16x32xf32> -> vector<16x32xf32>
    %42 = vector.broadcast %17 : vector<1x32xf32> to vector<16x32xf32>
    %43 = arith.addf %41, %42 : vector<16x32xf32>
    %cst_40 = arith.constant dense<0.000000e+00> : vector<16x32xf32>
    %44 = tpu.matmul %37, %7, %cst_40 {dimension_numbers = #tpu.dot_dimension_numbers<[1], [0], [0], [1], [0, 0, 1, 1], [], []>} : vector<16x32xbf16>, vector<32x32xbf16>, vector<16x32xf32> -> vector<16x32xf32>
    %45 = vector.broadcast %19 : vector<1x32xf32> to vector<16x32xf32>
    %46 = arith.addf %44, %45 : vector<16x32xf32>
    %47 = vector.shape_cast %40 : vector<16x32xf32> to vector<2x8x32xf32>
    %48 = arith.truncf %47 : vector<2x8x32xf32> to vector<2x8x32xbf16>
    %49 = vector.shape_cast %43 : vector<16x32xf32> to vector<2x8x32xf32>
    %50 = arith.truncf %49 : vector<2x8x32xf32> to vector<2x8x32xbf16>
    %51 = vector.shape_cast %46 : vector<16x32xf32> to vector<2x8x32xf32>
    %52 = arith.truncf %51 : vector<2x8x32xf32> to vector<2x8x32xbf16>
    %53 = vector.extract_strided_slice %48 {offsets = [0, 0, 0], sizes = [2, 8, 8], strides = [1, 1, 1]} : vector<2x8x32xbf16> to vector<2x8x8xbf16>
    %54 = vector.extract_strided_slice %50 {offsets = [0, 0, 0], sizes = [2, 8, 8], strides = [1, 1, 1]} : vector<2x8x32xbf16> to vector<2x8x8xbf16>
    %55 = vector.extract_strided_slice %52 {offsets = [0, 0, 0], sizes = [2, 8, 8], strides = [1, 1, 1]} : vector<2x8x32xbf16> to vector<2x8x8xbf16>
    "tpu.trace_start"() <{level = 10 : i32, message = "bld,bmd->blm"}> : () -> ()
    %cst_41 = arith.constant dense<0.000000e+00> : vector<2x8x8xf32>
    %56 = tpu.matmul %53, %54, %cst_41 {dimension_numbers = #tpu.dot_dimension_numbers<[2], [2], [1], [1], [0, 0, 0, 1, 1, 1], [0], [0]>} : vector<2x8x8xbf16>, vector<2x8x8xbf16>, vector<2x8x8xf32> -> vector<2x8x8xf32>
    "tpu.trace_stop"() : () -> ()
    %cst_42 = arith.constant 0.353553385 : f32
    %57 = vector.broadcast %cst_42 : f32 to vector<2x8x8xf32>
    %58 = arith.mulf %56, %57 : vector<2x8x8xf32>
    %cst_43 = arith.constant dense<0xFF800000> : vector<2x8xf32>
    %59 = vector.multi_reduction <maximumf>, %58, %cst_43 [2] : vector<2x8x8xf32> to vector<2x8xf32>
    %60 = vector.shape_cast %59 : vector<2x8xf32> to vector<2x8x1xf32>
    %61 = vector.broadcast %60 : vector<2x8x1xf32> to vector<2x8x8xf32>
    %62 = arith.subf %58, %61 : vector<2x8x8xf32>
    %63 = math.exp %62 : vector<2x8x8xf32>
    %cst_44 = arith.constant dense<0.000000e+00> : vector<2x8xf32>
    %64 = vector.multi_reduction <add>, %63, %cst_44 [2] : vector<2x8x8xf32> to vector<2x8xf32>
    %65 = vector.shape_cast %64 : vector<2x8xf32> to vector<2x8x1xf32>
    %66 = tpu.reciprocal %65 {approx = true} : vector<2x8x1xf32> -> vector<2x8x1xf32>
    %67 = vector.broadcast %66 : vector<2x8x1xf32> to vector<2x8x8xf32>
    %68 = arith.mulf %63, %67 : vector<2x8x8xf32>
    %69 = arith.truncf %68 : vector<2x8x8xf32> to vector<2x8x8xbf16>
    "tpu.trace_start"() <{level = 10 : i32, message = "blm,bmd->bld"}> : () -> ()
    %cst_45 = arith.constant dense<0.000000e+00> : vector<2x8x8xf32>
    %70 = tpu.matmul %69, %55, %cst_45 {dimension_numbers = #tpu.dot_dimension_numbers<[2], [1], [1], [2], [0, 0, 0, 1, 1, 2], [0], [0]>} : vector<2x8x8xbf16>, vector<2x8x8xbf16>, vector<2x8x8xf32> -> vector<2x8x8xf32>
    "tpu.trace_stop"() : () -> ()
    %71 = vector.extract_strided_slice %48 {offsets = [0, 0, 8], sizes = [2, 8, 8], strides = [1, 1, 1]} : vector<2x8x32xbf16> to vector<2x8x8xbf16>
    %72 = vector.extract_strided_slice %50 {offsets = [0, 0, 8], sizes = [2, 8, 8], strides = [1, 1, 1]} : vector<2x8x32xbf16> to vector<2x8x8xbf16>
    %73 = vector.extract_strided_slice %52 {offsets = [0, 0, 8], sizes = [2, 8, 8], strides = [1, 1, 1]} : vector<2x8x32xbf16> to vector<2x8x8xbf16>
    "tpu.trace_start"() <{level = 10 : i32, message = "bld,bmd->blm"}> : () -> ()
    %cst_46 = arith.constant dense<0.000000e+00> : vector<2x8x8xf32>
    %74 = tpu.matmul %71, %72, %cst_46 {dimension_numbers = #tpu.dot_dimension_numbers<[2], [2], [1], [1], [0, 0, 0, 1, 1, 1], [0], [0]>} : vector<2x8x8xbf16>, vector<2x8x8xbf16>, vector<2x8x8xf32> -> vector<2x8x8xf32>
    "tpu.trace_stop"() : () -> ()
    %cst_47 = arith.constant 0.353553385 : f32
    %75 = vector.broadcast %cst_47 : f32 to vector<2x8x8xf32>
    %76 = arith.mulf %74, %75 : vector<2x8x8xf32>
    %cst_48 = arith.constant dense<0xFF800000> : vector<2x8xf32>
    %77 = vector.multi_reduction <maximumf>, %76, %cst_48 [2] : vector<2x8x8xf32> to vector<2x8xf32>
    %78 = vector.shape_cast %77 : vector<2x8xf32> to vector<2x8x1xf32>
    %79 = vector.broadcast %78 : vector<2x8x1xf32> to vector<2x8x8xf32>
    %80 = arith.subf %76, %79 : vector<2x8x8xf32>
    %81 = math.exp %80 : vector<2x8x8xf32>
    %cst_49 = arith.constant dense<0.000000e+00> : vector<2x8xf32>
    %82 = vector.multi_reduction <add>, %81, %cst_49 [2] : vector<2x8x8xf32> to vector<2x8xf32>
    %83 = vector.shape_cast %82 : vector<2x8xf32> to vector<2x8x1xf32>
    %84 = tpu.reciprocal %83 {approx = true} : vector<2x8x1xf32> -> vector<2x8x1xf32>
    %85 = vector.broadcast %84 : vector<2x8x1xf32> to vector<2x8x8xf32>
    %86 = arith.mulf %81, %85 : vector<2x8x8xf32>
    %87 = arith.truncf %86 : vector<2x8x8xf32> to vector<2x8x8xbf16>
    "tpu.trace_start"() <{level = 10 : i32, message = "blm,bmd->bld"}> : () -> ()
    %cst_50 = arith.constant dense<0.000000e+00> : vector<2x8x8xf32>
    %88 = tpu.matmul %87, %73, %cst_50 {dimension_numbers = #tpu.dot_dimension_numbers<[2], [1], [1], [2], [0, 0, 0, 1, 1, 2], [0], [0]>} : vector<2x8x8xbf16>, vector<2x8x8xbf16>, vector<2x8x8xf32> -> vector<2x8x8xf32>
    "tpu.trace_stop"() : () -> ()
    %89 = vector.extract_strided_slice %48 {offsets = [0, 0, 16], sizes = [2, 8, 8], strides = [1, 1, 1]} : vector<2x8x32xbf16> to vector<2x8x8xbf16>
    %90 = vector.extract_strided_slice %50 {offsets = [0, 0, 16], sizes = [2, 8, 8], strides = [1, 1, 1]} : vector<2x8x32xbf16> to vector<2x8x8xbf16>
    %91 = vector.extract_strided_slice %52 {offsets = [0, 0, 16], sizes = [2, 8, 8], strides = [1, 1, 1]} : vector<2x8x32xbf16> to vector<2x8x8xbf16>
    "tpu.trace_start"() <{level = 10 : i32, message = "bld,bmd->blm"}> : () -> ()
    %cst_51 = arith.constant dense<0.000000e+00> : vector<2x8x8xf32>
    %92 = tpu.matmul %89, %90, %cst_51 {dimension_numbers = #tpu.dot_dimension_numbers<[2], [2], [1], [1], [0, 0, 0, 1, 1, 1], [0], [0]>} : vector<2x8x8xbf16>, vector<2x8x8xbf16>, vector<2x8x8xf32> -> vector<2x8x8xf32>
    "tpu.trace_stop"() : () -> ()
    %cst_52 = arith.constant 0.353553385 : f32
    %93 = vector.broadcast %cst_52 : f32 to vector<2x8x8xf32>
    %94 = arith.mulf %92, %93 : vector<2x8x8xf32>
    %cst_53 = arith.constant dense<0xFF800000> : vector<2x8xf32>
    %95 = vector.multi_reduction <maximumf>, %94, %cst_53 [2] : vector<2x8x8xf32> to vector<2x8xf32>
    %96 = vector.shape_cast %95 : vector<2x8xf32> to vector<2x8x1xf32>
    %97 = vector.broadcast %96 : vector<2x8x1xf32> to vector<2x8x8xf32>
    %98 = arith.subf %94, %97 : vector<2x8x8xf32>
    %99 = math.exp %98 : vector<2x8x8xf32>
    %cst_54 = arith.constant dense<0.000000e+00> : vector<2x8xf32>
    %100 = vector.multi_reduction <add>, %99, %cst_54 [2] : vector<2x8x8xf32> to vector<2x8xf32>
    %101 = vector.shape_cast %100 : vector<2x8xf32> to vector<2x8x1xf32>
    %102 = tpu.reciprocal %101 {approx = true} : vector<2x8x1xf32> -> vector<2x8x1xf32>
    %103 = vector.broadcast %102 : vector<2x8x1xf32> to vector<2x8x8xf32>
    %104 = arith.mulf %99, %103 : vector<2x8x8xf32>
    %105 = arith.truncf %104 : vector<2x8x8xf32> to vector<2x8x8xbf16>
    "tpu.trace_start"() <{level = 10 : i32, message = "blm,bmd->bld"}> : () -> ()
    %cst_55 = arith.constant dense<0.000000e+00> : vector<2x8x8xf32>
    %106 = tpu.matmul %105, %91, %cst_55 {dimension_numbers = #tpu.dot_dimension_numbers<[2], [1], [1], [2], [0, 0, 0, 1, 1, 2], [0], [0]>} : vector<2x8x8xbf16>, vector<2x8x8xbf16>, vector<2x8x8xf32> -> vector<2x8x8xf32>
    "tpu.trace_stop"() : () -> ()
    %107 = vector.extract_strided_slice %48 {offsets = [0, 0, 24], sizes = [2, 8, 8], strides = [1, 1, 1]} : vector<2x8x32xbf16> to vector<2x8x8xbf16>
    %108 = vector.extract_strided_slice %50 {offsets = [0, 0, 24], sizes = [2, 8, 8], strides = [1, 1, 1]} : vector<2x8x32xbf16> to vector<2x8x8xbf16>
    %109 = vector.extract_strided_slice %52 {offsets = [0, 0, 24], sizes = [2, 8, 8], strides = [1, 1, 1]} : vector<2x8x32xbf16> to vector<2x8x8xbf16>
    "tpu.trace_start"() <{level = 10 : i32, message = "bld,bmd->blm"}> : () -> ()
    %cst_56 = arith.constant dense<0.000000e+00> : vector<2x8x8xf32>
    %110 = tpu.matmul %107, %108, %cst_56 {dimension_numbers = #tpu.dot_dimension_numbers<[2], [2], [1], [1], [0, 0, 0, 1, 1, 1], [0], [0]>} : vector<2x8x8xbf16>, vector<2x8x8xbf16>, vector<2x8x8xf32> -> vector<2x8x8xf32>
    "tpu.trace_stop"() : () -> ()
    %cst_57 = arith.constant 0.353553385 : f32
    %111 = vector.broadcast %cst_57 : f32 to vector<2x8x8xf32>
    %112 = arith.mulf %110, %111 : vector<2x8x8xf32>
    %cst_58 = arith.constant dense<0xFF800000> : vector<2x8xf32>
    %113 = vector.multi_reduction <maximumf>, %112, %cst_58 [2] : vector<2x8x8xf32> to vector<2x8xf32>
    %114 = vector.shape_cast %113 : vector<2x8xf32> to vector<2x8x1xf32>
    %115 = vector.broadcast %114 : vector<2x8x1xf32> to vector<2x8x8xf32>
    %116 = arith.subf %112, %115 : vector<2x8x8xf32>
    %117 = math.exp %116 : vector<2x8x8xf32>
    %cst_59 = arith.constant dense<0.000000e+00> : vector<2x8xf32>
    %118 = vector.multi_reduction <add>, %117, %cst_59 [2] : vector<2x8x8xf32> to vector<2x8xf32>
    %119 = vector.shape_cast %118 : vector<2x8xf32> to vector<2x8x1xf32>
    %120 = tpu.reciprocal %119 {approx = true} : vector<2x8x1xf32> -> vector<2x8x1xf32>
    %121 = vector.broadcast %120 : vector<2x8x1xf32> to vector<2x8x8xf32>
    %122 = arith.mulf %117, %121 : vector<2x8x8xf32>
    %123 = arith.truncf %122 : vector<2x8x8xf32> to vector<2x8x8xbf16>
    "tpu.trace_start"() <{level = 10 : i32, message = "blm,bmd->bld"}> : () -> ()
    %cst_60 = arith.constant dense<0.000000e+00> : vector<2x8x8xf32>
    %124 = tpu.matmul %123, %109, %cst_60 {dimension_numbers = #tpu.dot_dimension_numbers<[2], [1], [1], [2], [0, 0, 0, 1, 1, 2], [0], [0]>} : vector<2x8x8xbf16>, vector<2x8x8xbf16>, vector<2x8x8xf32> -> vector<2x8x8xf32>
    "tpu.trace_stop"() : () -> ()
    %125 = tpu.concatenate %70, %88, %106, %124 in 2 : vector<2x8x8xf32>, vector<2x8x8xf32>, vector<2x8x8xf32>, vector<2x8x8xf32> -> vector<2x8x32xf32>
    %126 = vector.shape_cast %125 : vector<2x8x32xf32> to vector<16x32xf32>
    %127 = arith.truncf %126 : vector<16x32xf32> to vector<16x32xbf16>
    %cst_61 = arith.constant dense<0.000000e+00> : vector<16x32xf32>
    %128 = tpu.matmul %127, %9, %cst_61 {dimension_numbers = #tpu.dot_dimension_numbers<[1], [0], [0], [1], [0, 0, 1, 1], [], []>} : vector<16x32xbf16>, vector<32x32xbf16>, vector<16x32xf32> -> vector<16x32xf32>
    %129 = vector.broadcast %21 : vector<1x32xf32> to vector<16x32xf32>
    %130 = arith.addf %128, %129 : vector<16x32xf32>
    %131 = arith.addf %34, %130 : vector<16x32xf32>
    %cst_62 = arith.constant dense<0.000000e+00> : vector<16xf32>
    %132 = vector.multi_reduction <add>, %131, %cst_62 [1] : vector<16x32xf32> to vector<16xf32>
    %133 = vector.shape_cast %132 : vector<16xf32> to vector<16x1xf32>
    %cst_63 = arith.constant 3.200000e+01 : f32
    %134 = vector.broadcast %cst_63 : f32 to vector<16x1xf32>
    %135 = arith.divf %133, %134 : vector<16x1xf32>
    %136 = vector.broadcast %135 : vector<16x1xf32> to vector<16x32xf32>
    %137 = arith.subf %131, %136 : vector<16x32xf32>
    %138 = arith.mulf %137, %137 : vector<16x32xf32>
    %cst_64 = arith.constant dense<0.000000e+00> : vector<16xf32>
    %139 = vector.multi_reduction <add>, %138, %cst_64 [1] : vector<16x32xf32> to vector<16xf32>
    %140 = vector.shape_cast %139 : vector<16xf32> to vector<16x1xf32>
    %cst_65 = arith.constant 3.200000e+01 : f32
    %141 = vector.broadcast %cst_65 : f32 to vector<16x1xf32>
    %142 = arith.divf %140, %141 : vector<16x1xf32>
    %143 = vector.broadcast %135 : vector<16x1xf32> to vector<16x32xf32>
    %144 = arith.subf %131, %143 : vector<16x32xf32>
    %cst_66 = arith.constant 9.99999974E-6 : f32
    %145 = vector.broadcast %cst_66 : f32 to vector<16x1xf32>
    %146 = arith.addf %142, %145 : vector<16x1xf32>
    %147 = math.rsqrt %146 : vector<16x1xf32>
    %148 = vector.broadcast %147 : vector<16x1xf32> to vector<16x32xf32>
    %149 = arith.mulf %144, %148 : vector<16x32xf32>
    %150 = vector.broadcast %23 : vector<1x32xf32> to vector<16x32xf32>
    %151 = arith.mulf %149, %150 : vector<16x32xf32>
    %152 = vector.broadcast %25 : vector<1x32xf32> to vector<16x32xf32>
    %153 = arith.addf %151, %152 : vector<16x32xf32>
    %154 = arith.truncf %153 : vector<16x32xf32> to vector<16x32xbf16>
    %cst_67 = arith.constant dense<0.000000e+00> : vector<16x64xf32>
    %155 = tpu.matmul %154, %11, %cst_67 {dimension_numbers = #tpu.dot_dimension_numbers<[1], [0], [0], [1], [0, 0, 1, 1], [], []>} : vector<16x32xbf16>, vector<32x64xbf16>, vector<16x64xf32> -> vector<16x64xf32>
    %156 = vector.broadcast %27 : vector<1x64xf32> to vector<16x64xf32>
    %157 = arith.addf %155, %156 : vector<16x64xf32>
    %cst_68 = arith.constant 0.000000e+00 : f32
    %158 = vector.broadcast %cst_68 : f32 to vector<16x64xf32>
    %159 = arith.maximumf %157, %158 : vector<16x64xf32>
    %160 = arith.truncf %159 : vector<16x64xf32> to vector<16x64xbf16>
    %cst_69 = arith.constant dense<0.000000e+00> : vector<16x32xf32>
    %161 = tpu.matmul %160, %13, %cst_69 {dimension_numbers = #tpu.dot_dimension_numbers<[1], [0], [0], [1], [0, 0, 1, 1], [], []>} : vector<16x64xbf16>, vector<64x32xbf16>, vector<16x32xf32> -> vector<16x32xf32>
    %162 = vector.broadcast %29 : vector<1x32xf32> to vector<16x32xf32>
    %163 = arith.addf %161, %162 : vector<16x32xf32>
    %164 = arith.addf %153, %163 : vector<16x32xf32>
    %cst_70 = arith.constant dense<0.000000e+00> : vector<16xf32>
    %165 = vector.multi_reduction <add>, %164, %cst_70 [1] : vector<16x32xf32> to vector<16xf32>
    %166 = vector.shape_cast %165 : vector<16xf32> to vector<16x1xf32>
    %cst_71 = arith.constant 3.200000e+01 : f32
    %167 = vector.broadcast %cst_71 : f32 to vector<16x1xf32>
    %168 = arith.divf %166, %167 : vector<16x1xf32>
    %169 = vector.broadcast %168 : vector<16x1xf32> to vector<16x32xf32>
    %170 = arith.subf %164, %169 : vector<16x32xf32>
    %171 = arith.mulf %170, %170 : vector<16x32xf32>
    %cst_72 = arith.constant dense<0.000000e+00> : vector<16xf32>
    %172 = vector.multi_reduction <add>, %171, %cst_72 [1] : vector<16x32xf32> to vector<16xf32>
    %173 = vector.shape_cast %172 : vector<16xf32> to vector<16x1xf32>
    %cst_73 = arith.constant 3.200000e+01 : f32
    %174 = vector.broadcast %cst_73 : f32 to vector<16x1xf32>
    %175 = arith.divf %173, %174 : vector<16x1xf32>
    %176 = vector.broadcast %168 : vector<16x1xf32> to vector<16x32xf32>
    %177 = arith.subf %164, %176 : vector<16x32xf32>
    %cst_74 = arith.constant 9.99999974E-6 : f32
    %178 = vector.broadcast %cst_74 : f32 to vector<16x1xf32>
    %179 = arith.addf %175, %178 : vector<16x1xf32>
    %180 = math.rsqrt %179 : vector<16x1xf32>
    %181 = vector.broadcast %180 : vector<16x1xf32> to vector<16x32xf32>
    %182 = arith.mulf %177, %181 : vector<16x32xf32>
    %183 = vector.broadcast %31 : vector<1x32xf32> to vector<16x32xf32>
    %184 = arith.mulf %182, %183 : vector<16x32xf32>
    %185 = vector.broadcast %33 : vector<1x32xf32> to vector<16x32xf32>
    %186 = arith.addf %184, %185 : vector<16x32xf32>
    %187 = vector.shape_cast %186 : vector<16x32xf32> to vector<2x8x32xf32>
    %c1_75 = arith.constant 1 : index
    %c0_76 = arith.constant 0 : index
    %c0_77 = arith.constant 0 : index
    %188 = vector.load %arg3[%c1_75, %c0_76, %c0_77] : memref<2x224x64xbf16, #tpu.memory_space<vmem>>, vector<1x32x32xbf16>
    %189 = vector.shape_cast %188 : vector<1x32x32xbf16> to vector<32x32xbf16>
    %c1_78 = arith.constant 1 : index
    %c32_79 = arith.constant 32 : index
    %c0_80 = arith.constant 0 : index
    %190 = vector.load %arg3[%c1_78, %c32_79, %c0_80] : memref<2x224x64xbf16, #tpu.memory_space<vmem>>, vector<1x32x32xbf16>
    %191 = vector.shape_cast %190 : vector<1x32x32xbf16> to vector<32x32xbf16>
    %c1_81 = arith.constant 1 : index
    %c64_82 = arith.constant 64 : index
    %c0_83 = arith.constant 0 : index
    %192 = vector.load %arg3[%c1_81, %c64_82, %c0_83] : memref<2x224x64xbf16, #tpu.memory_space<vmem>>, vector<1x32x32xbf16>
    %193 = vector.shape_cast %192 : vector<1x32x32xbf16> to vector<32x32xbf16>
    %c1_84 = arith.constant 1 : index
    %c96_85 = arith.constant 96 : index
    %c0_86 = arith.constant 0 : index
    %194 = vector.load %arg3[%c1_84, %c96_85, %c0_86] : memref<2x224x64xbf16, #tpu.memory_space<vmem>>, vector<1x32x32xbf16>
    %195 = vector.shape_cast %194 : vector<1x32x32xbf16> to vector<32x32xbf16>
    %c1_87 = arith.constant 1 : index
    %c128_88 = arith.constant 128 : index
    %c0_89 = arith.constant 0 : index
    %196 = vector.load %arg3[%c1_87, %c128_88, %c0_89] : memref<2x224x64xbf16, #tpu.memory_space<vmem>>, vector<1x32x64xbf16>
    %197 = vector.shape_cast %196 : vector<1x32x64xbf16> to vector<32x64xbf16>
    %c1_90 = arith.constant 1 : index
    %c160_91 = arith.constant 160 : index
    %c0_92 = arith.constant 0 : index
    %198 = vector.load %arg3[%c1_90, %c160_91, %c0_92] : memref<2x224x64xbf16, #tpu.memory_space<vmem>>, vector<1x64x32xbf16>
    %199 = vector.shape_cast %198 : vector<1x64x32xbf16> to vector<64x32xbf16>
    %c1_93 = arith.constant 1 : index
    %c0_94 = arith.constant 0 : index
    %c0_95 = arith.constant 0 : index
    %200 = vector.load %arg4[%c1_93, %c0_94, %c0_95] : memref<2x16x64xf32, #tpu.memory_space<vmem>>, vector<1x1x32xf32>
    %201 = vector.shape_cast %200 : vector<1x1x32xf32> to vector<1x32xf32>
    %c1_96 = arith.constant 1 : index
    %c1_97 = arith.constant 1 : index
    %c0_98 = arith.constant 0 : index
    %202 = vector.load %arg4[%c1_96, %c1_97, %c0_98] : memref<2x16x64xf32, #tpu.memory_space<vmem>>, vector<1x1x32xf32>
    %203 = vector.shape_cast %202 : vector<1x1x32xf32> to vector<1x32xf32>
    %c1_99 = arith.constant 1 : index
    %c2_100 = arith.constant 2 : index
    %c0_101 = arith.constant 0 : index
    %204 = vector.load %arg4[%c1_99, %c2_100, %c0_101] : memref<2x16x64xf32, #tpu.memory_space<vmem>>, vector<1x1x32xf32>
    %205 = vector.shape_cast %204 : vector<1x1x32xf32> to vector<1x32xf32>
    %c1_102 = arith.constant 1 : index
    %c3_103 = arith.constant 3 : index
    %c0_104 = arith.constant 0 : index
    %206 = vector.load %arg4[%c1_102, %c3_103, %c0_104] : memref<2x16x64xf32, #tpu.memory_space<vmem>>, vector<1x1x32xf32>
    %207 = vector.shape_cast %206 : vector<1x1x32xf32> to vector<1x32xf32>
    %c1_105 = arith.constant 1 : index
    %c4_106 = arith.constant 4 : index
    %c0_107 = arith.constant 0 : index
    %208 = vector.load %arg4[%c1_105, %c4_106, %c0_107] : memref<2x16x64xf32, #tpu.memory_space<vmem>>, vector<1x1x32xf32>
    %209 = vector.shape_cast %208 : vector<1x1x32xf32> to vector<1x32xf32>
    %c1_108 = arith.constant 1 : index
    %c5_109 = arith.constant 5 : index
    %c0_110 = arith.constant 0 : index
    %210 = vector.load %arg4[%c1_108, %c5_109, %c0_110] : memref<2x16x64xf32, #tpu.memory_space<vmem>>, vector<1x1x32xf32>
    %211 = vector.shape_cast %210 : vector<1x1x32xf32> to vector<1x32xf32>
    %c1_111 = arith.constant 1 : index
    %c6_112 = arith.constant 6 : index
    %c0_113 = arith.constant 0 : index
    %212 = vector.load %arg4[%c1_111, %c6_112, %c0_113] : memref<2x16x64xf32, #tpu.memory_space<vmem>>, vector<1x1x64xf32>
    %213 = vector.shape_cast %212 : vector<1x1x64xf32> to vector<1x64xf32>
    %c1_114 = arith.constant 1 : index
    %c7_115 = arith.constant 7 : index
    %c0_116 = arith.constant 0 : index
    %214 = vector.load %arg4[%c1_114, %c7_115, %c0_116] : memref<2x16x64xf32, #tpu.memory_space<vmem>>, vector<1x1x32xf32>
    %215 = vector.shape_cast %214 : vector<1x1x32xf32> to vector<1x32xf32>
    %c1_117 = arith.constant 1 : index
    %c8_118 = arith.constant 8 : index
    %c0_119 = arith.constant 0 : index
    %216 = vector.load %arg4[%c1_117, %c8_118, %c0_119] : memref<2x16x64xf32, #tpu.memory_space<vmem>>, vector<1x1x32xf32>
    %217 = vector.shape_cast %216 : vector<1x1x32xf32> to vector<1x32xf32>
    %c1_120 = arith.constant 1 : index
    %c9_121 = arith.constant 9 : index
    %c0_122 = arith.constant 0 : index
    %218 = vector.load %arg4[%c1_120, %c9_121, %c0_122] : memref<2x16x64xf32, #tpu.memory_space<vmem>>, vector<1x1x32xf32>
    %219 = vector.shape_cast %218 : vector<1x1x32xf32> to vector<1x32xf32>
    %220 = vector.shape_cast %1 : vector<2x8x32xf32> to vector<16x32xf32>
    %221 = vector.shape_cast %0 : vector<2x8x32xf32> to vector<16x32xf32>
    %222 = arith.truncf %220 : vector<16x32xf32> to vector<16x32xbf16>
    %223 = arith.truncf %221 : vector<16x32xf32> to vector<16x32xbf16>
    %cst_123 = arith.constant dense<0.000000e+00> : vector<16x32xf32>
    %224 = tpu.matmul %222, %189, %cst_123 {dimension_numbers = #tpu.dot_dimension_numbers<[1], [0], [0], [1], [0, 0, 1, 1], [], []>} : vector<16x32xbf16>, vector<32x32xbf16>, vector<16x32xf32> -> vector<16x32xf32>
    %225 = vector.broadcast %201 : vector<1x32xf32> to vector<16x32xf32>
    %226 = arith.addf %224, %225 : vector<16x32xf32>
    %cst_124 = arith.constant dense<0.000000e+00> : vector<16x32xf32>
    %227 = tpu.matmul %223, %191, %cst_124 {dimension_numbers = #tpu.dot_dimension_numbers<[1], [0], [0], [1], [0, 0, 1, 1], [], []>} : vector<16x32xbf16>, vector<32x32xbf16>, vector<16x32xf32> -> vector<16x32xf32>
    %228 = vector.broadcast %203 : vector<1x32xf32> to vector<16x32xf32>
    %229 = arith.addf %227, %228 : vector<16x32xf32>
    %cst_125 = arith.constant dense<0.000000e+00> : vector<16x32xf32>
    %230 = tpu.matmul %223, %193, %cst_125 {dimension_numbers = #tpu.dot_dimension_numbers<[1], [0], [0], [1], [0, 0, 1, 1], [], []>} : vector<16x32xbf16>, vector<32x32xbf16>, vector<16x32xf32> -> vector<16x32xf32>
    %231 = vector.broadcast %205 : vector<1x32xf32> to vector<16x32xf32>
    %232 = arith.addf %230, %231 : vector<16x32xf32>
    %233 = vector.shape_cast %226 : vector<16x32xf32> to vector<2x8x32xf32>
    %234 = arith.truncf %233 : vector<2x8x32xf32> to vector<2x8x32xbf16>
    %235 = vector.shape_cast %229 : vector<16x32xf32> to vector<2x8x32xf32>
    %236 = arith.truncf %235 : vector<2x8x32xf32> to vector<2x8x32xbf16>
    %237 = vector.shape_cast %232 : vector<16x32xf32> to vector<2x8x32xf32>
    %238 = arith.truncf %237 : vector<2x8x32xf32> to vector<2x8x32xbf16>
    %239 = vector.extract_strided_slice %234 {offsets = [0, 0, 0], sizes = [2, 8, 8], strides = [1, 1, 1]} : vector<2x8x32xbf16> to vector<2x8x8xbf16>
    %240 = vector.extract_strided_slice %236 {offsets = [0, 0, 0], sizes = [2, 8, 8], strides = [1, 1, 1]} : vector<2x8x32xbf16> to vector<2x8x8xbf16>
    %241 = vector.extract_strided_slice %238 {offsets = [0, 0, 0], sizes = [2, 8, 8], strides = [1, 1, 1]} : vector<2x8x32xbf16> to vector<2x8x8xbf16>
    "tpu.trace_start"() <{level = 10 : i32, message = "bld,bmd->blm"}> : () -> ()
    %cst_126 = arith.constant dense<0.000000e+00> : vector<2x8x8xf32>
    %242 = tpu.matmul %239, %240, %cst_126 {dimension_numbers = #tpu.dot_dimension_numbers<[2], [2], [1], [1], [0, 0, 0, 1, 1, 1], [0], [0]>} : vector<2x8x8xbf16>, vector<2x8x8xbf16>, vector<2x8x8xf32> -> vector<2x8x8xf32>
    "tpu.trace_stop"() : () -> ()
    %cst_127 = arith.constant 0.353553385 : f32
    %243 = vector.broadcast %cst_127 : f32 to vector<2x8x8xf32>
    %244 = arith.mulf %242, %243 : vector<2x8x8xf32>
    %cst_128 = arith.constant dense<0xFF800000> : vector<2x8xf32>
    %245 = vector.multi_reduction <maximumf>, %244, %cst_128 [2] : vector<2x8x8xf32> to vector<2x8xf32>
    %246 = vector.shape_cast %245 : vector<2x8xf32> to vector<2x8x1xf32>
    %247 = vector.broadcast %246 : vector<2x8x1xf32> to vector<2x8x8xf32>
    %248 = arith.subf %244, %247 : vector<2x8x8xf32>
    %249 = math.exp %248 : vector<2x8x8xf32>
    %cst_129 = arith.constant dense<0.000000e+00> : vector<2x8xf32>
    %250 = vector.multi_reduction <add>, %249, %cst_129 [2] : vector<2x8x8xf32> to vector<2x8xf32>
    %251 = vector.shape_cast %250 : vector<2x8xf32> to vector<2x8x1xf32>
    %252 = tpu.reciprocal %251 {approx = true} : vector<2x8x1xf32> -> vector<2x8x1xf32>
    %253 = vector.broadcast %252 : vector<2x8x1xf32> to vector<2x8x8xf32>
    %254 = arith.mulf %249, %253 : vector<2x8x8xf32>
    %255 = arith.truncf %254 : vector<2x8x8xf32> to vector<2x8x8xbf16>
    "tpu.trace_start"() <{level = 10 : i32, message = "blm,bmd->bld"}> : () -> ()
    %cst_130 = arith.constant dense<0.000000e+00> : vector<2x8x8xf32>
    %256 = tpu.matmul %255, %241, %cst_130 {dimension_numbers = #tpu.dot_dimension_numbers<[2], [1], [1], [2], [0, 0, 0, 1, 1, 2], [0], [0]>} : vector<2x8x8xbf16>, vector<2x8x8xbf16>, vector<2x8x8xf32> -> vector<2x8x8xf32>
    "tpu.trace_stop"() : () -> ()
    %257 = vector.extract_strided_slice %234 {offsets = [0, 0, 8], sizes = [2, 8, 8], strides = [1, 1, 1]} : vector<2x8x32xbf16> to vector<2x8x8xbf16>
    %258 = vector.extract_strided_slice %236 {offsets = [0, 0, 8], sizes = [2, 8, 8], strides = [1, 1, 1]} : vector<2x8x32xbf16> to vector<2x8x8xbf16>
    %259 = vector.extract_strided_slice %238 {offsets = [0, 0, 8], sizes = [2, 8, 8], strides = [1, 1, 1]} : vector<2x8x32xbf16> to vector<2x8x8xbf16>
    "tpu.trace_start"() <{level = 10 : i32, message = "bld,bmd->blm"}> : () -> ()
    %cst_131 = arith.constant dense<0.000000e+00> : vector<2x8x8xf32>
    %260 = tpu.matmul %257, %258, %cst_131 {dimension_numbers = #tpu.dot_dimension_numbers<[2], [2], [1], [1], [0, 0, 0, 1, 1, 1], [0], [0]>} : vector<2x8x8xbf16>, vector<2x8x8xbf16>, vector<2x8x8xf32> -> vector<2x8x8xf32>
    "tpu.trace_stop"() : () -> ()
    %cst_132 = arith.constant 0.353553385 : f32
    %261 = vector.broadcast %cst_132 : f32 to vector<2x8x8xf32>
    %262 = arith.mulf %260, %261 : vector<2x8x8xf32>
    %cst_133 = arith.constant dense<0xFF800000> : vector<2x8xf32>
    %263 = vector.multi_reduction <maximumf>, %262, %cst_133 [2] : vector<2x8x8xf32> to vector<2x8xf32>
    %264 = vector.shape_cast %263 : vector<2x8xf32> to vector<2x8x1xf32>
    %265 = vector.broadcast %264 : vector<2x8x1xf32> to vector<2x8x8xf32>
    %266 = arith.subf %262, %265 : vector<2x8x8xf32>
    %267 = math.exp %266 : vector<2x8x8xf32>
    %cst_134 = arith.constant dense<0.000000e+00> : vector<2x8xf32>
    %268 = vector.multi_reduction <add>, %267, %cst_134 [2] : vector<2x8x8xf32> to vector<2x8xf32>
    %269 = vector.shape_cast %268 : vector<2x8xf32> to vector<2x8x1xf32>
    %270 = tpu.reciprocal %269 {approx = true} : vector<2x8x1xf32> -> vector<2x8x1xf32>
    %271 = vector.broadcast %270 : vector<2x8x1xf32> to vector<2x8x8xf32>
    %272 = arith.mulf %267, %271 : vector<2x8x8xf32>
    %273 = arith.truncf %272 : vector<2x8x8xf32> to vector<2x8x8xbf16>
    "tpu.trace_start"() <{level = 10 : i32, message = "blm,bmd->bld"}> : () -> ()
    %cst_135 = arith.constant dense<0.000000e+00> : vector<2x8x8xf32>
    %274 = tpu.matmul %273, %259, %cst_135 {dimension_numbers = #tpu.dot_dimension_numbers<[2], [1], [1], [2], [0, 0, 0, 1, 1, 2], [0], [0]>} : vector<2x8x8xbf16>, vector<2x8x8xbf16>, vector<2x8x8xf32> -> vector<2x8x8xf32>
    "tpu.trace_stop"() : () -> ()
    %275 = vector.extract_strided_slice %234 {offsets = [0, 0, 16], sizes = [2, 8, 8], strides = [1, 1, 1]} : vector<2x8x32xbf16> to vector<2x8x8xbf16>
    %276 = vector.extract_strided_slice %236 {offsets = [0, 0, 16], sizes = [2, 8, 8], strides = [1, 1, 1]} : vector<2x8x32xbf16> to vector<2x8x8xbf16>
    %277 = vector.extract_strided_slice %238 {offsets = [0, 0, 16], sizes = [2, 8, 8], strides = [1, 1, 1]} : vector<2x8x32xbf16> to vector<2x8x8xbf16>
    "tpu.trace_start"() <{level = 10 : i32, message = "bld,bmd->blm"}> : () -> ()
    %cst_136 = arith.constant dense<0.000000e+00> : vector<2x8x8xf32>
    %278 = tpu.matmul %275, %276, %cst_136 {dimension_numbers = #tpu.dot_dimension_numbers<[2], [2], [1], [1], [0, 0, 0, 1, 1, 1], [0], [0]>} : vector<2x8x8xbf16>, vector<2x8x8xbf16>, vector<2x8x8xf32> -> vector<2x8x8xf32>
    "tpu.trace_stop"() : () -> ()
    %cst_137 = arith.constant 0.353553385 : f32
    %279 = vector.broadcast %cst_137 : f32 to vector<2x8x8xf32>
    %280 = arith.mulf %278, %279 : vector<2x8x8xf32>
    %cst_138 = arith.constant dense<0xFF800000> : vector<2x8xf32>
    %281 = vector.multi_reduction <maximumf>, %280, %cst_138 [2] : vector<2x8x8xf32> to vector<2x8xf32>
    %282 = vector.shape_cast %281 : vector<2x8xf32> to vector<2x8x1xf32>
    %283 = vector.broadcast %282 : vector<2x8x1xf32> to vector<2x8x8xf32>
    %284 = arith.subf %280, %283 : vector<2x8x8xf32>
    %285 = math.exp %284 : vector<2x8x8xf32>
    %cst_139 = arith.constant dense<0.000000e+00> : vector<2x8xf32>
    %286 = vector.multi_reduction <add>, %285, %cst_139 [2] : vector<2x8x8xf32> to vector<2x8xf32>
    %287 = vector.shape_cast %286 : vector<2x8xf32> to vector<2x8x1xf32>
    %288 = tpu.reciprocal %287 {approx = true} : vector<2x8x1xf32> -> vector<2x8x1xf32>
    %289 = vector.broadcast %288 : vector<2x8x1xf32> to vector<2x8x8xf32>
    %290 = arith.mulf %285, %289 : vector<2x8x8xf32>
    %291 = arith.truncf %290 : vector<2x8x8xf32> to vector<2x8x8xbf16>
    "tpu.trace_start"() <{level = 10 : i32, message = "blm,bmd->bld"}> : () -> ()
    %cst_140 = arith.constant dense<0.000000e+00> : vector<2x8x8xf32>
    %292 = tpu.matmul %291, %277, %cst_140 {dimension_numbers = #tpu.dot_dimension_numbers<[2], [1], [1], [2], [0, 0, 0, 1, 1, 2], [0], [0]>} : vector<2x8x8xbf16>, vector<2x8x8xbf16>, vector<2x8x8xf32> -> vector<2x8x8xf32>
    "tpu.trace_stop"() : () -> ()
    %293 = vector.extract_strided_slice %234 {offsets = [0, 0, 24], sizes = [2, 8, 8], strides = [1, 1, 1]} : vector<2x8x32xbf16> to vector<2x8x8xbf16>
    %294 = vector.extract_strided_slice %236 {offsets = [0, 0, 24], sizes = [2, 8, 8], strides = [1, 1, 1]} : vector<2x8x32xbf16> to vector<2x8x8xbf16>
    %295 = vector.extract_strided_slice %238 {offsets = [0, 0, 24], sizes = [2, 8, 8], strides = [1, 1, 1]} : vector<2x8x32xbf16> to vector<2x8x8xbf16>
    "tpu.trace_start"() <{level = 10 : i32, message = "bld,bmd->blm"}> : () -> ()
    %cst_141 = arith.constant dense<0.000000e+00> : vector<2x8x8xf32>
    %296 = tpu.matmul %293, %294, %cst_141 {dimension_numbers = #tpu.dot_dimension_numbers<[2], [2], [1], [1], [0, 0, 0, 1, 1, 1], [0], [0]>} : vector<2x8x8xbf16>, vector<2x8x8xbf16>, vector<2x8x8xf32> -> vector<2x8x8xf32>
    "tpu.trace_stop"() : () -> ()
    %cst_142 = arith.constant 0.353553385 : f32
    %297 = vector.broadcast %cst_142 : f32 to vector<2x8x8xf32>
    %298 = arith.mulf %296, %297 : vector<2x8x8xf32>
    %cst_143 = arith.constant dense<0xFF800000> : vector<2x8xf32>
    %299 = vector.multi_reduction <maximumf>, %298, %cst_143 [2] : vector<2x8x8xf32> to vector<2x8xf32>
    %300 = vector.shape_cast %299 : vector<2x8xf32> to vector<2x8x1xf32>
    %301 = vector.broadcast %300 : vector<2x8x1xf32> to vector<2x8x8xf32>
    %302 = arith.subf %298, %301 : vector<2x8x8xf32>
    %303 = math.exp %302 : vector<2x8x8xf32>
    %cst_144 = arith.constant dense<0.000000e+00> : vector<2x8xf32>
    %304 = vector.multi_reduction <add>, %303, %cst_144 [2] : vector<2x8x8xf32> to vector<2x8xf32>
    %305 = vector.shape_cast %304 : vector<2x8xf32> to vector<2x8x1xf32>
    %306 = tpu.reciprocal %305 {approx = true} : vector<2x8x1xf32> -> vector<2x8x1xf32>
    %307 = vector.broadcast %306 : vector<2x8x1xf32> to vector<2x8x8xf32>
    %308 = arith.mulf %303, %307 : vector<2x8x8xf32>
    %309 = arith.truncf %308 : vector<2x8x8xf32> to vector<2x8x8xbf16>
    "tpu.trace_start"() <{level = 10 : i32, message = "blm,bmd->bld"}> : () -> ()
    %cst_145 = arith.constant dense<0.000000e+00> : vector<2x8x8xf32>
    %310 = tpu.matmul %309, %295, %cst_145 {dimension_numbers = #tpu.dot_dimension_numbers<[2], [1], [1], [2], [0, 0, 0, 1, 1, 2], [0], [0]>} : vector<2x8x8xbf16>, vector<2x8x8xbf16>, vector<2x8x8xf32> -> vector<2x8x8xf32>
    "tpu.trace_stop"() : () -> ()
    %311 = tpu.concatenate %256, %274, %292, %310 in 2 : vector<2x8x8xf32>, vector<2x8x8xf32>, vector<2x8x8xf32>, vector<2x8x8xf32> -> vector<2x8x32xf32>
    %312 = vector.shape_cast %311 : vector<2x8x32xf32> to vector<16x32xf32>
    %313 = arith.truncf %312 : vector<16x32xf32> to vector<16x32xbf16>
    %cst_146 = arith.constant dense<0.000000e+00> : vector<16x32xf32>
    %314 = tpu.matmul %313, %195, %cst_146 {dimension_numbers = #tpu.dot_dimension_numbers<[1], [0], [0], [1], [0, 0, 1, 1], [], []>} : vector<16x32xbf16>, vector<32x32xbf16>, vector<16x32xf32> -> vector<16x32xf32>
    %315 = vector.broadcast %207 : vector<1x32xf32> to vector<16x32xf32>
    %316 = arith.addf %314, %315 : vector<16x32xf32>
    %317 = arith.addf %220, %316 : vector<16x32xf32>
    %cst_147 = arith.constant dense<0.000000e+00> : vector<16xf32>
    %318 = vector.multi_reduction <add>, %317, %cst_147 [1] : vector<16x32xf32> to vector<16xf32>
    %319 = vector.shape_cast %318 : vector<16xf32> to vector<16x1xf32>
    %cst_148 = arith.constant 3.200000e+01 : f32
    %320 = vector.broadcast %cst_148 : f32 to vector<16x1xf32>
    %321 = arith.divf %319, %320 : vector<16x1xf32>
    %322 = vector.broadcast %321 : vector<16x1xf32> to vector<16x32xf32>
    %323 = arith.subf %317, %322 : vector<16x32xf32>
    %324 = arith.mulf %323, %323 : vector<16x32xf32>
    %cst_149 = arith.constant dense<0.000000e+00> : vector<16xf32>
    %325 = vector.multi_reduction <add>, %324, %cst_149 [1] : vector<16x32xf32> to vector<16xf32>
    %326 = vector.shape_cast %325 : vector<16xf32> to vector<16x1xf32>
    %cst_150 = arith.constant 3.200000e+01 : f32
    %327 = vector.broadcast %cst_150 : f32 to vector<16x1xf32>
    %328 = arith.divf %326, %327 : vector<16x1xf32>
    %329 = vector.broadcast %321 : vector<16x1xf32> to vector<16x32xf32>
    %330 = arith.subf %317, %329 : vector<16x32xf32>
    %cst_151 = arith.constant 9.99999974E-6 : f32
    %331 = vector.broadcast %cst_151 : f32 to vector<16x1xf32>
    %332 = arith.addf %328, %331 : vector<16x1xf32>
    %333 = math.rsqrt %332 : vector<16x1xf32>
    %334 = vector.broadcast %333 : vector<16x1xf32> to vector<16x32xf32>
    %335 = arith.mulf %330, %334 : vector<16x32xf32>
    %336 = vector.broadcast %209 : vector<1x32xf32> to vector<16x32xf32>
    %337 = arith.mulf %335, %336 : vector<16x32xf32>
    %338 = vector.broadcast %211 : vector<1x32xf32> to vector<16x32xf32>
    %339 = arith.addf %337, %338 : vector<16x32xf32>
    %340 = arith.truncf %339 : vector<16x32xf32> to vector<16x32xbf16>
    %cst_152 = arith.constant dense<0.000000e+00> : vector<16x64xf32>
    %341 = tpu.matmul %340, %197, %cst_152 {dimension_numbers = #tpu.dot_dimension_numbers<[1], [0], [0], [1], [0, 0, 1, 1], [], []>} : vector<16x32xbf16>, vector<32x64xbf16>, vector<16x64xf32> -> vector<16x64xf32>
    %342 = vector.broadcast %213 : vector<1x64xf32> to vector<16x64xf32>
    %343 = arith.addf %341, %342 : vector<16x64xf32>
    %cst_153 = arith.constant 0.000000e+00 : f32
    %344 = vector.broadcast %cst_153 : f32 to vector<16x64xf32>
    %345 = arith.maximumf %343, %344 : vector<16x64xf32>
    %346 = arith.truncf %345 : vector<16x64xf32> to vector<16x64xbf16>
    %cst_154 = arith.constant dense<0.000000e+00> : vector<16x32xf32>
    %347 = tpu.matmul %346, %199, %cst_154 {dimension_numbers = #tpu.dot_dimension_numbers<[1], [0], [0], [1], [0, 0, 1, 1], [], []>} : vector<16x64xbf16>, vector<64x32xbf16>, vector<16x32xf32> -> vector<16x32xf32>
    %348 = vector.broadcast %215 : vector<1x32xf32> to vector<16x32xf32>
    %349 = arith.addf %347, %348 : vector<16x32xf32>
    %350 = arith.addf %339, %349 : vector<16x32xf32>
    %cst_155 = arith.constant dense<0.000000e+00> : vector<16xf32>
    %351 = vector.multi_reduction <add>, %350, %cst_155 [1] : vector<16x32xf32> to vector<16xf32>
    %352 = vector.shape_cast %351 : vector<16xf32> to vector<16x1xf32>
    %cst_156 = arith.constant 3.200000e+01 : f32
    %353 = vector.broadcast %cst_156 : f32 to vector<16x1xf32>
    %354 = arith.divf %352, %353 : vector<16x1xf32>
    %355 = vector.broadcast %354 : vector<16x1xf32> to vector<16x32xf32>
    %356 = arith.subf %350, %355 : vector<16x32xf32>
    %357 = arith.mulf %356, %356 : vector<16x32xf32>
    %cst_157 = arith.constant dense<0.000000e+00> : vector<16xf32>
    %358 = vector.multi_reduction <add>, %357, %cst_157 [1] : vector<16x32xf32> to vector<16xf32>
    %359 = vector.shape_cast %358 : vector<16xf32> to vector<16x1xf32>
    %cst_158 = arith.constant 3.200000e+01 : f32
    %360 = vector.broadcast %cst_158 : f32 to vector<16x1xf32>
    %361 = arith.divf %359, %360 : vector<16x1xf32>
    %362 = vector.broadcast %354 : vector<16x1xf32> to vector<16x32xf32>
    %363 = arith.subf %350, %362 : vector<16x32xf32>
    %cst_159 = arith.constant 9.99999974E-6 : f32
    %364 = vector.broadcast %cst_159 : f32 to vector<16x1xf32>
    %365 = arith.addf %361, %364 : vector<16x1xf32>
    %366 = math.rsqrt %365 : vector<16x1xf32>
    %367 = vector.broadcast %366 : vector<16x1xf32> to vector<16x32xf32>
    %368 = arith.mulf %363, %367 : vector<16x32xf32>
    %369 = vector.broadcast %217 : vector<1x32xf32> to vector<16x32xf32>
    %370 = arith.mulf %368, %369 : vector<16x32xf32>
    %371 = vector.broadcast %219 : vector<1x32xf32> to vector<16x32xf32>
    %372 = arith.addf %370, %371 : vector<16x32xf32>
    %373 = vector.shape_cast %372 : vector<16x32xf32> to vector<2x8x32xf32>
    %c0_160 = arith.constant 0 : index
    %c0_161 = arith.constant 0 : index
    %374 = vector.load %arg0[%c0_160, %c0_161] : memref<1x1xf32, #tpu.memory_space<vmem>>, vector<1x1xf32>
    %cst_162 = arith.constant 0.000000e+00 : f32
    %375 = vector.broadcast %cst_162 : f32 to vector<1x1xf32>
    %376 = arith.subf %375, %374 : vector<1x1xf32>
    %377 = math.exp %376 : vector<1x1xf32>
    %cst_163 = arith.constant 1.000000e+00 : f32
    %378 = vector.broadcast %cst_163 : f32 to vector<1x1xf32>
    %379 = arith.addf %378, %377 : vector<1x1xf32>
    %cst_164 = arith.constant 1.000000e+00 : f32
    %380 = vector.broadcast %cst_164 : f32 to vector<1x1xf32>
    %381 = arith.divf %380, %379 : vector<1x1xf32>
    %382 = vector.shape_cast %381 : vector<1x1xf32> to vector<1x1x1xf32>
    %383 = vector.broadcast %382 : vector<1x1x1xf32> to vector<2x8x32xf32>
    %384 = arith.mulf %383, %187 : vector<2x8x32xf32>
    %cst_165 = arith.constant 1.000000e+00 : f32
    %385 = vector.broadcast %cst_165 : f32 to vector<1x1xf32>
    %386 = arith.subf %385, %381 : vector<1x1xf32>
    %387 = vector.shape_cast %386 : vector<1x1xf32> to vector<1x1x1xf32>
    %388 = vector.broadcast %387 : vector<1x1x1xf32> to vector<2x8x32xf32>
    %389 = arith.mulf %388, %373 : vector<2x8x32xf32>
    %390 = arith.addf %384, %389 : vector<2x8x32xf32>
    %c0_166 = arith.constant 0 : index
    %c0_167 = arith.constant 0 : index
    %c0_168 = arith.constant 0 : index
    %391 = vector.load %arg5[%c0_166, %c0_167, %c0_168] : memref<2x8x32xf32, #tpu.memory_space<vmem>>, vector<2x8x32xf32>
    tpu.vector_store %arg5[%c0_166, %c0_167, %c0_168], %390 {strides = array<i32>} : memref<2x8x32xf32, #tpu.memory_space<vmem>>, vector<2x8x32xf32>,
    return
  }
}

</mosaic_0001>

<llo_original>
// kernel: multimodal_contextual_attention.1
$region0: #{multimodal_contextual_attention.1}
  #allocation0 [shape = 'u32[]', space=smem, size = 0x4, offset = 0x4, fixed_abs, tag = 'smem constant byte address 0x4 - core index']
  #allocation1 [shape = 'u32[144,128]{1,0:T(1,128)}', space=vmem, size = 0x12000, scoped, tag = 'internal scratch']
  #allocation2 [shape = 'f32[1,1]{1,0:T(1,128)S(1)}', space=vmem, size = 0x200, scoped, tag = 'scoped memory for multimodal_contextual_attention.1']
  %s0 = inlined_call_operand.<no memory space> [shape: f32[1,1], index: 0, kind: input, shape index: {}]
  %s1 = inlined_call_operand.vmem [shape: f32[2,8,32], index: 1, kind: input, shape index: {}]
  %s2 = inlined_call_operand.vmem [shape: f32[2,8,32], index: 2, kind: input, shape index: {}]
  %s3 = inlined_call_operand.vmem [shape: bf16[2,224,64], index: 3, kind: input, shape index: {}]
  %s4 = inlined_call_operand.vmem [shape: f32[2,16,64], index: 4, kind: input, shape index: {}]
  %s5 = inlined_call_operand.hbm [shape: f32[2,8,32], index: 5, kind: output, shape index: {}]
  %s6 = sld [smem:[#allocation0]]
  $region30: #{multimodal_contextual_attention.1} parent=0
    _
  %s8 = ssub.s32 1, %s6
  %s9 = scalar_select 0, %s8, %s6
  %v10 = vstv %s0
  %11 = vst [vmem:[#allocation2] sm:$0x1] %v10
  $region1: #{multimodal_contextual_attention.1} parent=0
    #allocation3 [shape = 'u8[8192]{0}', space=vmem, size = 0x2000, scoped, tag = 'output window, operand 0, single buffered']
    #allocation4 [shape = 's32[1]{0}', space=sflag, size = 0x4, scoped, tag = 'scoped memory for multimodal_contextual_attention.1']
    %12 = vsyncpa [#allocation4], 0
    // Predicated region
    $region2: #{multimodal_contextual_attention.1} parent=1 // pred_check
      _
    $region3: #{multimodal_contextual_attention.1} parent=1 // pred_check_branch
      %14 = sbr.rel (0) target = $region5
    $region4: #{multimodal_contextual_attention.1} parent=1 // pred_region
      _
    $region5: #{multimodal_contextual_attention.1} parent=1 // pred_fallthru
      _
    // Predicated region
    $region6: #{multimodal_contextual_attention.1} parent=1 // pred_check
      _
    $region7: #{multimodal_contextual_attention.1} parent=1 // pred_check_branch
      %16 = sbr.rel (0) target = $region9
    $region8: #{multimodal_contextual_attention.1} parent=1 // pred_region
      _
    $region9: #{multimodal_contextual_attention.1} parent=1 // pred_fallthru
      _
    // Predicated region
    $region10: #{multimodal_contextual_attention.1} parent=1 // pred_check
      _
    $region11: #{multimodal_contextual_attention.1} parent=1 // pred_check_branch
      %18 = sbr.rel (0) target = $region13
    $region12: #{multimodal_contextual_attention.1} parent=1 // pred_region
      _
    $region13: #{multimodal_contextual_attention.1} parent=1 // pred_fallthru
      _
    // Predicated region
    $region14: #{multimodal_contextual_attention.1} parent=1 // pred_check
      _
    $region15: #{multimodal_contextual_attention.1} parent=1 // pred_check_branch
      %20 = sbr.rel (0) target = $region17
    $region16: #{multimodal_contextual_attention.1} parent=1 // pred_region
      _
    $region17: #{multimodal_contextual_attention.1} parent=1 // pred_fallthru
      _
    // Predicated region
    $region18: #{multimodal_contextual_attention.1} parent=1 // pred_check
      _
    $region19: #{multimodal_contextual_attention.1} parent=1 // pred_check_branch
      %22 = sbr.rel (0) target = $region21
    $region20: #{multimodal_contextual_attention.1} parent=1 // pred_region
      _
    $region21: #{multimodal_contextual_attention.1} parent=1 // pred_fallthru
      _
    %v24 = vld [vmem:[%s1] sm:$0xff]
    %v25 = vld [vmem:[%s1 + $0x8] sm:$0xff]
    %v26 = vld [vmem:[%s2] sm:$0xff]
    %v27 = vld [vmem:[%s2 + $0x8] sm:$0xff]
    %v28 = vld [vmem:[%s3] sm:$0xf]
    %v29 = vld [vmem:[%s3 + $0x4] sm:$0xf]
    %v30 = vld [vmem:[%s3 + $0x8] sm:$0xf]
    %v31 = vld [vmem:[%s3 + $0xc] sm:$0xf]
    %v32 = vld [vmem:[%s3 + $0x10] sm:$0xf]
    %v33 = vld [vmem:[%s3 + $0x14] sm:$0xf]
    %v34 = vld [vmem:[%s3 + $0x18] sm:$0xf]
    %v35 = vld [vmem:[%s3 + $0x1c] sm:$0xf]
    %v36 = vld [vmem:[%s3 + $0x20] sm:$0xf]
    %v37 = vld [vmem:[%s3 + $0x24] sm:$0xf]
    %v38 = vld [vmem:[%s3 + $0x28] sm:$0xf]
    %v39 = vld [vmem:[%s3 + $0x2c] sm:$0xf]
    %v40 = vld [vmem:[%s3 + $0x30] sm:$0xf]
    %v41 = vld [vmem:[%s3 + $0x34] sm:$0xf]
    %v42 = vld [vmem:[%s3 + $0x38] sm:$0xf]
    %v43 = vld [vmem:[%s3 + $0x3c] sm:$0xf]
    %v44 = vld [vmem:[%s3 + $0x40] sm:$0xf]
    %v45 = vld [vmem:[%s3 + $0x44] sm:$0xf]
    %v46 = vld [vmem:[%s3 + $0x48] sm:$0xf]
    %v47 = vld [vmem:[%s3 + $0x4c] sm:$0xf]
    %v48 = vld [vmem:[%s3 + $0x50] sm:$0xf]
    %v49 = vld [vmem:[%s3 + $0x54] sm:$0xf]
    %v50 = vld [vmem:[%s3 + $0x58] sm:$0xf]
    %v51 = vld [vmem:[%s3 + $0x5c] sm:$0xf]
    %v52 = vld [vmem:[%s3 + $0x60] sm:$0xf]
    %v53 = vld [vmem:[%s3 + $0x64] sm:$0xf]
    %v54 = vld [vmem:[%s3 + $0x68] sm:$0xf]
    %v55 = vld [vmem:[%s3 + $0x6c] sm:$0xf]
    %v56 = vld [vmem:[%s4] sm:$0x1]
    %v57 = vld [vmem:[%s4 + $0x1] sm:$0x1]
    %v58 = vld [vmem:[%s4 + $0x2] sm:$0x1]
    %v59 = vld [vmem:[%s4 + $0x3] sm:$0x1]
    %v60 = vld [vmem:[%s4 + $0x4] sm:$0x1]
    %v61 = vld [vmem:[%s4 + $0x5] sm:$0x1]
    %v62 = vld [vmem:[%s4 + $0x6] sm:$0x1]
    %v63 = vld [vmem:[%s4 + $0x7] sm:$0x1]
    %v64 = vld [vmem:[%s4 + $0x8] sm:$0x1]
    %v65 = vld [vmem:[%s4 + $0x9] sm:$0x1]
    %v66 = vpack.c.bf16 %v25, %v24
    %v67 = vpack.c.bf16 %v27, %v26
    %v68 = vlaneseq
    %v69 = vshrl.u32 %v68, 7
    %v70 = vsub.s32 0, %v69
    %v71 = vrot.slane %v56, %v70
    %v76 = vunpack.c.l.b16 %v28
    %v77 = vunpack.c.l.b16 %v29
    %v78 = vunpack.c.l.b16 %v30
    %v79 = vunpack.c.l.b16 %v31
    %v80 = vpack.c.b16 %v77, %v76
    %v81 = vpack.c.b16 %v79, %v78
    %vm84 = vcmask 261120
    %v86 = vsel %vm84, %v66, 0
    %88 = vmatprep.subr.bf16.mxu0 0
    %89 = vmatpush1.bf16.msra.mxu0 0
    %90 = vmatprep.subr.bf16.mxu0 0
    %91 = vmatpush1.bf16.msra.mxu0 0
    %92 = vmatprep.subr.bf16.mxu0 0
    %93 = vmatpush1.bf16.msra.mxu0 0
    %94 = vmatprep.subr.bf16.mxu0 0
    %95 = vmatpush1.bf16.msra.mxu0 0
    %96 = vmatprep.subr.bf16.mxu0 0
    %97 = vmatpush1.bf16.msra.mxu0 0
    %98 = vmatprep.subr.bf16.mxu0 0
    %99 = vmatpush1.bf16.msra.mxu0 0
    %100 = vmatprep.subr.bf16.mxu0 0
    %101 = vmatpush1.bf16.msra.mxu0 %v81
    %102 = vmatprep.subr.bf16.mxu0 0
    %103 = vmatpush1.bf16.msra.mxu0 %v80
    %104 = vmatprep.subr.bf16.mxu0 0
    %105 = vmatpush2.bf16.msra.mxu0 0
    %106 = vmatprep.subr.bf16.mxu0 0
    %107 = vmatpush2.bf16.msra.mxu0 0
    %108 = vmatprep.subr.bf16.mxu0 0
    %109 = vmatpush2.bf16.msra.mxu0 0
    %110 = vmatprep.subr.bf16.mxu0 0
    %111 = vmatpush2.bf16.msra.mxu0 0
    %112 = vmatprep.subr.bf16.mxu0 0
    %113 = vmatpush2.bf16.msra.mxu0 0
    %114 = vmatprep.subr.bf16.mxu0 0
    %115 = vmatpush2.bf16.msra.mxu0 0
    %116 = vmatprep.subr.bf16.mxu0 0
    %117 = vmatpush2.bf16.msra.mxu0 0
    %118 = vmatprep.subr.bf16.mxu0 0
    %119 = vmatpush2.bf16.msra.mxu0 0
    %120 = vmatprep.mubr.bf16.mxu0 0
    %121 = vmatmul.mubr.bf16.gmra.mxu0 %v86
    %v122 = vpop.f32.mrf.mxu0
    %v123 = vadd.f32 %v71, %v122
    %v124 = vpop.f32.mrf.mxu0
    %v125 = vpop.f32.mrf.mxu0
    %v126 = vadd.f32 %v71, %v125
    %v127 = vpop.f32.mrf.mxu0
    %128 = vdwg.mxu0
    %v129 = vlaneseq
    %v130 = vshrl.u32 %v129, 7
    %v131 = vsub.s32 0, %v130
    %v132 = vrot.slane %v57, %v131
    %v137 = vunpack.c.l.b16 %v32
    %v138 = vunpack.c.l.b16 %v33
    %v139 = vunpack.c.l.b16 %v34
    %v140 = vunpack.c.l.b16 %v35
    %v141 = vpack.c.b16 %v138, %v137
    %v142 = vpack.c.b16 %v140, %v139
    %v146 = vsel %vm84, %v67, 0
    %148 = vmatprep.subr.bf16.mxu0 0
    %149 = vmatpush1.bf16.msra.mxu0 0
    %150 = vmatprep.subr.bf16.mxu0 0
    %151 = vmatpush1.bf16.msra.mxu0 0
    %152 = vmatprep.subr.bf16.mxu0 0
    %153 = vmatpush1.bf16.msra.mxu0 0
    %154 = vmatprep.subr.bf16.mxu0 0
    %155 = vmatpush1.bf16.msra.mxu0 0
    %156 = vmatprep.subr.bf16.mxu0 0
    %157 = vmatpush1.bf16.msra.mxu0 0
    %158 = vmatprep.subr.bf16.mxu0 0
    %159 = vmatpush1.bf16.msra.mxu0 0
    %160 = vmatprep.subr.bf16.mxu0 0
    %161 = vmatpush1.bf16.msra.mxu0 %v142
    %162 = vmatprep.subr.bf16.mxu0 0
    %163 = vmatpush1.bf16.msra.mxu0 %v141
    %164 = vmatprep.subr.bf16.mxu0 0
    %165 = vmatpush2.bf16.msra.mxu0 0
    %166 = vmatprep.subr.bf16.mxu0 0
    %167 = vmatpush2.bf16.msra.mxu0 0
    %168 = vmatprep.subr.bf16.mxu0 0
    %169 = vmatpush2.bf16.msra.mxu0 0
    %170 = vmatprep.subr.bf16.mxu0 0
    %171 = vmatpush2.bf16.msra.mxu0 0
    %172 = vmatprep.subr.bf16.mxu0 0
    %173 = vmatpush2.bf16.msra.mxu0 0
    %174 = vmatprep.subr.bf16.mxu0 0
    %175 = vmatpush2.bf16.msra.mxu0 0
    %176 = vmatprep.subr.bf16.mxu0 0
    %177 = vmatpush2.bf16.msra.mxu0 0
    %178 = vmatprep.subr.bf16.mxu0 0
    %179 = vmatpush2.bf16.msra.mxu0 0
    %180 = vmatprep.mubr.bf16.mxu0 0
    %181 = vmatmul.mubr.bf16.gmra.mxu0 %v146
    %v182 = vpop.f32.mrf.mxu0
    %v183 = vadd.f32 %v132, %v182
    %v184 = vpop.f32.mrf.mxu0
    %v185 = vpop.f32.mrf.mxu0
    %v186 = vadd.f32 %v132, %v185
    %v187 = vpop.f32.mrf.mxu0
    %188 = vdwg.mxu0
    %v189 = vlaneseq
    %v190 = vshrl.u32 %v189, 7
    %v191 = vsub.s32 0, %v190
    %v192 = vrot.slane %v58, %v191
    %v197 = vunpack.c.l.b16 %v36
    %v198 = vunpack.c.l.b16 %v37
    %v199 = vunpack.c.l.b16 %v38
    %v200 = vunpack.c.l.b16 %v39
    %v201 = vpack.c.b16 %v198, %v197
    %v202 = vpack.c.b16 %v200, %v199
    %205 = vmatprep.subr.bf16.mxu0 0
    %206 = vmatpush1.bf16.msra.mxu0 0
    %207 = vmatprep.subr.bf16.mxu0 0
    %208 = vmatpush1.bf16.msra.mxu0 0
    %209 = vmatprep.subr.bf16.mxu0 0
    %210 = vmatpush1.bf16.msra.mxu0 0
    %211 = vmatprep.subr.bf16.mxu0 0
    %212 = vmatpush1.bf16.msra.mxu0 0
    %213 = vmatprep.subr.bf16.mxu0 0
    %214 = vmatpush1.bf16.msra.mxu0 0
    %215 = vmatprep.subr.bf16.mxu0 0
    %216 = vmatpush1.bf16.msra.mxu0 0
    %217 = vmatprep.subr.bf16.mxu0 0
    %218 = vmatpush1.bf16.msra.mxu0 %v202
    %219 = vmatprep.subr.bf16.mxu0 0
    %220 = vmatpush1.bf16.msra.mxu0 %v201
    %221 = vmatprep.subr.bf16.mxu0 0
    %222 = vmatpush2.bf16.msra.mxu0 0
    %223 = vmatprep.subr.bf16.mxu0 0
    %224 = vmatpush2.bf16.msra.mxu0 0
    %225 = vmatprep.subr.bf16.mxu0 0
    %226 = vmatpush2.bf16.msra.mxu0 0
    %227 = vmatprep.subr.bf16.mxu0 0
    %228 = vmatpush2.bf16.msra.mxu0 0
    %229 = vmatprep.subr.bf16.mxu0 0
    %230 = vmatpush2.bf16.msra.mxu0 0
    %231 = vmatprep.subr.bf16.mxu0 0
    %232 = vmatpush2.bf16.msra.mxu0 0
    %233 = vmatprep.subr.bf16.mxu0 0
    %234 = vmatpush2.bf16.msra.mxu0 0
    %235 = vmatprep.subr.bf16.mxu0 0
    %236 = vmatpush2.bf16.msra.mxu0 0
    %237 = vmatprep.mubr.bf16.mxu0 0
    %238 = vmatmul.mubr.bf16.gmra.mxu0 %v146
    %v239 = vpop.f32.mrf.mxu0
    %v240 = vadd.f32 %v192, %v239
    %v241 = vpop.f32.mrf.mxu0
    %v242 = vpop.f32.mrf.mxu0
    %v243 = vadd.f32 %v192, %v242
    %v244 = vpop.f32.mrf.mxu0
    %245 = vdwg.mxu0
    %v246 = vpack.c.bf16 %v123, %v123
    %v247 = vpack.c.bf16 %v126, %v126
    %v248 = vpack.c.bf16 %v183, %v183
    %v249 = vpack.c.bf16 %v186, %v186
    %v250 = vpack.c.bf16 %v240, %v240
    %v251 = vpack.c.bf16 %v243, %v243
    %vm252 = vcmask 64512
    %v254 = vsel %vm252, %v246, 0
    %v257 = vsel %vm252, %v248, 0
    %259 = vmatprep.subr.bf16.mxu0 0
    %260 = vmatpush1.bf16.xpose.msra.mxu0 0
    %261 = vmatprep.subr.bf16.mxu0 0
    %262 = vmatpush1.bf16.xpose.msra.mxu0 0
    %263 = vmatprep.subr.bf16.mxu0 0
    %264 = vmatpush1.bf16.xpose.msra.mxu0 0
    %265 = vmatprep.subr.bf16.mxu0 0
    %266 = vmatpush1.bf16.xpose.msra.mxu0 0
    %267 = vmatprep.subr.bf16.mxu0 0
    %268 = vmatpush1.bf16.xpose.msra.mxu0 0
    %269 = vmatprep.subr.bf16.mxu0 0
    %270 = vmatpush1.bf16.xpose.msra.mxu0 0
    %271 = vmatprep.subr.bf16.mxu0 0
    %272 = vmatpush1.bf16.xpose.msra.mxu0 0
    %273 = vmatprep.subr.bf16.mxu0 0
    %274 = vmatpush1.bf16.xpose.msra.mxu0 %v257
    %275 = vmatprep.subr.bf16.mxu0 0
    %276 = vmatpush2.bf16.xpose.msra.mxu0 0
    %277 = vmatprep.subr.bf16.mxu0 0
    %278 = vmatpush2.bf16.xpose.msra.mxu0 0
    %279 = vmatprep.subr.bf16.mxu0 0
    %280 = vmatpush2.bf16.xpose.msra.mxu0 0
    %281 = vmatprep.subr.bf16.mxu0 0
    %282 = vmatpush2.bf16.xpose.msra.mxu0 0
    %283 = vmatprep.subr.bf16.mxu0 0
    %284 = vmatpush2.bf16.xpose.msra.mxu0 0
    %285 = vmatprep.subr.bf16.mxu0 0
    %286 = vmatpush2.bf16.xpose.msra.mxu0 0
    %287 = vmatprep.subr.bf16.mxu0 0
    %288 = vmatpush2.bf16.xpose.msra.mxu0 0
    %289 = vmatprep.subr.bf16.mxu0 0
    %290 = vmatpush2.bf16.xpose.msra.mxu0 0
    %291 = vmatprep.mubr.bf16.mxu0 0
    %292 = vmatmul.mubr.bf16.gmra.mxu0 %v254
    %v293 = vpop.f32.mrf.mxu0
    %v294 = vadd.f32 0.0, %v293
    %v295 = vpop.f32.mrf.mxu0
    %v296 = vpop.f32.mrf.mxu0
    %v297 = vpop.f32.mrf.mxu0
    %298 = vdwg.mxu0
    %v300 = vsel %vm252, %v247, 0
    %v303 = vsel %vm252, %v249, 0
    %305 = vmatprep.subr.bf16.mxu0 0
    %306 = vmatpush1.bf16.xpose.msra.mxu0 0
    %307 = vmatprep.subr.bf16.mxu0 0
    %308 = vmatpush1.bf16.xpose.msra.mxu0 0
    %309 = vmatprep.subr.bf16.mxu0 0
    %310 = vmatpush1.bf16.xpose.msra.mxu0 0
    %311 = vmatprep.subr.bf16.mxu0 0
    %312 = vmatpush1.bf16.xpose.msra.mxu0 0
    %313 = vmatprep.subr.bf16.mxu0 0
    %314 = vmatpush1.bf16.xpose.msra.mxu0 0
    %315 = vmatprep.subr.bf16.mxu0 0
    %316 = vmatpush1.bf16.xpose.msra.mxu0 0
    %317 = vmatprep.subr.bf16.mxu0 0
    %318 = vmatpush1.bf16.xpose.msra.mxu0 0
    %319 = vmatprep.subr.bf16.mxu0 0
    %320 = vmatpush1.bf16.xpose.msra.mxu0 %v303
    %321 = vmatprep.subr.bf16.mxu0 0
    %322 = vmatpush2.bf16.xpose.msra.mxu0 0
    %323 = vmatprep.subr.bf16.mxu0 0
    %324 = vmatpush2.bf16.xpose.msra.mxu0 0
    %325 = vmatprep.subr.bf16.mxu0 0
    %326 = vmatpush2.bf16.xpose.msra.mxu0 0
    %327 = vmatprep.subr.bf16.mxu0 0
    %328 = vmatpush2.bf16.xpose.msra.mxu0 0
    %329 = vmatprep.subr.bf16.mxu0 0
    %330 = vmatpush2.bf16.xpose.msra.mxu0 0
    %331 = vmatprep.subr.bf16.mxu0 0
    %332 = vmatpush2.bf16.xpose.msra.mxu0 0
    %333 = vmatprep.subr.bf16.mxu0 0
    %334 = vmatpush2.bf16.xpose.msra.mxu0 0
    %335 = vmatprep.subr.bf16.mxu0 0
    %336 = vmatpush2.bf16.xpose.msra.mxu0 0
    %337 = vmatprep.mubr.bf16.mxu0 0
    %338 = vmatmul.mubr.bf16.gmra.mxu0 %v300
    %v339 = vpop.f32.mrf.mxu0
    %v340 = vadd.f32 0.0, %v339
    %v341 = vpop.f32.mrf.mxu0
    %v342 = vpop.f32.mrf.mxu0
    %v343 = vpop.f32.mrf.mxu0
    %344 = vdwg.mxu0
    %v345 = vmul.f32 %v294, 0.35355338
    %v346 = vmul.f32 %v340, 0.35355338
    %v347 = vsel %vm252, %v345, -inf
    %348 = vmax.xlane.f32.xlu0 %v347
    %v349 = vpop.xlane.xlu0 %348
    %v350 = vsel %vm252, %v346, -inf
    %351 = vmax.xlane.f32.xlu0 %v350
    %v352 = vpop.xlane.xlu0 %351
    %v353 = vsub.f32 %v345, %v349
    %v354 = vsub.f32 %v346, %v352
    %v355 = vmul.f32 %v353, 1.442695
    %v356 = vpow.pop %v355
    %v357 = vmul.f32 %v354, 1.442695
    %v358 = vpow.pop %v357
    %v359 = vsel %vm252, %v356, 0.0
    %360 = vadd.xlane.f32.xlu0 %v359
    %v361 = vpop.xlane.xlu0 %360
    %v362 = vsel %vm252, %v358, 0.0
    %363 = vadd.xlane.f32.xlu0 %v362
    %v364 = vpop.xlane.xlu0 %363
    %v365 = vrcp.pop %v361
    %v366 = vrcp.pop %v364
    %v367 = vmul.f32 %v356, %v365
    %v368 = vmul.f32 %v358, %v366
    %v369 = vpack.c.bf16 %v367, %v367
    %v370 = vpack.c.bf16 %v368, %v368
    %v372 = vsel %vm252, %v369, 0
    %vm374 = vcmask 1043456
    %v376 = vsel %vm374, %v250, 0
    %378 = vmatprep.subr.bf16.mxu0 0
    %379 = vmatpush1.bf16.msra.mxu0 0
    %380 = vmatprep.subr.bf16.mxu0 0
    %381 = vmatpush1.bf16.msra.mxu0 0
    %382 = vmatprep.subr.bf16.mxu0 0
    %383 = vmatpush1.bf16.msra.mxu0 0
    %384 = vmatprep.subr.bf16.mxu0 0
    %385 = vmatpush1.bf16.msra.mxu0 0
    %386 = vmatprep.subr.bf16.mxu0 0
    %387 = vmatpush1.bf16.msra.mxu0 0
    %388 = vmatprep.subr.bf16.mxu0 0
    %389 = vmatpush1.bf16.msra.mxu0 0
    %390 = vmatprep.subr.bf16.mxu0 0
    %391 = vmatpush1.bf16.msra.mxu0 0
    %392 = vmatprep.subr.bf16.mxu0 0
    %393 = vmatpush1.bf16.msra.mxu0 %v376
    %394 = vmatprep.subr.bf16.mxu0 0
    %395 = vmatpush2.bf16.msra.mxu0 0
    %396 = vmatprep.subr.bf16.mxu0 0
    %397 = vmatpush2.bf16.msra.mxu0 0
    %398 = vmatprep.subr.bf16.mxu0 0
    %399 = vmatpush2.bf16.msra.mxu0 0
    %400 = vmatprep.subr.bf16.mxu0 0
    %401 = vmatpush2.bf16.msra.mxu0 0
    %402 = vmatprep.subr.bf16.mxu0 0
    %403 = vmatpush2.bf16.msra.mxu0 0
    %404 = vmatprep.subr.bf16.mxu0 0
    %405 = vmatpush2.bf16.msra.mxu0 0
    %406 = vmatprep.subr.bf16.mxu0 0
    %407 = vmatpush2.bf16.msra.mxu0 0
    %408 = vmatprep.subr.bf16.mxu0 0
    %409 = vmatpush2.bf16.msra.mxu0 0
    %410 = vmatprep.mubr.bf16.mxu0 0
    %411 = vmatmul.mubr.bf16.gmra.mxu0 %v372
    %v412 = vpop.f32.mrf.mxu0
    %v413 = vadd.f32 0.0, %v412
    %v414 = vpop.f32.mrf.mxu0
    %v415 = vpop.f32.mrf.mxu0
    %v416 = vpop.f32.mrf.mxu0
    %417 = vdwg.mxu0
    %v419 = vsel %vm252, %v370, 0
    %v422 = vsel %vm374, %v251, 0
    %424 = vmatprep.subr.bf16.mxu0 0
    %425 = vmatpush1.bf16.msra.mxu0 0
    %426 = vmatprep.subr.bf16.mxu0 0
    %427 = vmatpush1.bf16.msra.mxu0 0
    %428 = vmatprep.subr.bf16.mxu0 0
    %429 = vmatpush1.bf16.msra.mxu0 0
    %430 = vmatprep.subr.bf16.mxu0 0
    %431 = vmatpush1.bf16.msra.mxu0 0
    %432 = vmatprep.subr.bf16.mxu0 0
    %433 = vmatpush1.bf16.msra.mxu0 0
    %434 = vmatprep.subr.bf16.mxu0 0
    %435 = vmatpush1.bf16.msra.mxu0 0
    %436 = vmatprep.subr.bf16.mxu0 0
    %437 = vmatpush1.bf16.msra.mxu0 0
    %438 = vmatprep.subr.bf16.mxu0 0
    %439 = vmatpush1.bf16.msra.mxu0 %v422
    %440 = vmatprep.subr.bf16.mxu0 0
    %441 = vmatpush2.bf16.msra.mxu0 0
    %442 = vmatprep.subr.bf16.mxu0 0
    %443 = vmatpush2.bf16.msra.mxu0 0
    %444 = vmatprep.subr.bf16.mxu0 0
    %445 = vmatpush2.bf16.msra.mxu0 0
    %446 = vmatprep.subr.bf16.mxu0 0
    %447 = vmatpush2.bf16.msra.mxu0 0
    %448 = vmatprep.subr.bf16.mxu0 0
    %449 = vmatpush2.bf16.msra.mxu0 0
    %450 = vmatprep.subr.bf16.mxu0 0
    %451 = vmatpush2.bf16.msra.mxu0 0
    %452 = vmatprep.subr.bf16.mxu0 0
    %453 = vmatpush2.bf16.msra.mxu0 0
    %454 = vmatprep.subr.bf16.mxu0 0
    %455 = vmatpush2.bf16.msra.mxu0 0
    %456 = vmatprep.mubr.bf16.mxu0 0
    %457 = vmatmul.mubr.bf16.gmra.mxu0 %v419
    %v458 = vpop.f32.mrf.mxu0
    %v459 = vadd.f32 0.0, %v458
    %v460 = vpop.f32.mrf.mxu0
    %v461 = vpop.f32.mrf.mxu0
    %v462 = vpop.f32.mrf.mxu0
    %463 = vdwg.mxu0
    %465 = vrot.lane.b32.xlu0 %v246, 120
    %v466 = vpop.permute.xlu0 %465
    %468 = vrot.lane.b32.xlu0 %v248, 120
    %v469 = vpop.permute.xlu0 %468
    %v471 = vsel %vm252, %v466, 0
    %v474 = vsel %vm252, %v469, 0
    %476 = vmatprep.subr.bf16.mxu0 0
    %477 = vmatpush1.bf16.xpose.msra.mxu0 0
    %478 = vmatprep.subr.bf16.mxu0 0
    %479 = vmatpush1.bf16.xpose.msra.mxu0 0
    %480 = vmatprep.subr.bf16.mxu0 0
    %481 = vmatpush1.bf16.xpose.msra.mxu0 0
    %482 = vmatprep.subr.bf16.mxu0 0
    %483 = vmatpush1.bf16.xpose.msra.mxu0 0
    %484 = vmatprep.subr.bf16.mxu0 0
    %485 = vmatpush1.bf16.xpose.msra.mxu0 0
    %486 = vmatprep.subr.bf16.mxu0 0
    %487 = vmatpush1.bf16.xpose.msra.mxu0 0
    %488 = vmatprep.subr.bf16.mxu0 0
    %489 = vmatpush1.bf16.xpose.msra.mxu0 0
    %490 = vmatprep.subr.bf16.mxu0 0
    %491 = vmatpush1.bf16.xpose.msra.mxu0 %v474
    %492 = vmatprep.subr.bf16.mxu0 0
    %493 = vmatpush2.bf16.xpose.msra.mxu0 0
    %494 = vmatprep.subr.bf16.mxu0 0
    %495 = vmatpush2.bf16.xpose.msra.mxu0 0
    %496 = vmatprep.subr.bf16.mxu0 0
    %497 = vmatpush2.bf16.xpose.msra.mxu0 0
    %498 = vmatprep.subr.bf16.mxu0 0
    %499 = vmatpush2.bf16.xpose.msra.mxu0 0
    %500 = vmatprep.subr.bf16.mxu0 0
    %501 = vmatpush2.bf16.xpose.msra.mxu0 0
    %502 = vmatprep.subr.bf16.mxu0 0
    %503 = vmatpush2.bf16.xpose.msra.mxu0 0
    %504 = vmatprep.subr.bf16.mxu0 0
    %505 = vmatpush2.bf16.xpose.msra.mxu0 0
    %506 = vmatprep.subr.bf16.mxu0 0
    %507 = vmatpush2.bf16.xpose.msra.mxu0 0
    %508 = vmatprep.mubr.bf16.mxu0 0
    %509 = vmatmul.mubr.bf16.gmra.mxu0 %v471
    %v510 = vpop.f32.mrf.mxu0
    %v511 = vadd.f32 0.0, %v510
    %v512 = vpop.f32.mrf.mxu0
    %v513 = vpop.f32.mrf.mxu0
    %v514 = vpop.f32.mrf.mxu0
    %515 = vdwg.mxu0
    %517 = vrot.lane.b32.xlu0 %v247, 120
    %v518 = vpop.permute.xlu0 %517
    %520 = vrot.lane.b32.xlu0 %v249, 120
    %v521 = vpop.permute.xlu0 %520
    %v523 = vsel %vm252, %v518, 0
    %v526 = vsel %vm252, %v521, 0
    %528 = vmatprep.subr.bf16.mxu0 0
    %529 = vmatpush1.bf16.xpose.msra.mxu0 0
    %530 = vmatprep.subr.bf16.mxu0 0
    %531 = vmatpush1.bf16.xpose.msra.mxu0 0
    %532 = vmatprep.subr.bf16.mxu0 0
    %533 = vmatpush1.bf16.xpose.msra.mxu0 0
    %534 = vmatprep.subr.bf16.mxu0 0
    %535 = vmatpush1.bf16.xpose.msra.mxu0 0
    %536 = vmatprep.subr.bf16.mxu0 0
    %537 = vmatpush1.bf16.xpose.msra.mxu0 0
    %538 = vmatprep.subr.bf16.mxu0 0
    %539 = vmatpush1.bf16.xpose.msra.mxu0 0
    %540 = vmatprep.subr.bf16.mxu0 0
    %541 = vmatpush1.bf16.xpose.msra.mxu0 0
    %542 = vmatprep.subr.bf16.mxu0 0
    %543 = vmatpush1.bf16.xpose.msra.mxu0 %v526
    %544 = vmatprep.subr.bf16.mxu0 0
    %545 = vmatpush2.bf16.xpose.msra.mxu0 0
    %546 = vmatprep.subr.bf16.mxu0 0
    %547 = vmatpush2.bf16.xpose.msra.mxu0 0
    %548 = vmatprep.subr.bf16.mxu0 0
    %549 = vmatpush2.bf16.xpose.msra.mxu0 0
    %550 = vmatprep.subr.bf16.mxu0 0
    %551 = vmatpush2.bf16.xpose.msra.mxu0 0
    %552 = vmatprep.subr.bf16.mxu0 0
    %553 = vmatpush2.bf16.xpose.msra.mxu0 0
    %554 = vmatprep.subr.bf16.mxu0 0
    %555 = vmatpush2.bf16.xpose.msra.mxu0 0
    %556 = vmatprep.subr.bf16.mxu0 0
    %557 = vmatpush2.bf16.xpose.msra.mxu0 0
    %558 = vmatprep.subr.bf16.mxu0 0
    %559 = vmatpush2.bf16.xpose.msra.mxu0 0
    %560 = vmatprep.mubr.bf16.mxu0 0
    %561 = vmatmul.mubr.bf16.gmra.mxu0 %v523
    %v562 = vpop.f32.mrf.mxu0
    %v563 = vadd.f32 0.0, %v562
    %v564 = vpop.f32.mrf.mxu0
    %v565 = vpop.f32.mrf.mxu0
    %v566 = vpop.f32.mrf.mxu0
    %567 = vdwg.mxu0
    %v568 = vmul.f32 %v511, 0.35355338
    %v569 = vmul.f32 %v563, 0.35355338
    %v570 = vsel %vm252, %v568, -inf
    %571 = vmax.xlane.f32.xlu0 %v570
    %v572 = vpop.xlane.xlu0 %571
    %v573 = vsel %vm252, %v569, -inf
    %574 = vmax.xlane.f32.xlu0 %v573
    %v575 = vpop.xlane.xlu0 %574
    %v576 = vsub.f32 %v568, %v572
    %v577 = vsub.f32 %v569, %v575
    %v578 = vmul.f32 %v576, 1.442695
    %v579 = vpow.pop %v578
    %v580 = vmul.f32 %v577, 1.442695
    %v581 = vpow.pop %v580
    %v582 = vsel %vm252, %v579, 0.0
    %583 = vadd.xlane.f32.xlu0 %v582
    %v584 = vpop.xlane.xlu0 %583
    %v585 = vsel %vm252, %v581, 0.0
    %586 = vadd.xlane.f32.xlu0 %v585
    %v587 = vpop.xlane.xlu0 %586
    %v588 = vrcp.pop %v584
    %v589 = vrcp.pop %v587
    %v590 = vmul.f32 %v579, %v588
    %v591 = vmul.f32 %v581, %v589
    %v592 = vpack.c.bf16 %v590, %v590
    %v593 = vpack.c.bf16 %v591, %v591
    %595 = vrot.lane.b32.xlu0 %v250, 120
    %v596 = vpop.permute.xlu0 %595
    %v598 = vsel %vm252, %v592, 0
    %v601 = vsel %vm374, %v596, 0
    %603 = vmatprep.subr.bf16.mxu0 0
    %604 = vmatpush1.bf16.msra.mxu0 0
    %605 = vmatprep.subr.bf16.mxu0 0
    %606 = vmatpush1.bf16.msra.mxu0 0
    %607 = vmatprep.subr.bf16.mxu0 0
    %608 = vmatpush1.bf16.msra.mxu0 0
    %609 = vmatprep.subr.bf16.mxu0 0
    %610 = vmatpush1.bf16.msra.mxu0 0
    %611 = vmatprep.subr.bf16.mxu0 0
    %612 = vmatpush1.bf16.msra.mxu0 0
    %613 = vmatprep.subr.bf16.mxu0 0
    %614 = vmatpush1.bf16.msra.mxu0 0
    %615 = vmatprep.subr.bf16.mxu0 0
    %616 = vmatpush1.bf16.msra.mxu0 0
    %617 = vmatprep.subr.bf16.mxu0 0
    %618 = vmatpush1.bf16.msra.mxu0 %v601
    %619 = vmatprep.subr.bf16.mxu0 0
    %620 = vmatpush2.bf16.msra.mxu0 0
    %621 = vmatprep.subr.bf16.mxu0 0
    %622 = vmatpush2.bf16.msra.mxu0 0
    %623 = vmatprep.subr.bf16.mxu0 0
    %624 = vmatpush2.bf16.msra.mxu0 0
    %625 = vmatprep.subr.bf16.mxu0 0
    %626 = vmatpush2.bf16.msra.mxu0 0
    %627 = vmatprep.subr.bf16.mxu0 0
    %628 = vmatpush2.bf16.msra.mxu0 0
    %629 = vmatprep.subr.bf16.mxu0 0
    %630 = vmatpush2.bf16.msra.mxu0 0
    %631 = vmatprep.subr.bf16.mxu0 0
    %632 = vmatpush2.bf16.msra.mxu0 0
    %633 = vmatprep.subr.bf16.mxu0 0
    %634 = vmatpush2.bf16.msra.mxu0 0
    %635 = vmatprep.mubr.bf16.mxu0 0
    %636 = vmatmul.mubr.bf16.gmra.mxu0 %v598
    %v637 = vpop.f32.mrf.mxu0
    %v638 = vadd.f32 0.0, %v637
    %v639 = vpop.f32.mrf.mxu0
    %v640 = vpop.f32.mrf.mxu0
    %v641 = vpop.f32.mrf.mxu0
    %642 = vdwg.mxu0
    %644 = vrot.lane.b32.xlu0 %v251, 120
    %v645 = vpop.permute.xlu0 %644
    %v647 = vsel %vm252, %v593, 0
    %v650 = vsel %vm374, %v645, 0
    %652 = vmatprep.subr.bf16.mxu0 0
    %653 = vmatpush1.bf16.msra.mxu0 0
    %654 = vmatprep.subr.bf16.mxu0 0
    %655 = vmatpush1.bf16.msra.mxu0 0
    %656 = vmatprep.subr.bf16.mxu0 0
    %657 = vmatpush1.bf16.msra.mxu0 0
    %658 = vmatprep.subr.bf16.mxu0 0
    %659 = vmatpush1.bf16.msra.mxu0 0
    %660 = vmatprep.subr.bf16.mxu0 0
    %661 = vmatpush1.bf16.msra.mxu0 0
    %662 = vmatprep.subr.bf16.mxu0 0
    %663 = vmatpush1.bf16.msra.mxu0 0
    %664 = vmatprep.subr.bf16.mxu0 0
    %665 = vmatpush1.bf16.msra.mxu0 0
    %666 = vmatprep.subr.bf16.mxu0 0
    %667 = vmatpush1.bf16.msra.mxu0 %v650
    %668 = vmatprep.subr.bf16.mxu0 0
    %669 = vmatpush2.bf16.msra.mxu0 0
    %670 = vmatprep.subr.bf16.mxu0 0
    %671 = vmatpush2.bf16.msra.mxu0 0
    %672 = vmatprep.subr.bf16.mxu0 0
    %673 = vmatpush2.bf16.msra.mxu0 0
    %674 = vmatprep.subr.bf16.mxu0 0
    %675 = vmatpush2.bf16.msra.mxu0 0
    %676 = vmatprep.subr.bf16.mxu0 0
    %677 = vmatpush2.bf16.msra.mxu0 0
    %678 = vmatprep.subr.bf16.mxu0 0
    %679 = vmatpush2.bf16.msra.mxu0 0
    %680 = vmatprep.subr.bf16.mxu0 0
    %681 = vmatpush2.bf16.msra.mxu0 0
    %682 = vmatprep.subr.bf16.mxu0 0
    %683 = vmatpush2.bf16.msra.mxu0 0
    %684 = vmatprep.mubr.bf16.mxu0 0
    %685 = vmatmul.mubr.bf16.gmra.mxu0 %v647
    %v686 = vpop.f32.mrf.mxu0
    %v687 = vadd.f32 0.0, %v686
    %v688 = vpop.f32.mrf.mxu0
    %v689 = vpop.f32.mrf.mxu0
    %v690 = vpop.f32.mrf.mxu0
    %691 = vdwg.mxu0
    %692 = vrot.lane.b32.xlu0 %v246, 112
    %v693 = vpop.permute.xlu0 %692
    %694 = vrot.lane.b32.xlu0 %v248, 112
    %v695 = vpop.permute.xlu0 %694
    %v697 = vsel %vm252, %v693, 0
    %v700 = vsel %vm252, %v695, 0
    %702 = vmatprep.subr.bf16.mxu0 0
    %703 = vmatpush1.bf16.xpose.msra.mxu0 0
    %704 = vmatprep.subr.bf16.mxu0 0
    %705 = vmatpush1.bf16.xpose.msra.mxu0 0
    %706 = vmatprep.subr.bf16.mxu0 0
    %707 = vmatpush1.bf16.xpose.msra.mxu0 0
    %708 = vmatprep.subr.bf16.mxu0 0
    %709 = vmatpush1.bf16.xpose.msra.mxu0 0
    %710 = vmatprep.subr.bf16.mxu0 0
    %711 = vmatpush1.bf16.xpose.msra.mxu0 0
    %712 = vmatprep.subr.bf16.mxu0 0
    %713 = vmatpush1.bf16.xpose.msra.mxu0 0
    %714 = vmatprep.subr.bf16.mxu0 0
    %715 = vmatpush1.bf16.xpose.msra.mxu0 0
    %716 = vmatprep.subr.bf16.mxu0 0
    %717 = vmatpush1.bf16.xpose.msra.mxu0 %v700
    %718 = vmatprep.subr.bf16.mxu0 0
    %719 = vmatpush2.bf16.xpose.msra.mxu0 0
    %720 = vmatprep.subr.bf16.mxu0 0
    %721 = vmatpush2.bf16.xpose.msra.mxu0 0
    %722 = vmatprep.subr.bf16.mxu0 0
    %723 = vmatpush2.bf16.xpose.msra.mxu0 0
    %724 = vmatprep.subr.bf16.mxu0 0
    %725 = vmatpush2.bf16.xpose.msra.mxu0 0
    %726 = vmatprep.subr.bf16.mxu0 0
    %727 = vmatpush2.bf16.xpose.msra.mxu0 0
    %728 = vmatprep.subr.bf16.mxu0 0
    %729 = vmatpush2.bf16.xpose.msra.mxu0 0
    %730 = vmatprep.subr.bf16.mxu0 0
    %731 = vmatpush2.bf16.xpose.msra.mxu0 0
    %732 = vmatprep.subr.bf16.mxu0 0
    %733 = vmatpush2.bf16.xpose.msra.mxu0 0
    %734 = vmatprep.mubr.bf16.mxu0 0
    %735 = vmatmul.mubr.bf16.gmra.mxu0 %v697
    %v736 = vpop.f32.mrf.mxu0
    %v737 = vadd.f32 0.0, %v736
    %v738 = vpop.f32.mrf.mxu0
    %v739 = vpop.f32.mrf.mxu0
    %v740 = vpop.f32.mrf.mxu0
    %741 = vdwg.mxu0
    %742 = vrot.lane.b32.xlu0 %v247, 112
    %v743 = vpop.permute.xlu0 %742
    %744 = vrot.lane.b32.xlu0 %v249, 112
    %v745 = vpop.permute.xlu0 %744
    %v747 = vsel %vm252, %v743, 0
    %v750 = vsel %vm252, %v745, 0
    %752 = vmatprep.subr.bf16.mxu0 0
    %753 = vmatpush1.bf16.xpose.msra.mxu0 0
    %754 = vmatprep.subr.bf16.mxu0 0
    %755 = vmatpush1.bf16.xpose.msra.mxu0 0
    %756 = vmatprep.subr.bf16.mxu0 0
    %757 = vmatpush1.bf16.xpose.msra.mxu0 0
    %758 = vmatprep.subr.bf16.mxu0 0
    %759 = vmatpush1.bf16.xpose.msra.mxu0 0
    %760 = vmatprep.subr.bf16.mxu0 0
    %761 = vmatpush1.bf16.xpose.msra.mxu0 0
    %762 = vmatprep.subr.bf16.mxu0 0
    %763 = vmatpush1.bf16.xpose.msra.mxu0 0
    %764 = vmatprep.subr.bf16.mxu0 0
    %765 = vmatpush1.bf16.xpose.msra.mxu0 0
    %766 = vmatprep.subr.bf16.mxu0 0
    %767 = vmatpush1.bf16.xpose.msra.mxu0 %v750
    %768 = vmatprep.subr.bf16.mxu0 0
    %769 = vmatpush2.bf16.xpose.msra.mxu0 0
    %770 = vmatprep.subr.bf16.mxu0 0
    %771 = vmatpush2.bf16.xpose.msra.mxu0 0
    %772 = vmatprep.subr.bf16.mxu0 0
    %773 = vmatpush2.bf16.xpose.msra.mxu0 0
    %774 = vmatprep.subr.bf16.mxu0 0
    %775 = vmatpush2.bf16.xpose.msra.mxu0 0
    %776 = vmatprep.subr.bf16.mxu0 0
    %777 = vmatpush2.bf16.xpose.msra.mxu0 0
    %778 = vmatprep.subr.bf16.mxu0 0
    %779 = vmatpush2.bf16.xpose.msra.mxu0 0
    %780 = vmatprep.subr.bf16.mxu0 0
    %781 = vmatpush2.bf16.xpose.msra.mxu0 0
    %782 = vmatprep.subr.bf16.mxu0 0
    %783 = vmatpush2.bf16.xpose.msra.mxu0 0
    %784 = vmatprep.mubr.bf16.mxu0 0
    %785 = vmatmul.mubr.bf16.gmra.mxu0 %v747
    %v786 = vpop.f32.mrf.mxu0
    %v787 = vadd.f32 0.0, %v786
    %v788 = vpop.f32.mrf.mxu0
    %v789 = vpop.f32.mrf.mxu0
    %v790 = vpop.f32.mrf.mxu0
    %791 = vdwg.mxu0
    %v792 = vmul.f32 %v737, 0.35355338
    %v793 = vmul.f32 %v787, 0.35355338
    %v794 = vsel %vm252, %v792, -inf
    %795 = vmax.xlane.f32.xlu0 %v794
    %v796 = vpop.xlane.xlu0 %795
    %v797 = vsel %vm252, %v793, -inf
    %798 = vmax.xlane.f32.xlu0 %v797
    %v799 = vpop.xlane.xlu0 %798
    %v800 = vsub.f32 %v792, %v796
    %v801 = vsub.f32 %v793, %v799
    %v802 = vmul.f32 %v800, 1.442695
    %v803 = vpow.pop %v802
    %v804 = vmul.f32 %v801, 1.442695
    %v805 = vpow.pop %v804
    %v806 = vsel %vm252, %v803, 0.0
    %807 = vadd.xlane.f32.xlu0 %v806
    %v808 = vpop.xlane.xlu0 %807
    %v809 = vsel %vm252, %v805, 0.0
    %810 = vadd.xlane.f32.xlu0 %v809
    %v811 = vpop.xlane.xlu0 %810
    %v812 = vrcp.pop %v808
    %v813 = vrcp.pop %v811
    %v814 = vmul.f32 %v803, %v812
    %v815 = vmul.f32 %v805, %v813
    %v816 = vpack.c.bf16 %v814, %v814
    %v817 = vpack.c.bf16 %v815, %v815
    %818 = vrot.lane.b32.xlu0 %v250, 112
    %v819 = vpop.permute.xlu0 %818
    %v821 = vsel %vm252, %v816, 0
    %v824 = vsel %vm374, %v819, 0
    %826 = vmatprep.subr.bf16.mxu0 0
    %827 = vmatpush1.bf16.msra.mxu0 0
    %828 = vmatprep.subr.bf16.mxu0 0
    %829 = vmatpush1.bf16.msra.mxu0 0
    %830 = vmatprep.subr.bf16.mxu0 0
    %831 = vmatpush1.bf16.msra.mxu0 0
    %832 = vmatprep.subr.bf16.mxu0 0
    %833 = vmatpush1.bf16.msra.mxu0 0
    %834 = vmatprep.subr.bf16.mxu0 0
    %835 = vmatpush1.bf16.msra.mxu0 0
    %836 = vmatprep.subr.bf16.mxu0 0
    %837 = vmatpush1.bf16.msra.mxu0 0
    %838 = vmatprep.subr.bf16.mxu0 0
    %839 = vmatpush1.bf16.msra.mxu0 0
    %840 = vmatprep.subr.bf16.mxu0 0
    %841 = vmatpush1.bf16.msra.mxu0 %v824
    %842 = vmatprep.subr.bf16.mxu0 0
    %843 = vmatpush2.bf16.msra.mxu0 0
    %844 = vmatprep.subr.bf16.mxu0 0
    %845 = vmatpush2.bf16.msra.mxu0 0
    %846 = vmatprep.subr.bf16.mxu0 0
    %847 = vmatpush2.bf16.msra.mxu0 0
    %848 = vmatprep.subr.bf16.mxu0 0
    %849 = vmatpush2.bf16.msra.mxu0 0
    %850 = vmatprep.subr.bf16.mxu0 0
    %851 = vmatpush2.bf16.msra.mxu0 0
    %852 = vmatprep.subr.bf16.mxu0 0
    %853 = vmatpush2.bf16.msra.mxu0 0
    %854 = vmatprep.subr.bf16.mxu0 0
    %855 = vmatpush2.bf16.msra.mxu0 0
    %856 = vmatprep.subr.bf16.mxu0 0
    %857 = vmatpush2.bf16.msra.mxu0 0
    %858 = vmatprep.mubr.bf16.mxu0 0
    %859 = vmatmul.mubr.bf16.gmra.mxu0 %v821
    %v860 = vpop.f32.mrf.mxu0
    %v861 = vadd.f32 0.0, %v860
    %v862 = vpop.f32.mrf.mxu0
    %v863 = vpop.f32.mrf.mxu0
    %v864 = vpop.f32.mrf.mxu0
    %865 = vdwg.mxu0
    %866 = vrot.lane.b32.xlu0 %v251, 112
    %v867 = vpop.permute.xlu0 %866
    %v869 = vsel %vm252, %v817, 0
    %v872 = vsel %vm374, %v867, 0
    %874 = vmatprep.subr.bf16.mxu0 0
    %875 = vmatpush1.bf16.msra.mxu0 0
    %876 = vmatprep.subr.bf16.mxu0 0
    %877 = vmatpush1.bf16.msra.mxu0 0
    %878 = vmatprep.subr.bf16.mxu0 0
    %879 = vmatpush1.bf16.msra.mxu0 0
    %880 = vmatprep.subr.bf16.mxu0 0
    %881 = vmatpush1.bf16.msra.mxu0 0
    %882 = vmatprep.subr.bf16.mxu0 0
    %883 = vmatpush1.bf16.msra.mxu0 0
    %884 = vmatprep.subr.bf16.mxu0 0
    %885 = vmatpush1.bf16.msra.mxu0 0
    %886 = vmatprep.subr.bf16.mxu0 0
    %887 = vmatpush1.bf16.msra.mxu0 0
    %888 = vmatprep.subr.bf16.mxu0 0
    %889 = vmatpush1.bf16.msra.mxu0 %v872
    %890 = vmatprep.subr.bf16.mxu0 0
    %891 = vmatpush2.bf16.msra.mxu0 0
    %892 = vmatprep.subr.bf16.mxu0 0
    %893 = vmatpush2.bf16.msra.mxu0 0
    %894 = vmatprep.subr.bf16.mxu0 0
    %895 = vmatpush2.bf16.msra.mxu0 0
    %896 = vmatprep.subr.bf16.mxu0 0
    %897 = vmatpush2.bf16.msra.mxu0 0
    %898 = vmatprep.subr.bf16.mxu0 0
    %899 = vmatpush2.bf16.msra.mxu0 0
    %900 = vmatprep.subr.bf16.mxu0 0
    %901 = vmatpush2.bf16.msra.mxu0 0
    %902 = vmatprep.subr.bf16.mxu0 0
    %903 = vmatpush2.bf16.msra.mxu0 0
    %904 = vmatprep.subr.bf16.mxu0 0
    %905 = vmatpush2.bf16.msra.mxu0 0
    %906 = vmatprep.mubr.bf16.mxu0 0
    %907 = vmatmul.mubr.bf16.gmra.mxu0 %v869
    %v908 = vpop.f32.mrf.mxu0
    %v909 = vadd.f32 0.0, %v908
    %v910 = vpop.f32.mrf.mxu0
    %v911 = vpop.f32.mrf.mxu0
    %v912 = vpop.f32.mrf.mxu0
    %913 = vdwg.mxu0
    %914 = vrot.lane.b32.xlu0 %v246, 104
    %v915 = vpop.permute.xlu0 %914
    %916 = vrot.lane.b32.xlu0 %v248, 104
    %v917 = vpop.permute.xlu0 %916
    %v919 = vsel %vm252, %v915, 0
    %v922 = vsel %vm252, %v917, 0
    %924 = vmatprep.subr.bf16.mxu0 0
    %925 = vmatpush1.bf16.xpose.msra.mxu0 0
    %926 = vmatprep.subr.bf16.mxu0 0
    %927 = vmatpush1.bf16.xpose.msra.mxu0 0
    %928 = vmatprep.subr.bf16.mxu0 0
    %929 = vmatpush1.bf16.xpose.msra.mxu0 0
    %930 = vmatprep.subr.bf16.mxu0 0
    %931 = vmatpush1.bf16.xpose.msra.mxu0 0
    %932 = vmatprep.subr.bf16.mxu0 0
    %933 = vmatpush1.bf16.xpose.msra.mxu0 0
    %934 = vmatprep.subr.bf16.mxu0 0
    %935 = vmatpush1.bf16.xpose.msra.mxu0 0
    %936 = vmatprep.subr.bf16.mxu0 0
    %937 = vmatpush1.bf16.xpose.msra.mxu0 0
    %938 = vmatprep.subr.bf16.mxu0 0
    %939 = vmatpush1.bf16.xpose.msra.mxu0 %v922
    %940 = vmatprep.subr.bf16.mxu0 0
    %941 = vmatpush2.bf16.xpose.msra.mxu0 0
    %942 = vmatprep.subr.bf16.mxu0 0
    %943 = vmatpush2.bf16.xpose.msra.mxu0 0
    %944 = vmatprep.subr.bf16.mxu0 0
    %945 = vmatpush2.bf16.xpose.msra.mxu0 0
    %946 = vmatprep.subr.bf16.mxu0 0
    %947 = vmatpush2.bf16.xpose.msra.mxu0 0
    %948 = vmatprep.subr.bf16.mxu0 0
    %949 = vmatpush2.bf16.xpose.msra.mxu0 0
    %950 = vmatprep.subr.bf16.mxu0 0
    %951 = vmatpush2.bf16.xpose.msra.mxu0 0
    %952 = vmatprep.subr.bf16.mxu0 0
    %953 = vmatpush2.bf16.xpose.msra.mxu0 0
    %954 = vmatprep.subr.bf16.mxu0 0
    %955 = vmatpush2.bf16.xpose.msra.mxu0 0
    %956 = vmatprep.mubr.bf16.mxu0 0
    %957 = vmatmul.mubr.bf16.gmra.mxu0 %v919
    %v958 = vpop.f32.mrf.mxu0
    %v959 = vadd.f32 0.0, %v958
    %v960 = vpop.f32.mrf.mxu0
    %v961 = vpop.f32.mrf.mxu0
    %v962 = vpop.f32.mrf.mxu0
    %963 = vdwg.mxu0
    %964 = vrot.lane.b32.xlu0 %v247, 104
    %v965 = vpop.permute.xlu0 %964
    %966 = vrot.lane.b32.xlu0 %v249, 104
    %v967 = vpop.permute.xlu0 %966
    %v969 = vsel %vm252, %v965, 0
    %v972 = vsel %vm252, %v967, 0
    %974 = vmatprep.subr.bf16.mxu0 0
    %975 = vmatpush1.bf16.xpose.msra.mxu0 0
    %976 = vmatprep.subr.bf16.mxu0 0
    %977 = vmatpush1.bf16.xpose.msra.mxu0 0
    %978 = vmatprep.subr.bf16.mxu0 0
    %979 = vmatpush1.bf16.xpose.msra.mxu0 0
    %980 = vmatprep.subr.bf16.mxu0 0
    %981 = vmatpush1.bf16.xpose.msra.mxu0 0
    %982 = vmatprep.subr.bf16.mxu0 0
    %983 = vmatpush1.bf16.xpose.msra.mxu0 0
    %984 = vmatprep.subr.bf16.mxu0 0
    %985 = vmatpush1.bf16.xpose.msra.mxu0 0
    %986 = vmatprep.subr.bf16.mxu0 0
    %987 = vmatpush1.bf16.xpose.msra.mxu0 0
    %988 = vmatprep.subr.bf16.mxu0 0
    %989 = vmatpush1.bf16.xpose.msra.mxu0 %v972
    %990 = vmatprep.subr.bf16.mxu0 0
    %991 = vmatpush2.bf16.xpose.msra.mxu0 0
    %992 = vmatprep.subr.bf16.mxu0 0
    %993 = vmatpush2.bf16.xpose.msra.mxu0 0
    %994 = vmatprep.subr.bf16.mxu0 0
    %995 = vmatpush2.bf16.xpose.msra.mxu0 0
    %996 = vmatprep.subr.bf16.mxu0 0
    %997 = vmatpush2.bf16.xpose.msra.mxu0 0
    %998 = vmatprep.subr.bf16.mxu0 0
    %999 = vmatpush2.bf16.xpose.msra.mxu0 0
    %1000 = vmatprep.subr.bf16.mxu0 0
    %1001 = vmatpush2.bf16.xpose.msra.mxu0 0
    %1002 = vmatprep.subr.bf16.mxu0 0
    %1003 = vmatpush2.bf16.xpose.msra.mxu0 0
    %1004 = vmatprep.subr.bf16.mxu0 0
    %1005 = vmatpush2.bf16.xpose.msra.mxu0 0
    %1006 = vmatprep.mubr.bf16.mxu0 0
    %1007 = vmatmul.mubr.bf16.gmra.mxu0 %v969
    %v1008 = vpop.f32.mrf.mxu0
    %v1009 = vadd.f32 0.0, %v1008
    %v1010 = vpop.f32.mrf.mxu0
    %v1011 = vpop.f32.mrf.mxu0
    %v1012 = vpop.f32.mrf.mxu0
    %1013 = vdwg.mxu0
    %v1014 = vmul.f32 %v959, 0.35355338
    %v1015 = vmul.f32 %v1009, 0.35355338
    %v1016 = vsel %vm252, %v1014, -inf
    %1017 = vmax.xlane.f32.xlu0 %v1016
    %v1018 = vpop.xlane.xlu0 %1017
    %v1019 = vsel %vm252, %v1015, -inf
    %1020 = vmax.xlane.f32.xlu0 %v1019
    %v1021 = vpop.xlane.xlu0 %1020
    %v1022 = vsub.f32 %v1014, %v1018
    %v1023 = vsub.f32 %v1015, %v1021
    %v1024 = vmul.f32 %v1022, 1.442695
    %v1025 = vpow.pop %v1024
    %v1026 = vmul.f32 %v1023, 1.442695
    %v1027 = vpow.pop %v1026
    %v1028 = vsel %vm252, %v1025, 0.0
    %1029 = vadd.xlane.f32.xlu0 %v1028
    %v1030 = vpop.xlane.xlu0 %1029
    %v1031 = vsel %vm252, %v1027, 0.0
    %1032 = vadd.xlane.f32.xlu0 %v1031
    %v1033 = vpop.xlane.xlu0 %1032
    %v1034 = vrcp.pop %v1030
    %v1035 = vrcp.pop %v1033
    %v1036 = vmul.f32 %v1025, %v1034
    %v1037 = vmul.f32 %v1027, %v1035
    %v1038 = vpack.c.bf16 %v1036, %v1036
    %v1039 = vpack.c.bf16 %v1037, %v1037
    %1040 = vrot.lane.b32.xlu0 %v250, 104
    %v1041 = vpop.permute.xlu0 %1040
    %v1043 = vsel %vm252, %v1038, 0
    %v1046 = vsel %vm374, %v1041, 0
    %1048 = vmatprep.subr.bf16.mxu0 0
    %1049 = vmatpush1.bf16.msra.mxu0 0
    %1050 = vmatprep.subr.bf16.mxu0 0
    %1051 = vmatpush1.bf16.msra.mxu0 0
    %1052 = vmatprep.subr.bf16.mxu0 0
    %1053 = vmatpush1.bf16.msra.mxu0 0
    %1054 = vmatprep.subr.bf16.mxu0 0
    %1055 = vmatpush1.bf16.msra.mxu0 0
    %1056 = vmatprep.subr.bf16.mxu0 0
    %1057 = vmatpush1.bf16.msra.mxu0 0
    %1058 = vmatprep.subr.bf16.mxu0 0
    %1059 = vmatpush1.bf16.msra.mxu0 0
    %1060 = vmatprep.subr.bf16.mxu0 0
    %1061 = vmatpush1.bf16.msra.mxu0 0
    %1062 = vmatprep.subr.bf16.mxu0 0
    %1063 = vmatpush1.bf16.msra.mxu0 %v1046
    %1064 = vmatprep.subr.bf16.mxu0 0
    %1065 = vmatpush2.bf16.msra.mxu0 0
    %1066 = vmatprep.subr.bf16.mxu0 0
    %1067 = vmatpush2.bf16.msra.mxu0 0
    %1068 = vmatprep.subr.bf16.mxu0 0
    %1069 = vmatpush2.bf16.msra.mxu0 0
    %1070 = vmatprep.subr.bf16.mxu0 0
    %1071 = vmatpush2.bf16.msra.mxu0 0
    %1072 = vmatprep.subr.bf16.mxu0 0
    %1073 = vmatpush2.bf16.msra.mxu0 0
    %1074 = vmatprep.subr.bf16.mxu0 0
    %1075 = vmatpush2.bf16.msra.mxu0 0
    %1076 = vmatprep.subr.bf16.mxu0 0
    %1077 = vmatpush2.bf16.msra.mxu0 0
    %1078 = vmatprep.subr.bf16.mxu0 0
    %1079 = vmatpush2.bf16.msra.mxu0 0
    %1080 = vmatprep.mubr.bf16.mxu0 0
    %1081 = vmatmul.mubr.bf16.gmra.mxu0 %v1043
    %v1082 = vpop.f32.mrf.mxu0
    %v1083 = vadd.f32 0.0, %v1082
    %v1084 = vpop.f32.mrf.mxu0
    %v1085 = vpop.f32.mrf.mxu0
    %v1086 = vpop.f32.mrf.mxu0
    %1087 = vdwg.mxu0
    %1088 = vrot.lane.b32.xlu0 %v251, 104
    %v1089 = vpop.permute.xlu0 %1088
    %v1091 = vsel %vm252, %v1039, 0
    %v1094 = vsel %vm374, %v1089, 0
    %1096 = vmatprep.subr.bf16.mxu0 0
    %1097 = vmatpush1.bf16.msra.mxu0 0
    %1098 = vmatprep.subr.bf16.mxu0 0
    %1099 = vmatpush1.bf16.msra.mxu0 0
    %1100 = vmatprep.subr.bf16.mxu0 0
    %1101 = vmatpush1.bf16.msra.mxu0 0
    %1102 = vmatprep.subr.bf16.mxu0 0
    %1103 = vmatpush1.bf16.msra.mxu0 0
    %1104 = vmatprep.subr.bf16.mxu0 0
    %1105 = vmatpush1.bf16.msra.mxu0 0
    %1106 = vmatprep.subr.bf16.mxu0 0
    %1107 = vmatpush1.bf16.msra.mxu0 0
    %1108 = vmatprep.subr.bf16.mxu0 0
    %1109 = vmatpush1.bf16.msra.mxu0 0
    %1110 = vmatprep.subr.bf16.mxu0 0
    %1111 = vmatpush1.bf16.msra.mxu0 %v1094
    %1112 = vmatprep.subr.bf16.mxu0 0
    %1113 = vmatpush2.bf16.msra.mxu0 0
    %1114 = vmatprep.subr.bf16.mxu0 0
    %1115 = vmatpush2.bf16.msra.mxu0 0
    %1116 = vmatprep.subr.bf16.mxu0 0
    %1117 = vmatpush2.bf16.msra.mxu0 0
    %1118 = vmatprep.subr.bf16.mxu0 0
    %1119 = vmatpush2.bf16.msra.mxu0 0
    %1120 = vmatprep.subr.bf16.mxu0 0
    %1121 = vmatpush2.bf16.msra.mxu0 0
    %1122 = vmatprep.subr.bf16.mxu0 0
    %1123 = vmatpush2.bf16.msra.mxu0 0
    %1124 = vmatprep.subr.bf16.mxu0 0
    %1125 = vmatpush2.bf16.msra.mxu0 0
    %1126 = vmatprep.subr.bf16.mxu0 0
    %1127 = vmatpush2.bf16.msra.mxu0 0
    %1128 = vmatprep.mubr.bf16.mxu0 0
    %1129 = vmatmul.mubr.bf16.gmra.mxu0 %v1091
    %v1130 = vpop.f32.mrf.mxu0
    %v1131 = vadd.f32 0.0, %v1130
    %v1132 = vpop.f32.mrf.mxu0
    %v1133 = vpop.f32.mrf.mxu0
    %v1134 = vpop.f32.mrf.mxu0
    %1135 = vdwg.mxu0
    %1138 = vrot.lane.b32.xlu0 %v638, 8
    %v1139 = vpop.permute.xlu0 %1138
    %1140 = vrot.lane.b32.xlu0 %v687, 8
    %v1141 = vpop.permute.xlu0 %1140
    %1146 = vrot.lane.b32.xlu0 %v861, 16
    %v1147 = vpop.permute.xlu0 %1146
    %1148 = vrot.lane.b32.xlu0 %v909, 16
    %v1149 = vpop.permute.xlu0 %1148
    %1154 = vrot.lane.b32.xlu0 %v1083, 24
    %v1155 = vpop.permute.xlu0 %1154
    %1156 = vrot.lane.b32.xlu0 %v1131, 24
    %v1157 = vpop.permute.xlu0 %1156
    %v1160 = vsel %vm252, %v413, %v1139
    %v1161 = vsel %vm252, %v459, %v1141
    %vm1162 = vcmask 130048
    %v1163 = vsel %vm1162, %v1160, %v1147
    %v1164 = vsel %vm1162, %v1161, %v1149
    %vm1165 = vcmask 195584
    %v1166 = vsel %vm1165, %v1163, %v1155
    %v1167 = vsel %vm1165, %v1164, %v1157
    %v1168 = vpack.c.bf16 %v1167, %v1166
    %v1169 = vlaneseq
    %v1170 = vshrl.u32 %v1169, 7
    %v1171 = vsub.s32 0, %v1170
    %v1172 = vrot.slane %v59, %v1171
    %v1177 = vunpack.c.l.b16 %v40
    %v1178 = vunpack.c.l.b16 %v41
    %v1179 = vunpack.c.l.b16 %v42
    %v1180 = vunpack.c.l.b16 %v43
    %v1181 = vpack.c.b16 %v1178, %v1177
    %v1182 = vpack.c.b16 %v1180, %v1179
    %v1186 = vsel %vm84, %v1168, 0
    %1188 = vmatprep.subr.bf16.mxu0 0
    %1189 = vmatpush1.bf16.msra.mxu0 0
    %1190 = vmatprep.subr.bf16.mxu0 0
    %1191 = vmatpush1.bf16.msra.mxu0 0
    %1192 = vmatprep.subr.bf16.mxu0 0
    %1193 = vmatpush1.bf16.msra.mxu0 0
    %1194 = vmatprep.subr.bf16.mxu0 0
    %1195 = vmatpush1.bf16.msra.mxu0 0
    %1196 = vmatprep.subr.bf16.mxu0 0
    %1197 = vmatpush1.bf16.msra.mxu0 0
    %1198 = vmatprep.subr.bf16.mxu0 0
    %1199 = vmatpush1.bf16.msra.mxu0 0
    %1200 = vmatprep.subr.bf16.mxu0 0
    %1201 = vmatpush1.bf16.msra.mxu0 %v1182
    %1202 = vmatprep.subr.bf16.mxu0 0
    %1203 = vmatpush1.bf16.msra.mxu0 %v1181
    %1204 = vmatprep.subr.bf16.mxu0 0
    %1205 = vmatpush2.bf16.msra.mxu0 0
    %1206 = vmatprep.subr.bf16.mxu0 0
    %1207 = vmatpush2.bf16.msra.mxu0 0
    %1208 = vmatprep.subr.bf16.mxu0 0
    %1209 = vmatpush2.bf16.msra.mxu0 0
    %1210 = vmatprep.subr.bf16.mxu0 0
    %1211 = vmatpush2.bf16.msra.mxu0 0
    %1212 = vmatprep.subr.bf16.mxu0 0
    %1213 = vmatpush2.bf16.msra.mxu0 0
    %1214 = vmatprep.subr.bf16.mxu0 0
    %1215 = vmatpush2.bf16.msra.mxu0 0
    %1216 = vmatprep.subr.bf16.mxu0 0
    %1217 = vmatpush2.bf16.msra.mxu0 0
    %1218 = vmatprep.subr.bf16.mxu0 0
    %1219 = vmatpush2.bf16.msra.mxu0 0
    %1220 = vmatprep.mubr.bf16.mxu0 0
    %1221 = vmatmul.mubr.bf16.gmra.mxu0 %v1186
    %v1222 = vpop.f32.mrf.mxu0
    %v1223 = vadd.f32 %v1172, %v1222
    %v1224 = vpop.f32.mrf.mxu0
    %v1225 = vpop.f32.mrf.mxu0
    %v1226 = vadd.f32 %v1172, %v1225
    %v1227 = vpop.f32.mrf.mxu0
    %1228 = vdwg.mxu0
    %v1229 = vadd.f32 %v24, %v1223
    %v1230 = vadd.f32 %v25, %v1226
    %v1231 = vsel %vm84, %v1229, 0.0
    %1232 = vadd.xlane.f32.xlu0 %v1231
    %v1233 = vpop.xlane.xlu0 %1232
    %v1234 = vsel %vm84, %v1230, 0.0
    %1235 = vadd.xlane.f32.xlu0 %v1234
    %v1236 = vpop.xlane.xlu0 %1235
    %v1237 = vrcp.pop 32.0
    %v1238 = vmul.f32 %v1233, %v1237
    %v1239 = vmul.f32 %v1236, %v1237
    %v1240 = vsub.f32 %v1229, %v1238
    %v1241 = vsub.f32 %v1230, %v1239
    %v1242 = vmul.f32 %v1240, %v1240
    %v1243 = vmul.f32 %v1241, %v1241
    %v1244 = vsel %vm84, %v1242, 0.0
    %1245 = vadd.xlane.f32.xlu0 %v1244
    %v1246 = vpop.xlane.xlu0 %1245
    %v1247 = vsel %vm84, %v1243, 0.0
    %1248 = vadd.xlane.f32.xlu0 %v1247
    %v1249 = vpop.xlane.xlu0 %1248
    %v1250 = vmul.f32 %v1246, %v1237
    %v1251 = vmul.f32 %v1249, %v1237
    %v1252 = vadd.f32 %v1250, 1e-05
    %v1253 = vadd.f32 %v1251, 1e-05
    %v1254 = vrsqrt.pop %v1252
    %v1255 = vrsqrt.pop %v1253
    %v1256 = vmul.f32 %v1240, %v1254
    %v1257 = vmul.f32 %v1241, %v1255
    %v1258 = vlaneseq
    %v1259 = vshrl.u32 %v1258, 7
    %v1260 = vsub.s32 0, %v1259
    %v1261 = vrot.slane %v60, %v1260
    %v1262 = vmul.f32 %v1256, %v1261
    %v1263 = vmul.f32 %v1257, %v1261
    %v1264 = vlaneseq
    %v1265 = vshrl.u32 %v1264, 7
    %v1266 = vsub.s32 0, %v1265
    %v1267 = vrot.slane %v61, %v1266
    %v1268 = vadd.f32 %v1262, %v1267
    %v1269 = vadd.f32 %v1263, %v1267
    %v1270 = vpack.c.bf16 %v1269, %v1268
    %v1271 = vlaneseq
    %v1272 = vshrl.u32 %v1271, 7
    %v1273 = vsub.s32 0, %v1272
    %v1274 = vrot.slane %v62, %v1273
    %v1279 = vunpack.c.l.b16 %v44
    %v1280 = vunpack.c.l.b16 %v45
    %v1281 = vunpack.c.l.b16 %v46
    %v1282 = vunpack.c.l.b16 %v47
    %v1283 = vpack.c.b16 %v1280, %v1279
    %v1284 = vpack.c.b16 %v1282, %v1281
    %v1288 = vsel %vm84, %v1270, 0
    %1290 = vmatprep.subr.bf16.mxu0 0
    %1291 = vmatpush1.bf16.msra.mxu0 0
    %1292 = vmatprep.subr.bf16.mxu0 0
    %1293 = vmatpush1.bf16.msra.mxu0 0
    %1294 = vmatprep.subr.bf16.mxu0 0
    %1295 = vmatpush1.bf16.msra.mxu0 0
    %1296 = vmatprep.subr.bf16.mxu0 0
    %1297 = vmatpush1.bf16.msra.mxu0 0
    %1298 = vmatprep.subr.bf16.mxu0 0
    %1299 = vmatpush1.bf16.msra.mxu0 0
    %1300 = vmatprep.subr.bf16.mxu0 0
    %1301 = vmatpush1.bf16.msra.mxu0 0
    %1302 = vmatprep.subr.bf16.mxu0 0
    %1303 = vmatpush1.bf16.msra.mxu0 %v1284
    %1304 = vmatprep.subr.bf16.mxu0 0
    %1305 = vmatpush1.bf16.msra.mxu0 %v1283
    %1306 = vmatprep.subr.bf16.mxu0 0
    %1307 = vmatpush2.bf16.msra.mxu0 0
    %1308 = vmatprep.subr.bf16.mxu0 0
    %1309 = vmatpush2.bf16.msra.mxu0 0
    %1310 = vmatprep.subr.bf16.mxu0 0
    %1311 = vmatpush2.bf16.msra.mxu0 0
    %1312 = vmatprep.subr.bf16.mxu0 0
    %1313 = vmatpush2.bf16.msra.mxu0 0
    %1314 = vmatprep.subr.bf16.mxu0 0
    %1315 = vmatpush2.bf16.msra.mxu0 0
    %1316 = vmatprep.subr.bf16.mxu0 0
    %1317 = vmatpush2.bf16.msra.mxu0 0
    %1318 = vmatprep.subr.bf16.mxu0 0
    %1319 = vmatpush2.bf16.msra.mxu0 0
    %1320 = vmatprep.subr.bf16.mxu0 0
    %1321 = vmatpush2.bf16.msra.mxu0 0
    %1322 = vmatprep.mubr.bf16.mxu0 0
    %1323 = vmatmul.mubr.bf16.gmra.mxu0 %v1288
    %v1324 = vpop.f32.mrf.mxu0
    %v1325 = vadd.f32 %v1274, %v1324
    %v1326 = vpop.f32.mrf.mxu0
    %v1327 = vpop.f32.mrf.mxu0
    %v1328 = vadd.f32 %v1274, %v1327
    %v1329 = vpop.f32.mrf.mxu0
    %1330 = vdwg.mxu0
    %v1331 = vmax.f32 %v1325, 0.0
    %v1332 = vmax.f32 %v1328, 0.0
    %v1333 = vpack.c.bf16 %v1332, %v1331
    %v1334 = vlaneseq
    %v1335 = vshrl.u32 %v1334, 7
    %v1336 = vsub.s32 0, %v1335
    %v1337 = vrot.slane %v63, %v1336
    %v1346 = vunpack.c.l.b16 %v48
    %v1347 = vunpack.c.l.b16 %v49
    %v1348 = vunpack.c.l.b16 %v50
    %v1349 = vunpack.c.l.b16 %v51
    %v1350 = vunpack.c.l.b16 %v52
    %v1351 = vunpack.c.l.b16 %v53
    %v1352 = vunpack.c.l.b16 %v54
    %v1353 = vunpack.c.l.b16 %v55
    %v1354 = vpack.c.b16 %v1347, %v1346
    %v1355 = vpack.c.b16 %v1349, %v1348
    %v1356 = vpack.c.b16 %v1351, %v1350
    %v1357 = vpack.c.b16 %v1353, %v1352
    %vm1362 = vcmask 523264
    %v1364 = vsel %vm1362, %v1333, 0
    %1366 = vmatprep.subr.bf16.mxu0 0
    %1367 = vmatpush1.bf16.msra.mxu0 0
    %1368 = vmatprep.subr.bf16.mxu0 0
    %1369 = vmatpush1.bf16.msra.mxu0 0
    %1370 = vmatprep.subr.bf16.mxu0 0
    %1371 = vmatpush1.bf16.msra.mxu0 0
    %1372 = vmatprep.subr.bf16.mxu0 0
    %1373 = vmatpush1.bf16.msra.mxu0 0
    %1374 = vmatprep.subr.bf16.mxu0 0
    %1375 = vmatpush1.bf16.msra.mxu0 %v1357
    %1376 = vmatprep.subr.bf16.mxu0 0
    %1377 = vmatpush1.bf16.msra.mxu0 %v1356
    %1378 = vmatprep.subr.bf16.mxu0 0
    %1379 = vmatpush1.bf16.msra.mxu0 %v1355
    %1380 = vmatprep.subr.bf16.mxu0 0
    %1381 = vmatpush1.bf16.msra.mxu0 %v1354
    %1382 = vmatprep.subr.bf16.mxu0 0
    %1383 = vmatpush2.bf16.msra.mxu0 0
    %1384 = vmatprep.subr.bf16.mxu0 0
    %1385 = vmatpush2.bf16.msra.mxu0 0
    %1386 = vmatprep.subr.bf16.mxu0 0
    %1387 = vmatpush2.bf16.msra.mxu0 0
    %1388 = vmatprep.subr.bf16.mxu0 0
    %1389 = vmatpush2.bf16.msra.mxu0 0
    %1390 = vmatprep.subr.bf16.mxu0 0
    %1391 = vmatpush2.bf16.msra.mxu0 0
    %1392 = vmatprep.subr.bf16.mxu0 0
    %1393 = vmatpush2.bf16.msra.mxu0 0
    %1394 = vmatprep.subr.bf16.mxu0 0
    %1395 = vmatpush2.bf16.msra.mxu0 0
    %1396 = vmatprep.subr.bf16.mxu0 0
    %1397 = vmatpush2.bf16.msra.mxu0 0
    %1398 = vmatprep.mubr.bf16.mxu0 0
    %1399 = vmatmul.mubr.bf16.gmra.mxu0 %v1364
    %v1400 = vpop.f32.mrf.mxu0
    %v1401 = vadd.f32 %v1337, %v1400
    %v1402 = vpop.f32.mrf.mxu0
    %v1403 = vpop.f32.mrf.mxu0
    %v1404 = vadd.f32 %v1337, %v1403
    %v1405 = vpop.f32.mrf.mxu0
    %1406 = vdwg.mxu0
    %v1407 = vadd.f32 %v1268, %v1401
    %v1408 = vadd.f32 %v1269, %v1404
    %v1409 = vsel %vm84, %v1407, 0.0
    %1410 = vadd.xlane.f32.xlu0 %v1409
    %v1411 = vpop.xlane.xlu0 %1410
    %v1412 = vsel %vm84, %v1408, 0.0
    %1413 = vadd.xlane.f32.xlu0 %v1412
    %v1414 = vpop.xlane.xlu0 %1413
    %v1415 = vmul.f32 %v1411, %v1237
    %v1416 = vmul.f32 %v1414, %v1237
    %v1417 = vsub.f32 %v1407, %v1415
    %v1418 = vsub.f32 %v1408, %v1416
    %v1419 = vmul.f32 %v1417, %v1417
    %v1420 = vmul.f32 %v1418, %v1418
    %v1421 = vsel %vm84, %v1419, 0.0
    %1422 = vadd.xlane.f32.xlu0 %v1421
    %v1423 = vpop.xlane.xlu0 %1422
    %v1424 = vsel %vm84, %v1420, 0.0
    %1425 = vadd.xlane.f32.xlu0 %v1424
    %v1426 = vpop.xlane.xlu0 %1425
    %v1427 = vmul.f32 %v1423, %v1237
    %v1428 = vmul.f32 %v1426, %v1237
    %v1429 = vadd.f32 %v1427, 1e-05
    %v1430 = vadd.f32 %v1428, 1e-05
    %v1431 = vrsqrt.pop %v1429
    %v1432 = vrsqrt.pop %v1430
    %v1433 = vmul.f32 %v1417, %v1431
    %v1434 = vmul.f32 %v1418, %v1432
    %v1435 = vlaneseq
    %v1436 = vshrl.u32 %v1435, 7
    %v1437 = vsub.s32 0, %v1436
    %v1438 = vrot.slane %v64, %v1437
    %v1439 = vmul.f32 %v1433, %v1438
    %v1440 = vmul.f32 %v1434, %v1438
    %v1441 = vlaneseq
    %v1442 = vshrl.u32 %v1441, 7
    %v1443 = vsub.s32 0, %v1442
    %v1444 = vrot.slane %v65, %v1443
    %v1445 = vadd.f32 %v1439, %v1444
    %v1446 = vadd.f32 %v1440, %v1444
    %s1447 = scalar_lea.vmem %s3, 112
    %v1448 = vld [vmem:[%s1447] sm:$0xf]
    %v1449 = vld [vmem:[%s1447 + $0x4] sm:$0xf]
    %v1450 = vld [vmem:[%s1447 + $0x8] sm:$0xf]
    %v1451 = vld [vmem:[%s1447 + $0xc] sm:$0xf]
    %v1452 = vld [vmem:[%s1447 + $0x10] sm:$0xf]
    %v1453 = vld [vmem:[%s1447 + $0x14] sm:$0xf]
    %v1454 = vld [vmem:[%s1447 + $0x18] sm:$0xf]
    %v1455 = vld [vmem:[%s1447 + $0x1c] sm:$0xf]
    %v1456 = vld [vmem:[%s1447 + $0x20] sm:$0xf]
    %v1457 = vld [vmem:[%s1447 + $0x24] sm:$0xf]
    %v1458 = vld [vmem:[%s1447 + $0x28] sm:$0xf]
    %v1459 = vld [vmem:[%s1447 + $0x2c] sm:$0xf]
    %v1460 = vld [vmem:[%s1447 + $0x30] sm:$0xf]
    %v1461 = vld [vmem:[%s1447 + $0x34] sm:$0xf]
    %v1462 = vld [vmem:[%s1447 + $0x38] sm:$0xf]
    %v1463 = vld [vmem:[%s1447 + $0x3c] sm:$0xf]
    %v1464 = vld [vmem:[%s1447 + $0x40] sm:$0xf]
    %v1465 = vld [vmem:[%s1447 + $0x44] sm:$0xf]
    %v1466 = vld [vmem:[%s1447 + $0x48] sm:$0xf]
    %v1467 = vld [vmem:[%s1447 + $0x4c] sm:$0xf]
    %v1468 = vld [vmem:[%s1447 + $0x50] sm:$0xf]
    %v1469 = vld [vmem:[%s1447 + $0x54] sm:$0xf]
    %v1470 = vld [vmem:[%s1447 + $0x58] sm:$0xf]
    %v1471 = vld [vmem:[%s1447 + $0x5c] sm:$0xf]
    %v1472 = vld [vmem:[%s1447 + $0x60] sm:$0xf]
    %v1473 = vld [vmem:[%s1447 + $0x64] sm:$0xf]
    %v1474 = vld [vmem:[%s1447 + $0x68] sm:$0xf]
    %v1475 = vld [vmem:[%s1447 + $0x6c] sm:$0xf]
    %s1476 = scalar_lea.vmem %s4, 16
    %v1477 = vld [vmem:[%s1476] sm:$0x1]
    %v1478 = vld [vmem:[%s1476 + $0x1] sm:$0x1]
    %v1479 = vld [vmem:[%s1476 + $0x2] sm:$0x1]
    %v1480 = vld [vmem:[%s1476 + $0x3] sm:$0x1]
    %v1481 = vld [vmem:[%s1476 + $0x4] sm:$0x1]
    %v1482 = vld [vmem:[%s1476 + $0x5] sm:$0x1]
    %v1483 = vld [vmem:[%s1476 + $0x6] sm:$0x1]
    %v1484 = vld [vmem:[%s1476 + $0x7] sm:$0x1]
    %v1485 = vld [vmem:[%s1476 + $0x8] sm:$0x1]
    %v1486 = vld [vmem:[%s1476 + $0x9] sm:$0x1]
    %v1487 = vlaneseq
    %v1488 = vshrl.u32 %v1487, 7
    %v1489 = vsub.s32 0, %v1488
    %v1490 = vrot.slane %v1477, %v1489
    %v1495 = vunpack.c.l.b16 %v1448
    %v1496 = vunpack.c.l.b16 %v1449
    %v1497 = vunpack.c.l.b16 %v1450
    %v1498 = vunpack.c.l.b16 %v1451
    %v1499 = vpack.c.b16 %v1496, %v1495
    %v1500 = vpack.c.b16 %v1498, %v1497
    %1503 = vmatprep.subr.bf16.mxu0 0
    %1504 = vmatpush1.bf16.msra.mxu0 0
    %1505 = vmatprep.subr.bf16.mxu0 0
    %1506 = vmatpush1.bf16.msra.mxu0 0
    %1507 = vmatprep.subr.bf16.mxu0 0
    %1508 = vmatpush1.bf16.msra.mxu0 0
    %1509 = vmatprep.subr.bf16.mxu0 0
    %1510 = vmatpush1.bf16.msra.mxu0 0
    %1511 = vmatprep.subr.bf16.mxu0 0
    %1512 = vmatpush1.bf16.msra.mxu0 0
    %1513 = vmatprep.subr.bf16.mxu0 0
    %1514 = vmatpush1.bf16.msra.mxu0 0
    %1515 = vmatprep.subr.bf16.mxu0 0
    %1516 = vmatpush1.bf16.msra.mxu0 %v1500
    %1517 = vmatprep.subr.bf16.mxu0 0
    %1518 = vmatpush1.bf16.msra.mxu0 %v1499
    %1519 = vmatprep.subr.bf16.mxu0 0
    %1520 = vmatpush2.bf16.msra.mxu0 0
    %1521 = vmatprep.subr.bf16.mxu0 0
    %1522 = vmatpush2.bf16.msra.mxu0 0
    %1523 = vmatprep.subr.bf16.mxu0 0
    %1524 = vmatpush2.bf16.msra.mxu0 0
    %1525 = vmatprep.subr.bf16.mxu0 0
    %1526 = vmatpush2.bf16.msra.mxu0 0
    %1527 = vmatprep.subr.bf16.mxu0 0
    %1528 = vmatpush2.bf16.msra.mxu0 0
    %1529 = vmatprep.subr.bf16.mxu0 0
    %1530 = vmatpush2.bf16.msra.mxu0 0
    %1531 = vmatprep.subr.bf16.mxu0 0
    %1532 = vmatpush2.bf16.msra.mxu0 0
    %1533 = vmatprep.subr.bf16.mxu0 0
    %1534 = vmatpush2.bf16.msra.mxu0 0
    %1535 = vmatprep.mubr.bf16.mxu0 0
    %1536 = vmatmul.mubr.bf16.gmra.mxu0 %v146
    %v1537 = vpop.f32.mrf.mxu0
    %v1538 = vadd.f32 %v1490, %v1537
    %v1539 = vpop.f32.mrf.mxu0
    %v1540 = vpop.f32.mrf.mxu0
    %v1541 = vadd.f32 %v1490, %v1540
    %v1542 = vpop.f32.mrf.mxu0
    %1543 = vdwg.mxu0
    %v1544 = vlaneseq
    %v1545 = vshrl.u32 %v1544, 7
    %v1546 = vsub.s32 0, %v1545
    %v1547 = vrot.slane %v1478, %v1546
    %v1552 = vunpack.c.l.b16 %v1452
    %v1553 = vunpack.c.l.b16 %v1453
    %v1554 = vunpack.c.l.b16 %v1454
    %v1555 = vunpack.c.l.b16 %v1455
    %v1556 = vpack.c.b16 %v1553, %v1552
    %v1557 = vpack.c.b16 %v1555, %v1554
    %1560 = vmatprep.subr.bf16.mxu0 0
    %1561 = vmatpush1.bf16.msra.mxu0 0
    %1562 = vmatprep.subr.bf16.mxu0 0
    %1563 = vmatpush1.bf16.msra.mxu0 0
    %1564 = vmatprep.subr.bf16.mxu0 0
    %1565 = vmatpush1.bf16.msra.mxu0 0
    %1566 = vmatprep.subr.bf16.mxu0 0
    %1567 = vmatpush1.bf16.msra.mxu0 0
    %1568 = vmatprep.subr.bf16.mxu0 0
    %1569 = vmatpush1.bf16.msra.mxu0 0
    %1570 = vmatprep.subr.bf16.mxu0 0
    %1571 = vmatpush1.bf16.msra.mxu0 0
    %1572 = vmatprep.subr.bf16.mxu0 0
    %1573 = vmatpush1.bf16.msra.mxu0 %v1557
    %1574 = vmatprep.subr.bf16.mxu0 0
    %1575 = vmatpush1.bf16.msra.mxu0 %v1556
    %1576 = vmatprep.subr.bf16.mxu0 0
    %1577 = vmatpush2.bf16.msra.mxu0 0
    %1578 = vmatprep.subr.bf16.mxu0 0
    %1579 = vmatpush2.bf16.msra.mxu0 0
    %1580 = vmatprep.subr.bf16.mxu0 0
    %1581 = vmatpush2.bf16.msra.mxu0 0
    %1582 = vmatprep.subr.bf16.mxu0 0
    %1583 = vmatpush2.bf16.msra.mxu0 0
    %1584 = vmatprep.subr.bf16.mxu0 0
    %1585 = vmatpush2.bf16.msra.mxu0 0
    %1586 = vmatprep.subr.bf16.mxu0 0
    %1587 = vmatpush2.bf16.msra.mxu0 0
    %1588 = vmatprep.subr.bf16.mxu0 0
    %1589 = vmatpush2.bf16.msra.mxu0 0
    %1590 = vmatprep.subr.bf16.mxu0 0
    %1591 = vmatpush2.bf16.msra.mxu0 0
    %1592 = vmatprep.mubr.bf16.mxu0 0
    %1593 = vmatmul.mubr.bf16.gmra.mxu0 %v86
    %v1594 = vpop.f32.mrf.mxu0
    %v1595 = vadd.f32 %v1547, %v1594
    %v1596 = vpop.f32.mrf.mxu0
    %v1597 = vpop.f32.mrf.mxu0
    %v1598 = vadd.f32 %v1547, %v1597
    %v1599 = vpop.f32.mrf.mxu0
    %1600 = vdwg.mxu0
    %v1601 = vlaneseq
    %v1602 = vshrl.u32 %v1601, 7
    %v1603 = vsub.s32 0, %v1602
    %v1604 = vrot.slane %v1479, %v1603
    %v1609 = vunpack.c.l.b16 %v1456
    %v1610 = vunpack.c.l.b16 %v1457
    %v1611 = vunpack.c.l.b16 %v1458
    %v1612 = vunpack.c.l.b16 %v1459
    %v1613 = vpack.c.b16 %v1610, %v1609
    %v1614 = vpack.c.b16 %v1612, %v1611
    %1617 = vmatprep.subr.bf16.mxu0 0
    %1618 = vmatpush1.bf16.msra.mxu0 0
    %1619 = vmatprep.subr.bf16.mxu0 0
    %1620 = vmatpush1.bf16.msra.mxu0 0
    %1621 = vmatprep.subr.bf16.mxu0 0
    %1622 = vmatpush1.bf16.msra.mxu0 0
    %1623 = vmatprep.subr.bf16.mxu0 0
    %1624 = vmatpush1.bf16.msra.mxu0 0
    %1625 = vmatprep.subr.bf16.mxu0 0
    %1626 = vmatpush1.bf16.msra.mxu0 0
    %1627 = vmatprep.subr.bf16.mxu0 0
    %1628 = vmatpush1.bf16.msra.mxu0 0
    %1629 = vmatprep.subr.bf16.mxu0 0
    %1630 = vmatpush1.bf16.msra.mxu0 %v1614
    %1631 = vmatprep.subr.bf16.mxu0 0
    %1632 = vmatpush1.bf16.msra.mxu0 %v1613
    %1633 = vmatprep.subr.bf16.mxu0 0
    %1634 = vmatpush2.bf16.msra.mxu0 0
    %1635 = vmatprep.subr.bf16.mxu0 0
    %1636 = vmatpush2.bf16.msra.mxu0 0
    %1637 = vmatprep.subr.bf16.mxu0 0
    %1638 = vmatpush2.bf16.msra.mxu0 0
    %1639 = vmatprep.subr.bf16.mxu0 0
    %1640 = vmatpush2.bf16.msra.mxu0 0
    %1641 = vmatprep.subr.bf16.mxu0 0
    %1642 = vmatpush2.bf16.msra.mxu0 0
    %1643 = vmatprep.subr.bf16.mxu0 0
    %1644 = vmatpush2.bf16.msra.mxu0 0
    %1645 = vmatprep.subr.bf16.mxu0 0
    %1646 = vmatpush2.bf16.msra.mxu0 0
    %1647 = vmatprep.subr.bf16.mxu0 0
    %1648 = vmatpush2.bf16.msra.mxu0 0
    %1649 = vmatprep.mubr.bf16.mxu0 0
    %1650 = vmatmul.mubr.bf16.gmra.mxu0 %v86
    %v1651 = vpop.f32.mrf.mxu0
    %v1652 = vadd.f32 %v1604, %v1651
    %v1653 = vpop.f32.mrf.mxu0
    %v1654 = vpop.f32.mrf.mxu0
    %v1655 = vadd.f32 %v1604, %v1654
    %v1656 = vpop.f32.mrf.mxu0
    %1657 = vdwg.mxu0
    %v1658 = vpack.c.bf16 %v1538, %v1538
    %v1659 = vpack.c.bf16 %v1541, %v1541
    %v1660 = vpack.c.bf16 %v1595, %v1595
    %v1661 = vpack.c.bf16 %v1598, %v1598
    %v1662 = vpack.c.bf16 %v1652, %v1652
    %v1663 = vpack.c.bf16 %v1655, %v1655
    %v1665 = vsel %vm252, %v1658, 0
    %v1668 = vsel %vm252, %v1660, 0
    %1670 = vmatprep.subr.bf16.mxu0 0
    %1671 = vmatpush1.bf16.xpose.msra.mxu0 0
    %1672 = vmatprep.subr.bf16.mxu0 0
    %1673 = vmatpush1.bf16.xpose.msra.mxu0 0
    %1674 = vmatprep.subr.bf16.mxu0 0
    %1675 = vmatpush1.bf16.xpose.msra.mxu0 0
    %1676 = vmatprep.subr.bf16.mxu0 0
    %1677 = vmatpush1.bf16.xpose.msra.mxu0 0
    %1678 = vmatprep.subr.bf16.mxu0 0
    %1679 = vmatpush1.bf16.xpose.msra.mxu0 0
    %1680 = vmatprep.subr.bf16.mxu0 0
    %1681 = vmatpush1.bf16.xpose.msra.mxu0 0
    %1682 = vmatprep.subr.bf16.mxu0 0
    %1683 = vmatpush1.bf16.xpose.msra.mxu0 0
    %1684 = vmatprep.subr.bf16.mxu0 0
    %1685 = vmatpush1.bf16.xpose.msra.mxu0 %v1668
    %1686 = vmatprep.subr.bf16.mxu0 0
    %1687 = vmatpush2.bf16.xpose.msra.mxu0 0
    %1688 = vmatprep.subr.bf16.mxu0 0
    %1689 = vmatpush2.bf16.xpose.msra.mxu0 0
    %1690 = vmatprep.subr.bf16.mxu0 0
    %1691 = vmatpush2.bf16.xpose.msra.mxu0 0
    %1692 = vmatprep.subr.bf16.mxu0 0
    %1693 = vmatpush2.bf16.xpose.msra.mxu0 0
    %1694 = vmatprep.subr.bf16.mxu0 0
    %1695 = vmatpush2.bf16.xpose.msra.mxu0 0
    %1696 = vmatprep.subr.bf16.mxu0 0
    %1697 = vmatpush2.bf16.xpose.msra.mxu0 0
    %1698 = vmatprep.subr.bf16.mxu0 0
    %1699 = vmatpush2.bf16.xpose.msra.mxu0 0
    %1700 = vmatprep.subr.bf16.mxu0 0
    %1701 = vmatpush2.bf16.xpose.msra.mxu0 0
    %1702 = vmatprep.mubr.bf16.mxu0 0
    %1703 = vmatmul.mubr.bf16.gmra.mxu0 %v1665
    %v1704 = vpop.f32.mrf.mxu0
    %v1705 = vadd.f32 0.0, %v1704
    %v1706 = vpop.f32.mrf.mxu0
    %v1707 = vpop.f32.mrf.mxu0
    %v1708 = vpop.f32.mrf.mxu0
    %1709 = vdwg.mxu0
    %v1711 = vsel %vm252, %v1659, 0
    %v1714 = vsel %vm252, %v1661, 0
    %1716 = vmatprep.subr.bf16.mxu0 0
    %1717 = vmatpush1.bf16.xpose.msra.mxu0 0
    %1718 = vmatprep.subr.bf16.mxu0 0
    %1719 = vmatpush1.bf16.xpose.msra.mxu0 0
    %1720 = vmatprep.subr.bf16.mxu0 0
    %1721 = vmatpush1.bf16.xpose.msra.mxu0 0
    %1722 = vmatprep.subr.bf16.mxu0 0
    %1723 = vmatpush1.bf16.xpose.msra.mxu0 0
    %1724 = vmatprep.subr.bf16.mxu0 0
    %1725 = vmatpush1.bf16.xpose.msra.mxu0 0
    %1726 = vmatprep.subr.bf16.mxu0 0
    %1727 = vmatpush1.bf16.xpose.msra.mxu0 0
    %1728 = vmatprep.subr.bf16.mxu0 0
    %1729 = vmatpush1.bf16.xpose.msra.mxu0 0
    %1730 = vmatprep.subr.bf16.mxu0 0
    %1731 = vmatpush1.bf16.xpose.msra.mxu0 %v1714
    %1732 = vmatprep.subr.bf16.mxu0 0
    %1733 = vmatpush2.bf16.xpose.msra.mxu0 0
    %1734 = vmatprep.subr.bf16.mxu0 0
    %1735 = vmatpush2.bf16.xpose.msra.mxu0 0
    %1736 = vmatprep.subr.bf16.mxu0 0
    %1737 = vmatpush2.bf16.xpose.msra.mxu0 0
    %1738 = vmatprep.subr.bf16.mxu0 0
    %1739 = vmatpush2.bf16.xpose.msra.mxu0 0
    %1740 = vmatprep.subr.bf16.mxu0 0
    %1741 = vmatpush2.bf16.xpose.msra.mxu0 0
    %1742 = vmatprep.subr.bf16.mxu0 0
    %1743 = vmatpush2.bf16.xpose.msra.mxu0 0
    %1744 = vmatprep.subr.bf16.mxu0 0
    %1745 = vmatpush2.bf16.xpose.msra.mxu0 0
    %1746 = vmatprep.subr.bf16.mxu0 0
    %1747 = vmatpush2.bf16.xpose.msra.mxu0 0
    %1748 = vmatprep.mubr.bf16.mxu0 0
    %1749 = vmatmul.mubr.bf16.gmra.mxu0 %v1711
    %v1750 = vpop.f32.mrf.mxu0
    %v1751 = vadd.f32 0.0, %v1750
    %v1752 = vpop.f32.mrf.mxu0
    %v1753 = vpop.f32.mrf.mxu0
    %v1754 = vpop.f32.mrf.mxu0
    %1755 = vdwg.mxu0
    %v1756 = vmul.f32 %v1705, 0.35355338
    %v1757 = vmul.f32 %v1751, 0.35355338
    %v1758 = vsel %vm252, %v1756, -inf
    %1759 = vmax.xlane.f32.xlu0 %v1758
    %v1760 = vpop.xlane.xlu0 %1759
    %v1761 = vsel %vm252, %v1757, -inf
    %1762 = vmax.xlane.f32.xlu0 %v1761
    %v1763 = vpop.xlane.xlu0 %1762
    %v1764 = vsub.f32 %v1756, %v1760
    %v1765 = vsub.f32 %v1757, %v1763
    %v1766 = vmul.f32 %v1764, 1.442695
    %v1767 = vpow.pop %v1766
    %v1768 = vmul.f32 %v1765, 1.442695
    %v1769 = vpow.pop %v1768
    %v1770 = vsel %vm252, %v1767, 0.0
    %1771 = vadd.xlane.f32.xlu0 %v1770
    %v1772 = vpop.xlane.xlu0 %1771
    %v1773 = vsel %vm252, %v1769, 0.0
    %1774 = vadd.xlane.f32.xlu0 %v1773
    %v1775 = vpop.xlane.xlu0 %1774
    %v1776 = vrcp.pop %v1772
    %v1777 = vrcp.pop %v1775
    %v1778 = vmul.f32 %v1767, %v1776
    %v1779 = vmul.f32 %v1769, %v1777
    %v1780 = vpack.c.bf16 %v1778, %v1778
    %v1781 = vpack.c.bf16 %v1779, %v1779
    %v1783 = vsel %vm252, %v1780, 0
    %v1786 = vsel %vm374, %v1662, 0
    %1788 = vmatprep.subr.bf16.mxu0 0
    %1789 = vmatpush1.bf16.msra.mxu0 0
    %1790 = vmatprep.subr.bf16.mxu0 0
    %1791 = vmatpush1.bf16.msra.mxu0 0
    %1792 = vmatprep.subr.bf16.mxu0 0
    %1793 = vmatpush1.bf16.msra.mxu0 0
    %1794 = vmatprep.subr.bf16.mxu0 0
    %1795 = vmatpush1.bf16.msra.mxu0 0
    %1796 = vmatprep.subr.bf16.mxu0 0
    %1797 = vmatpush1.bf16.msra.mxu0 0
    %1798 = vmatprep.subr.bf16.mxu0 0
    %1799 = vmatpush1.bf16.msra.mxu0 0
    %1800 = vmatprep.subr.bf16.mxu0 0
    %1801 = vmatpush1.bf16.msra.mxu0 0
    %1802 = vmatprep.subr.bf16.mxu0 0
    %1803 = vmatpush1.bf16.msra.mxu0 %v1786
    %1804 = vmatprep.subr.bf16.mxu0 0
    %1805 = vmatpush2.bf16.msra.mxu0 0
    %1806 = vmatprep.subr.bf16.mxu0 0
    %1807 = vmatpush2.bf16.msra.mxu0 0
    %1808 = vmatprep.subr.bf16.mxu0 0
    %1809 = vmatpush2.bf16.msra.mxu0 0
    %1810 = vmatprep.subr.bf16.mxu0 0
    %1811 = vmatpush2.bf16.msra.mxu0 0
    %1812 = vmatprep.subr.bf16.mxu0 0
    %1813 = vmatpush2.bf16.msra.mxu0 0
    %1814 = vmatprep.subr.bf16.mxu0 0
    %1815 = vmatpush2.bf16.msra.mxu0 0
    %1816 = vmatprep.subr.bf16.mxu0 0
    %1817 = vmatpush2.bf16.msra.mxu0 0
    %1818 = vmatprep.subr.bf16.mxu0 0
    %1819 = vmatpush2.bf16.msra.mxu0 0
    %1820 = vmatprep.mubr.bf16.mxu0 0
    %1821 = vmatmul.mubr.bf16.gmra.mxu0 %v1783
    %v1822 = vpop.f32.mrf.mxu0
    %v1823 = vadd.f32 0.0, %v1822
    %v1824 = vpop.f32.mrf.mxu0
    %v1825 = vpop.f32.mrf.mxu0
    %v1826 = vpop.f32.mrf.mxu0
    %1827 = vdwg.mxu0
    %v1829 = vsel %vm252, %v1781, 0
    %v1832 = vsel %vm374, %v1663, 0
    %1834 = vmatprep.subr.bf16.mxu0 0
    %1835 = vmatpush1.bf16.msra.mxu0 0
    %1836 = vmatprep.subr.bf16.mxu0 0
    %1837 = vmatpush1.bf16.msra.mxu0 0
    %1838 = vmatprep.subr.bf16.mxu0 0
    %1839 = vmatpush1.bf16.msra.mxu0 0
    %1840 = vmatprep.subr.bf16.mxu0 0
    %1841 = vmatpush1.bf16.msra.mxu0 0
    %1842 = vmatprep.subr.bf16.mxu0 0
    %1843 = vmatpush1.bf16.msra.mxu0 0
    %1844 = vmatprep.subr.bf16.mxu0 0
    %1845 = vmatpush1.bf16.msra.mxu0 0
    %1846 = vmatprep.subr.bf16.mxu0 0
    %1847 = vmatpush1.bf16.msra.mxu0 0
    %1848 = vmatprep.subr.bf16.mxu0 0
    %1849 = vmatpush1.bf16.msra.mxu0 %v1832
    %1850 = vmatprep.subr.bf16.mxu0 0
    %1851 = vmatpush2.bf16.msra.mxu0 0
    %1852 = vmatprep.subr.bf16.mxu0 0
    %1853 = vmatpush2.bf16.msra.mxu0 0
    %1854 = vmatprep.subr.bf16.mxu0 0
    %1855 = vmatpush2.bf16.msra.mxu0 0
    %1856 = vmatprep.subr.bf16.mxu0 0
    %1857 = vmatpush2.bf16.msra.mxu0 0
    %1858 = vmatprep.subr.bf16.mxu0 0
    %1859 = vmatpush2.bf16.msra.mxu0 0
    %1860 = vmatprep.subr.bf16.mxu0 0
    %1861 = vmatpush2.bf16.msra.mxu0 0
    %1862 = vmatprep.subr.bf16.mxu0 0
    %1863 = vmatpush2.bf16.msra.mxu0 0
    %1864 = vmatprep.subr.bf16.mxu0 0
    %1865 = vmatpush2.bf16.msra.mxu0 0
    %1866 = vmatprep.mubr.bf16.mxu0 0
    %1867 = vmatmul.mubr.bf16.gmra.mxu0 %v1829
    %v1868 = vpop.f32.mrf.mxu0
    %v1869 = vadd.f32 0.0, %v1868
    %v1870 = vpop.f32.mrf.mxu0
    %v1871 = vpop.f32.mrf.mxu0
    %v1872 = vpop.f32.mrf.mxu0
    %1873 = vdwg.mxu0
    %1875 = vrot.lane.b32.xlu0 %v1658, 120
    %v1876 = vpop.permute.xlu0 %1875
    %1878 = vrot.lane.b32.xlu0 %v1660, 120
    %v1879 = vpop.permute.xlu0 %1878
    %v1881 = vsel %vm252, %v1876, 0
    %v1884 = vsel %vm252, %v1879, 0
    %1886 = vmatprep.subr.bf16.mxu0 0
    %1887 = vmatpush1.bf16.xpose.msra.mxu0 0
    %1888 = vmatprep.subr.bf16.mxu0 0
    %1889 = vmatpush1.bf16.xpose.msra.mxu0 0
    %1890 = vmatprep.subr.bf16.mxu0 0
    %1891 = vmatpush1.bf16.xpose.msra.mxu0 0
    %1892 = vmatprep.subr.bf16.mxu0 0
    %1893 = vmatpush1.bf16.xpose.msra.mxu0 0
    %1894 = vmatprep.subr.bf16.mxu0 0
    %1895 = vmatpush1.bf16.xpose.msra.mxu0 0
    %1896 = vmatprep.subr.bf16.mxu0 0
    %1897 = vmatpush1.bf16.xpose.msra.mxu0 0
    %1898 = vmatprep.subr.bf16.mxu0 0
    %1899 = vmatpush1.bf16.xpose.msra.mxu0 0
    %1900 = vmatprep.subr.bf16.mxu0 0
    %1901 = vmatpush1.bf16.xpose.msra.mxu0 %v1884
    %1902 = vmatprep.subr.bf16.mxu0 0
    %1903 = vmatpush2.bf16.xpose.msra.mxu0 0
    %1904 = vmatprep.subr.bf16.mxu0 0
    %1905 = vmatpush2.bf16.xpose.msra.mxu0 0
    %1906 = vmatprep.subr.bf16.mxu0 0
    %1907 = vmatpush2.bf16.xpose.msra.mxu0 0
    %1908 = vmatprep.subr.bf16.mxu0 0
    %1909 = vmatpush2.bf16.xpose.msra.mxu0 0
    %1910 = vmatprep.subr.bf16.mxu0 0
    %1911 = vmatpush2.bf16.xpose.msra.mxu0 0
    %1912 = vmatprep.subr.bf16.mxu0 0
    %1913 = vmatpush2.bf16.xpose.msra.mxu0 0
    %1914 = vmatprep.subr.bf16.mxu0 0
    %1915 = vmatpush2.bf16.xpose.msra.mxu0 0
    %1916 = vmatprep.subr.bf16.mxu0 0
    %1917 = vmatpush2.bf16.xpose.msra.mxu0 0
    %1918 = vmatprep.mubr.bf16.mxu0 0
    %1919 = vmatmul.mubr.bf16.gmra.mxu0 %v1881
    %v1920 = vpop.f32.mrf.mxu0
    %v1921 = vadd.f32 0.0, %v1920
    %v1922 = vpop.f32.mrf.mxu0
    %v1923 = vpop.f32.mrf.mxu0
    %v1924 = vpop.f32.mrf.mxu0
    %1925 = vdwg.mxu0
    %1927 = vrot.lane.b32.xlu0 %v1659, 120
    %v1928 = vpop.permute.xlu0 %1927
    %1930 = vrot.lane.b32.xlu0 %v1661, 120
    %v1931 = vpop.permute.xlu0 %1930
    %v1933 = vsel %vm252, %v1928, 0
    %v1936 = vsel %vm252, %v1931, 0
    %1938 = vmatprep.subr.bf16.mxu0 0
    %1939 = vmatpush1.bf16.xpose.msra.mxu0 0
    %1940 = vmatprep.subr.bf16.mxu0 0
    %1941 = vmatpush1.bf16.xpose.msra.mxu0 0
    %1942 = vmatprep.subr.bf16.mxu0 0
    %1943 = vmatpush1.bf16.xpose.msra.mxu0 0
    %1944 = vmatprep.subr.bf16.mxu0 0
    %1945 = vmatpush1.bf16.xpose.msra.mxu0 0
    %1946 = vmatprep.subr.bf16.mxu0 0
    %1947 = vmatpush1.bf16.xpose.msra.mxu0 0
    %1948 = vmatprep.subr.bf16.mxu0 0
    %1949 = vmatpush1.bf16.xpose.msra.mxu0 0
    %1950 = vmatprep.subr.bf16.mxu0 0
    %1951 = vmatpush1.bf16.xpose.msra.mxu0 0
    %1952 = vmatprep.subr.bf16.mxu0 0
    %1953 = vmatpush1.bf16.xpose.msra.mxu0 %v1936
    %1954 = vmatprep.subr.bf16.mxu0 0
    %1955 = vmatpush2.bf16.xpose.msra.mxu0 0
    %1956 = vmatprep.subr.bf16.mxu0 0
    %1957 = vmatpush2.bf16.xpose.msra.mxu0 0
    %1958 = vmatprep.subr.bf16.mxu0 0
    %1959 = vmatpush2.bf16.xpose.msra.mxu0 0
    %1960 = vmatprep.subr.bf16.mxu0 0
    %1961 = vmatpush2.bf16.xpose.msra.mxu0 0
    %1962 = vmatprep.subr.bf16.mxu0 0
    %1963 = vmatpush2.bf16.xpose.msra.mxu0 0
    %1964 = vmatprep.subr.bf16.mxu0 0
    %1965 = vmatpush2.bf16.xpose.msra.mxu0 0
    %1966 = vmatprep.subr.bf16.mxu0 0
    %1967 = vmatpush2.bf16.xpose.msra.mxu0 0
    %1968 = vmatprep.subr.bf16.mxu0 0
    %1969 = vmatpush2.bf16.xpose.msra.mxu0 0
    %1970 = vmatprep.mubr.bf16.mxu0 0
    %1971 = vmatmul.mubr.bf16.gmra.mxu0 %v1933
    %v1972 = vpop.f32.mrf.mxu0
    %v1973 = vadd.f32 0.0, %v1972
    %v1974 = vpop.f32.mrf.mxu0
    %v1975 = vpop.f32.mrf.mxu0
    %v1976 = vpop.f32.mrf.mxu0
    %1977 = vdwg.mxu0
    %v1978 = vmul.f32 %v1921, 0.35355338
    %v1979 = vmul.f32 %v1973, 0.35355338
    %v1980 = vsel %vm252, %v1978, -inf
    %1981 = vmax.xlane.f32.xlu0 %v1980
    %v1982 = vpop.xlane.xlu0 %1981
    %v1983 = vsel %vm252, %v1979, -inf
    %1984 = vmax.xlane.f32.xlu0 %v1983
    %v1985 = vpop.xlane.xlu0 %1984
    %v1986 = vsub.f32 %v1978, %v1982
    %v1987 = vsub.f32 %v1979, %v1985
    %v1988 = vmul.f32 %v1986, 1.442695
    %v1989 = vpow.pop %v1988
    %v1990 = vmul.f32 %v1987, 1.442695
    %v1991 = vpow.pop %v1990
    %v1992 = vsel %vm252, %v1989, 0.0
    %1993 = vadd.xlane.f32.xlu0 %v1992
    %v1994 = vpop.xlane.xlu0 %1993
    %v1995 = vsel %vm252, %v1991, 0.0
    %1996 = vadd.xlane.f32.xlu0 %v1995
    %v1997 = vpop.xlane.xlu0 %1996
    %v1998 = vrcp.pop %v1994
    %v1999 = vrcp.pop %v1997
    %v2000 = vmul.f32 %v1989, %v1998
    %v2001 = vmul.f32 %v1991, %v1999
    %v2002 = vpack.c.bf16 %v2000, %v2000
    %v2003 = vpack.c.bf16 %v2001, %v2001
    %2005 = vrot.lane.b32.xlu0 %v1662, 120
    %v2006 = vpop.permute.xlu0 %2005
    %v2008 = vsel %vm252, %v2002, 0
    %v2011 = vsel %vm374, %v2006, 0
    %2013 = vmatprep.subr.bf16.mxu0 0
    %2014 = vmatpush1.bf16.msra.mxu0 0
    %2015 = vmatprep.subr.bf16.mxu0 0
    %2016 = vmatpush1.bf16.msra.mxu0 0
    %2017 = vmatprep.subr.bf16.mxu0 0
    %2018 = vmatpush1.bf16.msra.mxu0 0
    %2019 = vmatprep.subr.bf16.mxu0 0
    %2020 = vmatpush1.bf16.msra.mxu0 0
    %2021 = vmatprep.subr.bf16.mxu0 0
    %2022 = vmatpush1.bf16.msra.mxu0 0
    %2023 = vmatprep.subr.bf16.mxu0 0
    %2024 = vmatpush1.bf16.msra.mxu0 0
    %2025 = vmatprep.subr.bf16.mxu0 0
    %2026 = vmatpush1.bf16.msra.mxu0 0
    %2027 = vmatprep.subr.bf16.mxu0 0
    %2028 = vmatpush1.bf16.msra.mxu0 %v2011
    %2029 = vmatprep.subr.bf16.mxu0 0
    %2030 = vmatpush2.bf16.msra.mxu0 0
    %2031 = vmatprep.subr.bf16.mxu0 0
    %2032 = vmatpush2.bf16.msra.mxu0 0
    %2033 = vmatprep.subr.bf16.mxu0 0
    %2034 = vmatpush2.bf16.msra.mxu0 0
    %2035 = vmatprep.subr.bf16.mxu0 0
    %2036 = vmatpush2.bf16.msra.mxu0 0
    %2037 = vmatprep.subr.bf16.mxu0 0
    %2038 = vmatpush2.bf16.msra.mxu0 0
    %2039 = vmatprep.subr.bf16.mxu0 0
    %2040 = vmatpush2.bf16.msra.mxu0 0
    %2041 = vmatprep.subr.bf16.mxu0 0
    %2042 = vmatpush2.bf16.msra.mxu0 0
    %2043 = vmatprep.subr.bf16.mxu0 0
    %2044 = vmatpush2.bf16.msra.mxu0 0
    %2045 = vmatprep.mubr.bf16.mxu0 0
    %2046 = vmatmul.mubr.bf16.gmra.mxu0 %v2008
    %v2047 = vpop.f32.mrf.mxu0
    %v2048 = vadd.f32 0.0, %v2047
    %v2049 = vpop.f32.mrf.mxu0
    %v2050 = vpop.f32.mrf.mxu0
    %v2051 = vpop.f32.mrf.mxu0
    %2052 = vdwg.mxu0
    %2054 = vrot.lane.b32.xlu0 %v1663, 120
    %v2055 = vpop.permute.xlu0 %2054
    %v2057 = vsel %vm252, %v2003, 0
    %v2060 = vsel %vm374, %v2055, 0
    %2062 = vmatprep.subr.bf16.mxu0 0
    %2063 = vmatpush1.bf16.msra.mxu0 0
    %2064 = vmatprep.subr.bf16.mxu0 0
    %2065 = vmatpush1.bf16.msra.mxu0 0
    %2066 = vmatprep.subr.bf16.mxu0 0
    %2067 = vmatpush1.bf16.msra.mxu0 0
    %2068 = vmatprep.subr.bf16.mxu0 0
    %2069 = vmatpush1.bf16.msra.mxu0 0
    %2070 = vmatprep.subr.bf16.mxu0 0
    %2071 = vmatpush1.bf16.msra.mxu0 0
    %2072 = vmatprep.subr.bf16.mxu0 0
    %2073 = vmatpush1.bf16.msra.mxu0 0
    %2074 = vmatprep.subr.bf16.mxu0 0
    %2075 = vmatpush1.bf16.msra.mxu0 0
    %2076 = vmatprep.subr.bf16.mxu0 0
    %2077 = vmatpush1.bf16.msra.mxu0 %v2060
    %2078 = vmatprep.subr.bf16.mxu0 0
    %2079 = vmatpush2.bf16.msra.mxu0 0
    %2080 = vmatprep.subr.bf16.mxu0 0
    %2081 = vmatpush2.bf16.msra.mxu0 0
    %2082 = vmatprep.subr.bf16.mxu0 0
    %2083 = vmatpush2.bf16.msra.mxu0 0
    %2084 = vmatprep.subr.bf16.mxu0 0
    %2085 = vmatpush2.bf16.msra.mxu0 0
    %2086 = vmatprep.subr.bf16.mxu0 0
    %2087 = vmatpush2.bf16.msra.mxu0 0
    %2088 = vmatprep.subr.bf16.mxu0 0
    %2089 = vmatpush2.bf16.msra.mxu0 0
    %2090 = vmatprep.subr.bf16.mxu0 0
    %2091 = vmatpush2.bf16.msra.mxu0 0
    %2092 = vmatprep.subr.bf16.mxu0 0
    %2093 = vmatpush2.bf16.msra.mxu0 0
    %2094 = vmatprep.mubr.bf16.mxu0 0
    %2095 = vmatmul.mubr.bf16.gmra.mxu0 %v2057
    %v2096 = vpop.f32.mrf.mxu0
    %v2097 = vadd.f32 0.0, %v2096
    %v2098 = vpop.f32.mrf.mxu0
    %v2099 = vpop.f32.mrf.mxu0
    %v2100 = vpop.f32.mrf.mxu0
    %2101 = vdwg.mxu0
    %2102 = vrot.lane.b32.xlu0 %v1658, 112
    %v2103 = vpop.permute.xlu0 %2102
    %2104 = vrot.lane.b32.xlu0 %v1660, 112
    %v2105 = vpop.permute.xlu0 %2104
    %v2107 = vsel %vm252, %v2103, 0
    %v2110 = vsel %vm252, %v2105, 0
    %2112 = vmatprep.subr.bf16.mxu0 0
    %2113 = vmatpush1.bf16.xpose.msra.mxu0 0
    %2114 = vmatprep.subr.bf16.mxu0 0
    %2115 = vmatpush1.bf16.xpose.msra.mxu0 0
    %2116 = vmatprep.subr.bf16.mxu0 0
    %2117 = vmatpush1.bf16.xpose.msra.mxu0 0
    %2118 = vmatprep.subr.bf16.mxu0 0
    %2119 = vmatpush1.bf16.xpose.msra.mxu0 0
    %2120 = vmatprep.subr.bf16.mxu0 0
    %2121 = vmatpush1.bf16.xpose.msra.mxu0 0
    %2122 = vmatprep.subr.bf16.mxu0 0
    %2123 = vmatpush1.bf16.xpose.msra.mxu0 0
    %2124 = vmatprep.subr.bf16.mxu0 0
    %2125 = vmatpush1.bf16.xpose.msra.mxu0 0
    %2126 = vmatprep.subr.bf16.mxu0 0
    %2127 = vmatpush1.bf16.xpose.msra.mxu0 %v2110
    %2128 = vmatprep.subr.bf16.mxu0 0
    %2129 = vmatpush2.bf16.xpose.msra.mxu0 0
    %2130 = vmatprep.subr.bf16.mxu0 0
    %2131 = vmatpush2.bf16.xpose.msra.mxu0 0
    %2132 = vmatprep.subr.bf16.mxu0 0
    %2133 = vmatpush2.bf16.xpose.msra.mxu0 0
    %2134 = vmatprep.subr.bf16.mxu0 0
    %2135 = vmatpush2.bf16.xpose.msra.mxu0 0
    %2136 = vmatprep.subr.bf16.mxu0 0
    %2137 = vmatpush2.bf16.xpose.msra.mxu0 0
    %2138 = vmatprep.subr.bf16.mxu0 0
    %2139 = vmatpush2.bf16.xpose.msra.mxu0 0
    %2140 = vmatprep.subr.bf16.mxu0 0
    %2141 = vmatpush2.bf16.xpose.msra.mxu0 0
    %2142 = vmatprep.subr.bf16.mxu0 0
    %2143 = vmatpush2.bf16.xpose.msra.mxu0 0
    %2144 = vmatprep.mubr.bf16.mxu0 0
    %2145 = vmatmul.mubr.bf16.gmra.mxu0 %v2107
    %v2146 = vpop.f32.mrf.mxu0
    %v2147 = vadd.f32 0.0, %v2146
    %v2148 = vpop.f32.mrf.mxu0
    %v2149 = vpop.f32.mrf.mxu0
    %v2150 = vpop.f32.mrf.mxu0
    %2151 = vdwg.mxu0
    %2152 = vrot.lane.b32.xlu0 %v1659, 112
    %v2153 = vpop.permute.xlu0 %2152
    %2154 = vrot.lane.b32.xlu0 %v1661, 112
    %v2155 = vpop.permute.xlu0 %2154
    %v2157 = vsel %vm252, %v2153, 0
    %v2160 = vsel %vm252, %v2155, 0
    %2162 = vmatprep.subr.bf16.mxu0 0
    %2163 = vmatpush1.bf16.xpose.msra.mxu0 0
    %2164 = vmatprep.subr.bf16.mxu0 0
    %2165 = vmatpush1.bf16.xpose.msra.mxu0 0
    %2166 = vmatprep.subr.bf16.mxu0 0
    %2167 = vmatpush1.bf16.xpose.msra.mxu0 0
    %2168 = vmatprep.subr.bf16.mxu0 0
    %2169 = vmatpush1.bf16.xpose.msra.mxu0 0
    %2170 = vmatprep.subr.bf16.mxu0 0
    %2171 = vmatpush1.bf16.xpose.msra.mxu0 0
    %2172 = vmatprep.subr.bf16.mxu0 0
    %2173 = vmatpush1.bf16.xpose.msra.mxu0 0
    %2174 = vmatprep.subr.bf16.mxu0 0
    %2175 = vmatpush1.bf16.xpose.msra.mxu0 0
    %2176 = vmatprep.subr.bf16.mxu0 0
    %2177 = vmatpush1.bf16.xpose.msra.mxu0 %v2160
    %2178 = vmatprep.subr.bf16.mxu0 0
    %2179 = vmatpush2.bf16.xpose.msra.mxu0 0
    %2180 = vmatprep.subr.bf16.mxu0 0
    %2181 = vmatpush2.bf16.xpose.msra.mxu0 0
    %2182 = vmatprep.subr.bf16.mxu0 0
    %2183 = vmatpush2.bf16.xpose.msra.mxu0 0
    %2184 = vmatprep.subr.bf16.mxu0 0
    %2185 = vmatpush2.bf16.xpose.msra.mxu0 0
    %2186 = vmatprep.subr.bf16.mxu0 0
    %2187 = vmatpush2.bf16.xpose.msra.mxu0 0
    %2188 = vmatprep.subr.bf16.mxu0 0
    %2189 = vmatpush2.bf16.xpose.msra.mxu0 0
    %2190 = vmatprep.subr.bf16.mxu0 0
    %2191 = vmatpush2.bf16.xpose.msra.mxu0 0
    %2192 = vmatprep.subr.bf16.mxu0 0
    %2193 = vmatpush2.bf16.xpose.msra.mxu0 0
    %2194 = vmatprep.mubr.bf16.mxu0 0
    %2195 = vmatmul.mubr.bf16.gmra.mxu0 %v2157
    %v2196 = vpop.f32.mrf.mxu0
    %v2197 = vadd.f32 0.0, %v2196
    %v2198 = vpop.f32.mrf.mxu0
    %v2199 = vpop.f32.mrf.mxu0
    %v2200 = vpop.f32.mrf.mxu0
    %2201 = vdwg.mxu0
    %v2202 = vmul.f32 %v2147, 0.35355338
    %v2203 = vmul.f32 %v2197, 0.35355338
    %v2204 = vsel %vm252, %v2202, -inf
    %2205 = vmax.xlane.f32.xlu0 %v2204
    %v2206 = vpop.xlane.xlu0 %2205
    %v2207 = vsel %vm252, %v2203, -inf
    %2208 = vmax.xlane.f32.xlu0 %v2207
    %v2209 = vpop.xlane.xlu0 %2208
    %v2210 = vsub.f32 %v2202, %v2206
    %v2211 = vsub.f32 %v2203, %v2209
    %v2212 = vmul.f32 %v2210, 1.442695
    %v2213 = vpow.pop %v2212
    %v2214 = vmul.f32 %v2211, 1.442695
    %v2215 = vpow.pop %v2214
    %v2216 = vsel %vm252, %v2213, 0.0
    %2217 = vadd.xlane.f32.xlu0 %v2216
    %v2218 = vpop.xlane.xlu0 %2217
    %v2219 = vsel %vm252, %v2215, 0.0
    %2220 = vadd.xlane.f32.xlu0 %v2219
    %v2221 = vpop.xlane.xlu0 %2220
    %v2222 = vrcp.pop %v2218
    %v2223 = vrcp.pop %v2221
    %v2224 = vmul.f32 %v2213, %v2222
    %v2225 = vmul.f32 %v2215, %v2223
    %v2226 = vpack.c.bf16 %v2224, %v2224
    %v2227 = vpack.c.bf16 %v2225, %v2225
    %2228 = vrot.lane.b32.xlu0 %v1662, 112
    %v2229 = vpop.permute.xlu0 %2228
    %v2231 = vsel %vm252, %v2226, 0
    %v2234 = vsel %vm374, %v2229, 0
    %2236 = vmatprep.subr.bf16.mxu0 0
    %2237 = vmatpush1.bf16.msra.mxu0 0
    %2238 = vmatprep.subr.bf16.mxu0 0
    %2239 = vmatpush1.bf16.msra.mxu0 0
    %2240 = vmatprep.subr.bf16.mxu0 0
    %2241 = vmatpush1.bf16.msra.mxu0 0
    %2242 = vmatprep.subr.bf16.mxu0 0
    %2243 = vmatpush1.bf16.msra.mxu0 0
    %2244 = vmatprep.subr.bf16.mxu0 0
    %2245 = vmatpush1.bf16.msra.mxu0 0
    %2246 = vmatprep.subr.bf16.mxu0 0
    %2247 = vmatpush1.bf16.msra.mxu0 0
    %2248 = vmatprep.subr.bf16.mxu0 0
    %2249 = vmatpush1.bf16.msra.mxu0 0
    %2250 = vmatprep.subr.bf16.mxu0 0
    %2251 = vmatpush1.bf16.msra.mxu0 %v2234
    %2252 = vmatprep.subr.bf16.mxu0 0
    %2253 = vmatpush2.bf16.msra.mxu0 0
    %2254 = vmatprep.subr.bf16.mxu0 0
    %2255 = vmatpush2.bf16.msra.mxu0 0
    %2256 = vmatprep.subr.bf16.mxu0 0
    %2257 = vmatpush2.bf16.msra.mxu0 0
    %2258 = vmatprep.subr.bf16.mxu0 0
    %2259 = vmatpush2.bf16.msra.mxu0 0
    %2260 = vmatprep.subr.bf16.mxu0 0
    %2261 = vmatpush2.bf16.msra.mxu0 0
    %2262 = vmatprep.subr.bf16.mxu0 0
    %2263 = vmatpush2.bf16.msra.mxu0 0
    %2264 = vmatprep.subr.bf16.mxu0 0
    %2265 = vmatpush2.bf16.msra.mxu0 0
    %2266 = vmatprep.subr.bf16.mxu0 0
    %2267 = vmatpush2.bf16.msra.mxu0 0
    %2268 = vmatprep.mubr.bf16.mxu0 0
    %2269 = vmatmul.mubr.bf16.gmra.mxu0 %v2231
    %v2270 = vpop.f32.mrf.mxu0
    %v2271 = vadd.f32 0.0, %v2270
    %v2272 = vpop.f32.mrf.mxu0
    %v2273 = vpop.f32.mrf.mxu0
    %v2274 = vpop.f32.mrf.mxu0
    %2275 = vdwg.mxu0
    %2276 = vrot.lane.b32.xlu0 %v1663, 112
    %v2277 = vpop.permute.xlu0 %2276
    %v2279 = vsel %vm252, %v2227, 0
    %v2282 = vsel %vm374, %v2277, 0
    %2284 = vmatprep.subr.bf16.mxu0 0
    %2285 = vmatpush1.bf16.msra.mxu0 0
    %2286 = vmatprep.subr.bf16.mxu0 0
    %2287 = vmatpush1.bf16.msra.mxu0 0
    %2288 = vmatprep.subr.bf16.mxu0 0
    %2289 = vmatpush1.bf16.msra.mxu0 0
    %2290 = vmatprep.subr.bf16.mxu0 0
    %2291 = vmatpush1.bf16.msra.mxu0 0
    %2292 = vmatprep.subr.bf16.mxu0 0
    %2293 = vmatpush1.bf16.msra.mxu0 0
    %2294 = vmatprep.subr.bf16.mxu0 0
    %2295 = vmatpush1.bf16.msra.mxu0 0
    %2296 = vmatprep.subr.bf16.mxu0 0
    %2297 = vmatpush1.bf16.msra.mxu0 0
    %2298 = vmatprep.subr.bf16.mxu0 0
    %2299 = vmatpush1.bf16.msra.mxu0 %v2282
    %2300 = vmatprep.subr.bf16.mxu0 0
    %2301 = vmatpush2.bf16.msra.mxu0 0
    %2302 = vmatprep.subr.bf16.mxu0 0
    %2303 = vmatpush2.bf16.msra.mxu0 0
    %2304 = vmatprep.subr.bf16.mxu0 0
    %2305 = vmatpush2.bf16.msra.mxu0 0
    %2306 = vmatprep.subr.bf16.mxu0 0
    %2307 = vmatpush2.bf16.msra.mxu0 0
    %2308 = vmatprep.subr.bf16.mxu0 0
    %2309 = vmatpush2.bf16.msra.mxu0 0
    %2310 = vmatprep.subr.bf16.mxu0 0
    %2311 = vmatpush2.bf16.msra.mxu0 0
    %2312 = vmatprep.subr.bf16.mxu0 0
    %2313 = vmatpush2.bf16.msra.mxu0 0
    %2314 = vmatprep.subr.bf16.mxu0 0
    %2315 = vmatpush2.bf16.msra.mxu0 0
    %2316 = vmatprep.mubr.bf16.mxu0 0
    %2317 = vmatmul.mubr.bf16.gmra.mxu0 %v2279
    %v2318 = vpop.f32.mrf.mxu0
    %v2319 = vadd.f32 0.0, %v2318
    %v2320 = vpop.f32.mrf.mxu0
    %v2321 = vpop.f32.mrf.mxu0
    %v2322 = vpop.f32.mrf.mxu0
    %2323 = vdwg.mxu0
    %2324 = vrot.lane.b32.xlu0 %v1658, 104
    %v2325 = vpop.permute.xlu0 %2324
    %2326 = vrot.lane.b32.xlu0 %v1660, 104
    %v2327 = vpop.permute.xlu0 %2326
    %v2329 = vsel %vm252, %v2325, 0
    %v2332 = vsel %vm252, %v2327, 0
    %2334 = vmatprep.subr.bf16.mxu0 0
    %2335 = vmatpush1.bf16.xpose.msra.mxu0 0
    %2336 = vmatprep.subr.bf16.mxu0 0
    %2337 = vmatpush1.bf16.xpose.msra.mxu0 0
    %2338 = vmatprep.subr.bf16.mxu0 0
    %2339 = vmatpush1.bf16.xpose.msra.mxu0 0
    %2340 = vmatprep.subr.bf16.mxu0 0
    %2341 = vmatpush1.bf16.xpose.msra.mxu0 0
    %2342 = vmatprep.subr.bf16.mxu0 0
    %2343 = vmatpush1.bf16.xpose.msra.mxu0 0
    %2344 = vmatprep.subr.bf16.mxu0 0
    %2345 = vmatpush1.bf16.xpose.msra.mxu0 0
    %2346 = vmatprep.subr.bf16.mxu0 0
    %2347 = vmatpush1.bf16.xpose.msra.mxu0 0
    %2348 = vmatprep.subr.bf16.mxu0 0
    %2349 = vmatpush1.bf16.xpose.msra.mxu0 %v2332
    %2350 = vmatprep.subr.bf16.mxu0 0
    %2351 = vmatpush2.bf16.xpose.msra.mxu0 0
    %2352 = vmatprep.subr.bf16.mxu0 0
    %2353 = vmatpush2.bf16.xpose.msra.mxu0 0
    %2354 = vmatprep.subr.bf16.mxu0 0
    %2355 = vmatpush2.bf16.xpose.msra.mxu0 0
    %2356 = vmatprep.subr.bf16.mxu0 0
    %2357 = vmatpush2.bf16.xpose.msra.mxu0 0
    %2358 = vmatprep.subr.bf16.mxu0 0
    %2359 = vmatpush2.bf16.xpose.msra.mxu0 0
    %2360 = vmatprep.subr.bf16.mxu0 0
    %2361 = vmatpush2.bf16.xpose.msra.mxu0 0
    %2362 = vmatprep.subr.bf16.mxu0 0
    %2363 = vmatpush2.bf16.xpose.msra.mxu0 0
    %2364 = vmatprep.subr.bf16.mxu0 0
    %2365 = vmatpush2.bf16.xpose.msra.mxu0 0
    %2366 = vmatprep.mubr.bf16.mxu0 0
    %2367 = vmatmul.mubr.bf16.gmra.mxu0 %v2329
    %v2368 = vpop.f32.mrf.mxu0
    %v2369 = vadd.f32 0.0, %v2368
    %v2370 = vpop.f32.mrf.mxu0
    %v2371 = vpop.f32.mrf.mxu0
    %v2372 = vpop.f32.mrf.mxu0
    %2373 = vdwg.mxu0
    %2374 = vrot.lane.b32.xlu0 %v1659, 104
    %v2375 = vpop.permute.xlu0 %2374
    %2376 = vrot.lane.b32.xlu0 %v1661, 104
    %v2377 = vpop.permute.xlu0 %2376
    %v2379 = vsel %vm252, %v2375, 0
    %v2382 = vsel %vm252, %v2377, 0
    %2384 = vmatprep.subr.bf16.mxu0 0
    %2385 = vmatpush1.bf16.xpose.msra.mxu0 0
    %2386 = vmatprep.subr.bf16.mxu0 0
    %2387 = vmatpush1.bf16.xpose.msra.mxu0 0
    %2388 = vmatprep.subr.bf16.mxu0 0
    %2389 = vmatpush1.bf16.xpose.msra.mxu0 0
    %2390 = vmatprep.subr.bf16.mxu0 0
    %2391 = vmatpush1.bf16.xpose.msra.mxu0 0
    %2392 = vmatprep.subr.bf16.mxu0 0
    %2393 = vmatpush1.bf16.xpose.msra.mxu0 0
    %2394 = vmatprep.subr.bf16.mxu0 0
    %2395 = vmatpush1.bf16.xpose.msra.mxu0 0
    %2396 = vmatprep.subr.bf16.mxu0 0
    %2397 = vmatpush1.bf16.xpose.msra.mxu0 0
    %2398 = vmatprep.subr.bf16.mxu0 0
    %2399 = vmatpush1.bf16.xpose.msra.mxu0 %v2382
    %2400 = vmatprep.subr.bf16.mxu0 0
    %2401 = vmatpush2.bf16.xpose.msra.mxu0 0
    %2402 = vmatprep.subr.bf16.mxu0 0
    %2403 = vmatpush2.bf16.xpose.msra.mxu0 0
    %2404 = vmatprep.subr.bf16.mxu0 0
    %2405 = vmatpush2.bf16.xpose.msra.mxu0 0
    %2406 = vmatprep.subr.bf16.mxu0 0
    %2407 = vmatpush2.bf16.xpose.msra.mxu0 0
    %2408 = vmatprep.subr.bf16.mxu0 0
    %2409 = vmatpush2.bf16.xpose.msra.mxu0 0
    %2410 = vmatprep.subr.bf16.mxu0 0
    %2411 = vmatpush2.bf16.xpose.msra.mxu0 0
    %2412 = vmatprep.subr.bf16.mxu0 0
    %2413 = vmatpush2.bf16.xpose.msra.mxu0 0
    %2414 = vmatprep.subr.bf16.mxu0 0
    %2415 = vmatpush2.bf16.xpose.msra.mxu0 0
    %2416 = vmatprep.mubr.bf16.mxu0 0
    %2417 = vmatmul.mubr.bf16.gmra.mxu0 %v2379
    %v2418 = vpop.f32.mrf.mxu0
    %v2419 = vadd.f32 0.0, %v2418
    %v2420 = vpop.f32.mrf.mxu0
    %v2421 = vpop.f32.mrf.mxu0
    %v2422 = vpop.f32.mrf.mxu0
    %2423 = vdwg.mxu0
    %v2424 = vmul.f32 %v2369, 0.35355338
    %v2425 = vmul.f32 %v2419, 0.35355338
    %v2426 = vsel %vm252, %v2424, -inf
    %2427 = vmax.xlane.f32.xlu0 %v2426
    %v2428 = vpop.xlane.xlu0 %2427
    %v2429 = vsel %vm252, %v2425, -inf
    %2430 = vmax.xlane.f32.xlu0 %v2429
    %v2431 = vpop.xlane.xlu0 %2430
    %v2432 = vsub.f32 %v2424, %v2428
    %v2433 = vsub.f32 %v2425, %v2431
    %v2434 = vmul.f32 %v2432, 1.442695
    %v2435 = vpow.pop %v2434
    %v2436 = vmul.f32 %v2433, 1.442695
    %v2437 = vpow.pop %v2436
    %v2438 = vsel %vm252, %v2435, 0.0
    %2439 = vadd.xlane.f32.xlu0 %v2438
    %v2440 = vpop.xlane.xlu0 %2439
    %v2441 = vsel %vm252, %v2437, 0.0
    %2442 = vadd.xlane.f32.xlu0 %v2441
    %v2443 = vpop.xlane.xlu0 %2442
    %v2444 = vrcp.pop %v2440
    %v2445 = vrcp.pop %v2443
    %v2446 = vmul.f32 %v2435, %v2444
    %v2447 = vmul.f32 %v2437, %v2445
    %v2448 = vpack.c.bf16 %v2446, %v2446
    %v2449 = vpack.c.bf16 %v2447, %v2447
    %2450 = vrot.lane.b32.xlu0 %v1662, 104
    %v2451 = vpop.permute.xlu0 %2450
    %v2453 = vsel %vm252, %v2448, 0
    %v2456 = vsel %vm374, %v2451, 0
    %2458 = vmatprep.subr.bf16.mxu0 0
    %2459 = vmatpush1.bf16.msra.mxu0 0
    %2460 = vmatprep.subr.bf16.mxu0 0
    %2461 = vmatpush1.bf16.msra.mxu0 0
    %2462 = vmatprep.subr.bf16.mxu0 0
    %2463 = vmatpush1.bf16.msra.mxu0 0
    %2464 = vmatprep.subr.bf16.mxu0 0
    %2465 = vmatpush1.bf16.msra.mxu0 0
    %2466 = vmatprep.subr.bf16.mxu0 0
    %2467 = vmatpush1.bf16.msra.mxu0 0
    %2468 = vmatprep.subr.bf16.mxu0 0
    %2469 = vmatpush1.bf16.msra.mxu0 0
    %2470 = vmatprep.subr.bf16.mxu0 0
    %2471 = vmatpush1.bf16.msra.mxu0 0
    %2472 = vmatprep.subr.bf16.mxu0 0
    %2473 = vmatpush1.bf16.msra.mxu0 %v2456
    %2474 = vmatprep.subr.bf16.mxu0 0
    %2475 = vmatpush2.bf16.msra.mxu0 0
    %2476 = vmatprep.subr.bf16.mxu0 0
    %2477 = vmatpush2.bf16.msra.mxu0 0
    %2478 = vmatprep.subr.bf16.mxu0 0
    %2479 = vmatpush2.bf16.msra.mxu0 0
    %2480 = vmatprep.subr.bf16.mxu0 0
    %2481 = vmatpush2.bf16.msra.mxu0 0
    %2482 = vmatprep.subr.bf16.mxu0 0
    %2483 = vmatpush2.bf16.msra.mxu0 0
    %2484 = vmatprep.subr.bf16.mxu0 0
    %2485 = vmatpush2.bf16.msra.mxu0 0
    %2486 = vmatprep.subr.bf16.mxu0 0
    %2487 = vmatpush2.bf16.msra.mxu0 0
    %2488 = vmatprep.subr.bf16.mxu0 0
    %2489 = vmatpush2.bf16.msra.mxu0 0
    %2490 = vmatprep.mubr.bf16.mxu0 0
    %2491 = vmatmul.mubr.bf16.gmra.mxu0 %v2453
    %v2492 = vpop.f32.mrf.mxu0
    %v2493 = vadd.f32 0.0, %v2492
    %v2494 = vpop.f32.mrf.mxu0
    %v2495 = vpop.f32.mrf.mxu0
    %v2496 = vpop.f32.mrf.mxu0
    %2497 = vdwg.mxu0
    %2498 = vrot.lane.b32.xlu0 %v1663, 104
    %v2499 = vpop.permute.xlu0 %2498
    %v2501 = vsel %vm252, %v2449, 0
    %v2504 = vsel %vm374, %v2499, 0
    %2506 = vmatprep.subr.bf16.mxu0 0
    %2507 = vmatpush1.bf16.msra.mxu0 0
    %2508 = vmatprep.subr.bf16.mxu0 0
    %2509 = vmatpush1.bf16.msra.mxu0 0
    %2510 = vmatprep.subr.bf16.mxu0 0
    %2511 = vmatpush1.bf16.msra.mxu0 0
    %2512 = vmatprep.subr.bf16.mxu0 0
    %2513 = vmatpush1.bf16.msra.mxu0 0
    %2514 = vmatprep.subr.bf16.mxu0 0
    %2515 = vmatpush1.bf16.msra.mxu0 0
    %2516 = vmatprep.subr.bf16.mxu0 0
    %2517 = vmatpush1.bf16.msra.mxu0 0
    %2518 = vmatprep.subr.bf16.mxu0 0
    %2519 = vmatpush1.bf16.msra.mxu0 0
    %2520 = vmatprep.subr.bf16.mxu0 0
    %2521 = vmatpush1.bf16.msra.mxu0 %v2504
    %2522 = vmatprep.subr.bf16.mxu0 0
    %2523 = vmatpush2.bf16.msra.mxu0 0
    %2524 = vmatprep.subr.bf16.mxu0 0
    %2525 = vmatpush2.bf16.msra.mxu0 0
    %2526 = vmatprep.subr.bf16.mxu0 0
    %2527 = vmatpush2.bf16.msra.mxu0 0
    %2528 = vmatprep.subr.bf16.mxu0 0
    %2529 = vmatpush2.bf16.msra.mxu0 0
    %2530 = vmatprep.subr.bf16.mxu0 0
    %2531 = vmatpush2.bf16.msra.mxu0 0
    %2532 = vmatprep.subr.bf16.mxu0 0
    %2533 = vmatpush2.bf16.msra.mxu0 0
    %2534 = vmatprep.subr.bf16.mxu0 0
    %2535 = vmatpush2.bf16.msra.mxu0 0
    %2536 = vmatprep.subr.bf16.mxu0 0
    %2537 = vmatpush2.bf16.msra.mxu0 0
    %2538 = vmatprep.mubr.bf16.mxu0 0
    %2539 = vmatmul.mubr.bf16.gmra.mxu0 %v2501
    %v2540 = vpop.f32.mrf.mxu0
    %v2541 = vadd.f32 0.0, %v2540
    %v2542 = vpop.f32.mrf.mxu0
    %v2543 = vpop.f32.mrf.mxu0
    %v2544 = vpop.f32.mrf.mxu0
    %2545 = vdwg.mxu0
    %2548 = vrot.lane.b32.xlu0 %v2048, 8
    %v2549 = vpop.permute.xlu0 %2548
    %2550 = vrot.lane.b32.xlu0 %v2097, 8
    %v2551 = vpop.permute.xlu0 %2550
    %2556 = vrot.lane.b32.xlu0 %v2271, 16
    %v2557 = vpop.permute.xlu0 %2556
    %2558 = vrot.lane.b32.xlu0 %v2319, 16
    %v2559 = vpop.permute.xlu0 %2558
    %2564 = vrot.lane.b32.xlu0 %v2493, 24
    %v2565 = vpop.permute.xlu0 %2564
    %2566 = vrot.lane.b32.xlu0 %v2541, 24
    %v2567 = vpop.permute.xlu0 %2566
    %v2570 = vsel %vm252, %v1823, %v2549
    %v2571 = vsel %vm252, %v1869, %v2551
    %v2572 = vsel %vm1162, %v2570, %v2557
    %v2573 = vsel %vm1162, %v2571, %v2559
    %v2574 = vsel %vm1165, %v2572, %v2565
    %v2575 = vsel %vm1165, %v2573, %v2567
    %v2576 = vpack.c.bf16 %v2575, %v2574
    %v2577 = vlaneseq
    %v2578 = vshrl.u32 %v2577, 7
    %v2579 = vsub.s32 0, %v2578
    %v2580 = vrot.slane %v1480, %v2579
    %v2585 = vunpack.c.l.b16 %v1460
    %v2586 = vunpack.c.l.b16 %v1461
    %v2587 = vunpack.c.l.b16 %v1462
    %v2588 = vunpack.c.l.b16 %v1463
    %v2589 = vpack.c.b16 %v2586, %v2585
    %v2590 = vpack.c.b16 %v2588, %v2587
    %v2594 = vsel %vm84, %v2576, 0
    %2596 = vmatprep.subr.bf16.mxu0 0
    %2597 = vmatpush1.bf16.msra.mxu0 0
    %2598 = vmatprep.subr.bf16.mxu0 0
    %2599 = vmatpush1.bf16.msra.mxu0 0
    %2600 = vmatprep.subr.bf16.mxu0 0
    %2601 = vmatpush1.bf16.msra.mxu0 0
    %2602 = vmatprep.subr.bf16.mxu0 0
    %2603 = vmatpush1.bf16.msra.mxu0 0
    %2604 = vmatprep.subr.bf16.mxu0 0
    %2605 = vmatpush1.bf16.msra.mxu0 0
    %2606 = vmatprep.subr.bf16.mxu0 0
    %2607 = vmatpush1.bf16.msra.mxu0 0
    %2608 = vmatprep.subr.bf16.mxu0 0
    %2609 = vmatpush1.bf16.msra.mxu0 %v2590
    %2610 = vmatprep.subr.bf16.mxu0 0
    %2611 = vmatpush1.bf16.msra.mxu0 %v2589
    %2612 = vmatprep.subr.bf16.mxu0 0
    %2613 = vmatpush2.bf16.msra.mxu0 0
    %2614 = vmatprep.subr.bf16.mxu0 0
    %2615 = vmatpush2.bf16.msra.mxu0 0
    %2616 = vmatprep.subr.bf16.mxu0 0
    %2617 = vmatpush2.bf16.msra.mxu0 0
    %2618 = vmatprep.subr.bf16.mxu0 0
    %2619 = vmatpush2.bf16.msra.mxu0 0
    %2620 = vmatprep.subr.bf16.mxu0 0
    %2621 = vmatpush2.bf16.msra.mxu0 0
    %2622 = vmatprep.subr.bf16.mxu0 0
    %2623 = vmatpush2.bf16.msra.mxu0 0
    %2624 = vmatprep.subr.bf16.mxu0 0
    %2625 = vmatpush2.bf16.msra.mxu0 0
    %2626 = vmatprep.subr.bf16.mxu0 0
    %2627 = vmatpush2.bf16.msra.mxu0 0
    %2628 = vmatprep.mubr.bf16.mxu0 0
    %2629 = vmatmul.mubr.bf16.gmra.mxu0 %v2594
    %v2630 = vpop.f32.mrf.mxu0
    %v2631 = vadd.f32 %v2580, %v2630
    %v2632 = vpop.f32.mrf.mxu0
    %v2633 = vpop.f32.mrf.mxu0
    %v2634 = vadd.f32 %v2580, %v2633
    %v2635 = vpop.f32.mrf.mxu0
    %2636 = vdwg.mxu0
    %v2637 = vadd.f32 %v26, %v2631
    %v2638 = vadd.f32 %v27, %v2634
    %v2639 = vsel %vm84, %v2637, 0.0
    %2640 = vadd.xlane.f32.xlu0 %v2639
    %v2641 = vpop.xlane.xlu0 %2640
    %v2642 = vsel %vm84, %v2638, 0.0
    %2643 = vadd.xlane.f32.xlu0 %v2642
    %v2644 = vpop.xlane.xlu0 %2643
    %v2645 = vmul.f32 %v2641, %v1237
    %v2646 = vmul.f32 %v2644, %v1237
    %v2647 = vsub.f32 %v2637, %v2645
    %v2648 = vsub.f32 %v2638, %v2646
    %v2649 = vmul.f32 %v2647, %v2647
    %v2650 = vmul.f32 %v2648, %v2648
    %v2651 = vsel %vm84, %v2649, 0.0
    %2652 = vadd.xlane.f32.xlu0 %v2651
    %v2653 = vpop.xlane.xlu0 %2652
    %v2654 = vsel %vm84, %v2650, 0.0
    %2655 = vadd.xlane.f32.xlu0 %v2654
    %v2656 = vpop.xlane.xlu0 %2655
    %v2657 = vmul.f32 %v2653, %v1237
    %v2658 = vmul.f32 %v2656, %v1237
    %v2659 = vadd.f32 %v2657, 1e-05
    %v2660 = vadd.f32 %v2658, 1e-05
    %v2661 = vrsqrt.pop %v2659
    %v2662 = vrsqrt.pop %v2660
    %v2663 = vmul.f32 %v2647, %v2661
    %v2664 = vmul.f32 %v2648, %v2662
    %v2665 = vlaneseq
    %v2666 = vshrl.u32 %v2665, 7
    %v2667 = vsub.s32 0, %v2666
    %v2668 = vrot.slane %v1481, %v2667
    %v2669 = vmul.f32 %v2663, %v2668
    %v2670 = vmul.f32 %v2664, %v2668
    %v2671 = vlaneseq
    %v2672 = vshrl.u32 %v2671, 7
    %v2673 = vsub.s32 0, %v2672
    %v2674 = vrot.slane %v1482, %v2673
    %v2675 = vadd.f32 %v2669, %v2674
    %v2676 = vadd.f32 %v2670, %v2674
    %v2677 = vpack.c.bf16 %v2676, %v2675
    %v2678 = vlaneseq
    %v2679 = vshrl.u32 %v2678, 7
    %v2680 = vsub.s32 0, %v2679
    %v2681 = vrot.slane %v1483, %v2680
    %v2686 = vunpack.c.l.b16 %v1464
    %v2687 = vunpack.c.l.b16 %v1465
    %v2688 = vunpack.c.l.b16 %v1466
    %v2689 = vunpack.c.l.b16 %v1467
    %v2690 = vpack.c.b16 %v2687, %v2686
    %v2691 = vpack.c.b16 %v2689, %v2688
    %v2695 = vsel %vm84, %v2677, 0
    %2697 = vmatprep.subr.bf16.mxu0 0
    %2698 = vmatpush1.bf16.msra.mxu0 0
    %2699 = vmatprep.subr.bf16.mxu0 0
    %2700 = vmatpush1.bf16.msra.mxu0 0
    %2701 = vmatprep.subr.bf16.mxu0 0
    %2702 = vmatpush1.bf16.msra.mxu0 0
    %2703 = vmatprep.subr.bf16.mxu0 0
    %2704 = vmatpush1.bf16.msra.mxu0 0
    %2705 = vmatprep.subr.bf16.mxu0 0
    %2706 = vmatpush1.bf16.msra.mxu0 0
    %2707 = vmatprep.subr.bf16.mxu0 0
    %2708 = vmatpush1.bf16.msra.mxu0 0
    %2709 = vmatprep.subr.bf16.mxu0 0
    %2710 = vmatpush1.bf16.msra.mxu0 %v2691
    %2711 = vmatprep.subr.bf16.mxu0 0
    %2712 = vmatpush1.bf16.msra.mxu0 %v2690
    %2713 = vmatprep.subr.bf16.mxu0 0
    %2714 = vmatpush2.bf16.msra.mxu0 0
    %2715 = vmatprep.subr.bf16.mxu0 0
    %2716 = vmatpush2.bf16.msra.mxu0 0
    %2717 = vmatprep.subr.bf16.mxu0 0
    %2718 = vmatpush2.bf16.msra.mxu0 0
    %2719 = vmatprep.subr.bf16.mxu0 0
    %2720 = vmatpush2.bf16.msra.mxu0 0
    %2721 = vmatprep.subr.bf16.mxu0 0
    %2722 = vmatpush2.bf16.msra.mxu0 0
    %2723 = vmatprep.subr.bf16.mxu0 0
    %2724 = vmatpush2.bf16.msra.mxu0 0
    %2725 = vmatprep.subr.bf16.mxu0 0
    %2726 = vmatpush2.bf16.msra.mxu0 0
    %2727 = vmatprep.subr.bf16.mxu0 0
    %2728 = vmatpush2.bf16.msra.mxu0 0
    %2729 = vmatprep.mubr.bf16.mxu0 0
    %2730 = vmatmul.mubr.bf16.gmra.mxu0 %v2695
    %v2731 = vpop.f32.mrf.mxu0
    %v2732 = vadd.f32 %v2681, %v2731
    %v2733 = vpop.f32.mrf.mxu0
    %v2734 = vpop.f32.mrf.mxu0
    %v2735 = vadd.f32 %v2681, %v2734
    %v2736 = vpop.f32.mrf.mxu0
    %2737 = vdwg.mxu0
    %v2738 = vmax.f32 %v2732, 0.0
    %v2739 = vmax.f32 %v2735, 0.0
    %v2740 = vpack.c.bf16 %v2739, %v2738
    %v2741 = vlaneseq
    %v2742 = vshrl.u32 %v2741, 7
    %v2743 = vsub.s32 0, %v2742
    %v2744 = vrot.slane %v1484, %v2743
    %v2753 = vunpack.c.l.b16 %v1468
    %v2754 = vunpack.c.l.b16 %v1469
    %v2755 = vunpack.c.l.b16 %v1470
    %v2756 = vunpack.c.l.b16 %v1471
    %v2757 = vunpack.c.l.b16 %v1472
    %v2758 = vunpack.c.l.b16 %v1473
    %v2759 = vunpack.c.l.b16 %v1474
    %v2760 = vunpack.c.l.b16 %v1475
    %v2761 = vpack.c.b16 %v2754, %v2753
    %v2762 = vpack.c.b16 %v2756, %v2755
    %v2763 = vpack.c.b16 %v2758, %v2757
    %v2764 = vpack.c.b16 %v2760, %v2759
    %v2770 = vsel %vm1362, %v2740, 0
    %2772 = vmatprep.subr.bf16.mxu0 0
    %2773 = vmatpush1.bf16.msra.mxu0 0
    %2774 = vmatprep.subr.bf16.mxu0 0
    %2775 = vmatpush1.bf16.msra.mxu0 0
    %2776 = vmatprep.subr.bf16.mxu0 0
    %2777 = vmatpush1.bf16.msra.mxu0 0
    %2778 = vmatprep.subr.bf16.mxu0 0
    %2779 = vmatpush1.bf16.msra.mxu0 0
    %2780 = vmatprep.subr.bf16.mxu0 0
    %2781 = vmatpush1.bf16.msra.mxu0 %v2764
    %2782 = vmatprep.subr.bf16.mxu0 0
    %2783 = vmatpush1.bf16.msra.mxu0 %v2763
    %2784 = vmatprep.subr.bf16.mxu0 0
    %2785 = vmatpush1.bf16.msra.mxu0 %v2762
    %2786 = vmatprep.subr.bf16.mxu0 0
    %2787 = vmatpush1.bf16.msra.mxu0 %v2761
    %2788 = vmatprep.subr.bf16.mxu0 0
    %2789 = vmatpush2.bf16.msra.mxu0 0
    %2790 = vmatprep.subr.bf16.mxu0 0
    %2791 = vmatpush2.bf16.msra.mxu0 0
    %2792 = vmatprep.subr.bf16.mxu0 0
    %2793 = vmatpush2.bf16.msra.mxu0 0
    %2794 = vmatprep.subr.bf16.mxu0 0
    %2795 = vmatpush2.bf16.msra.mxu0 0
    %2796 = vmatprep.subr.bf16.mxu0 0
    %2797 = vmatpush2.bf16.msra.mxu0 0
    %2798 = vmatprep.subr.bf16.mxu0 0
    %2799 = vmatpush2.bf16.msra.mxu0 0
    %2800 = vmatprep.subr.bf16.mxu0 0
    %2801 = vmatpush2.bf16.msra.mxu0 0
    %2802 = vmatprep.subr.bf16.mxu0 0
    %2803 = vmatpush2.bf16.msra.mxu0 0
    %2804 = vmatprep.mubr.bf16.mxu0 0
    %2805 = vmatmul.mubr.bf16.gmra.mxu0 %v2770
    %v2806 = vpop.f32.mrf.mxu0
    %v2807 = vadd.f32 %v2744, %v2806
    %v2808 = vpop.f32.mrf.mxu0
    %v2809 = vpop.f32.mrf.mxu0
    %v2810 = vadd.f32 %v2744, %v2809
    %v2811 = vpop.f32.mrf.mxu0
    %2812 = vdwg.mxu0
    %v2813 = vadd.f32 %v2675, %v2807
    %v2814 = vadd.f32 %v2676, %v2810
    %v2815 = vsel %vm84, %v2813, 0.0
    %2816 = vadd.xlane.f32.xlu0 %v2815
    %v2817 = vpop.xlane.xlu0 %2816
    %v2818 = vsel %vm84, %v2814, 0.0
    %2819 = vadd.xlane.f32.xlu0 %v2818
    %v2820 = vpop.xlane.xlu0 %2819
    %v2821 = vmul.f32 %v2817, %v1237
    %v2822 = vmul.f32 %v2820, %v1237
    %v2823 = vsub.f32 %v2813, %v2821
    %v2824 = vsub.f32 %v2814, %v2822
    %v2825 = vmul.f32 %v2823, %v2823
    %v2826 = vmul.f32 %v2824, %v2824
    %v2827 = vsel %vm84, %v2825, 0.0
    %2828 = vadd.xlane.f32.xlu0 %v2827
    %v2829 = vpop.xlane.xlu0 %2828
    %v2830 = vsel %vm84, %v2826, 0.0
    %2831 = vadd.xlane.f32.xlu0 %v2830
    %v2832 = vpop.xlane.xlu0 %2831
    %v2833 = vmul.f32 %v2829, %v1237
    %v2834 = vmul.f32 %v2832, %v1237
    %v2835 = vadd.f32 %v2833, 1e-05
    %v2836 = vadd.f32 %v2834, 1e-05
    %v2837 = vrsqrt.pop %v2835
    %v2838 = vrsqrt.pop %v2836
    %v2839 = vmul.f32 %v2823, %v2837
    %v2840 = vmul.f32 %v2824, %v2838
    %v2841 = vlaneseq
    %v2842 = vshrl.u32 %v2841, 7
    %v2843 = vsub.s32 0, %v2842
    %v2844 = vrot.slane %v1485, %v2843
    %v2845 = vmul.f32 %v2839, %v2844
    %v2846 = vmul.f32 %v2840, %v2844
    %v2847 = vlaneseq
    %v2848 = vshrl.u32 %v2847, 7
    %v2849 = vsub.s32 0, %v2848
    %v2850 = vrot.slane %v1486, %v2849
    %v2851 = vadd.f32 %v2845, %v2850
    %v2852 = vadd.f32 %v2846, %v2850
    %v2853 = vld [vmem:[#allocation2] sm:$0x1]
    %v2854 = vsub.f32 0.0, %v2853
    %v2855 = vmul.f32 %v2854, 1.442695
    %v2856 = vpow.pop %v2855
    %v2857 = vadd.f32 %v2856, 1.0
    %v2858 = vrcp.pop %v2857
    %v2859 = vmul.f32 1.0, %v2858
    %v2861 = vlaneseq
    %v2862 = vshrl.u32 %v2861, 7
    %v2863 = vsub.s32 0, %v2862
    %v2864 = vrot.slane %v2859, %v2863
    %2865 = vset.pattern.permute.xlu0 0
    %2866 = vperm.xlu0 %2865, %v2864
    %v2867 = vpop.permute.xlu0 %2866
    %v2869 = vmul.f32 %v2867, %v1445
    %v2870 = vmul.f32 %v2867, %v1446
    %v2871 = vsub.f32 1.0, %v2859
    %v2873 = vlaneseq
    %v2874 = vshrl.u32 %v2873, 7
    %v2875 = vsub.s32 0, %v2874
    %v2876 = vrot.slane %v2871, %v2875
    %2877 = vset.pattern.permute.xlu0 0
    %2878 = vperm.xlu0 %2877, %v2876
    %v2879 = vpop.permute.xlu0 %2878
    %v2881 = vmul.f32 %v2879, %v2851
    %v2882 = vmul.f32 %v2879, %v2852
    %v2883 = vadd.f32 %v2869, %v2881
    %v2884 = vadd.f32 %v2870, %v2882
    %2885 = vst.msk [vmem:[#allocation3] sm:$0xff] %vm84, %v2883
    %2886 = vst.msk [vmem:[#allocation3 + $0x8] sm:$0xff] %vm84, %v2884
    // Predicated region
    $region22: #{multimodal_contextual_attention.1} parent=1 // pred_check
      _
    $region23: #{multimodal_contextual_attention.1} parent=1 // pred_check_branch
      %2888 = sbr.rel (0) target = $region25
    $region24: #{multimodal_contextual_attention.1} parent=1 // pred_region
      %s2890 = ssub.s32 256, 256
      %2891 = vsyncadd [#allocation4], %s2890
      %s2892 = sshll.u32 [#allocation3], 4
      %s2893 = int_to_ptr.vmem [resolvable:$true] %s2892
      %2898 = dma.vmem_to_hbm [thread:$0]  %s2893, 256, %s5, [#allocation4], 128, 128, 8
    $region25: #{multimodal_contextual_attention.1} parent=1 // pred_fallthru
      _
    // Predicated region
    $region26: #{multimodal_contextual_attention.1} parent=1 // pred_check
      _
    $region27: #{multimodal_contextual_attention.1} parent=1 // pred_check_branch
      %2900 = sbr.rel (0) target = $region29
    $region28: #{multimodal_contextual_attention.1} parent=1 // pred_region
      %2901 = dma.done [#allocation4], 256
    $region29: #{multimodal_contextual_attention.1} parent=1 // pred_fallthru
      _
    %2902 = vsyncpa [#allocation4], 1

</llo_original>
